<compile_context>
chip_gen: v6e
topology: v6e:2x2x1
jax: 0.10.0
libtpu: 0.0.40
codegen_flags: <defaults>
</compile_context>

<pallas_src>
import math
import functools

import jax
import jax.numpy as jnp
from jax.experimental import pallas as pl
from jax.experimental.pallas import tpu as pltpu

MATMUL_DTYPE = jnp.bfloat16          # MXU operand dtype (f32 accumulation)

_LAYER_PARAMS = ("wq", "bq", "wk", "bk", "wv", "bv", "wo", "bo",
                 "ff1_w", "ff1_b", "ff2_w", "ff2_b",
                 "ln1_g", "ln1_b", "ln2_g", "ln2_b")


# ----------------------------- fused Pallas kernel -------------------------- #

def _fused_kernel(win_ref, tokw_ref, pe_ref,
                  wq_ref, bq_ref, wk_ref, bk_ref, wv_ref, bv_ref,
                  wo_ref, bo_ref,
                  ff1w_ref, ff1b_ref, ff2w_ref, ff2b_ref,
                  ln1g_ref, ln1b_ref, ln2g_ref, ln2b_ref,
                  ng_ref, nb_ref, fcw_ref, fcb_ref,
                  out_ref, h_ref,
                  *, n_heads, activation, eps, compute_dtype):
    D = wo_ref.shape[-1]
    E = D // n_heads
    scale = 1.0 / math.sqrt(E)
    cdt = compute_dtype
    l_idx = pl.program_id(1)

    def layernorm(x, g, b):
        # biased variance (matches torch.nn.LayerNorm); d = x - mu hoisted.
        mu = jnp.mean(x, axis=-1, keepdims=True)
        d = x - mu
        var = jnp.mean(d * d, axis=-1, keepdims=True)
        return d * jax.lax.rsqrt(var + eps) * g + b

    # --- DataEmbedding (only on the first layer step of each sequence) ------
    @pl.when(l_idx == 0)
    def _():
        emb = jnp.dot(win_ref[...].astype(cdt), tokw_ref[...],
                      preferred_element_type=jnp.float32)        # (L, D) f32
        h_ref[...] = emb + pe_ref[...]

    h = h_ref[...]                                               # (L, D) f32
    hb = h.astype(cdt)

    # --- self attention: head-major per-head projections, 2-D operands ------
    wq_l = wq_ref[0]; wk_l = wk_ref[0]; wv_l = wv_ref[0]          # (H, D, E) bf16
    bq_l = bq_ref[0]; bk_l = bk_ref[0]; bv_l = bv_ref[0]          # (H, 1, E) f32
    heads = []
    for hd in range(n_heads):                                     # static unroll
        q = jnp.dot(hb, wq_l[hd], preferred_element_type=jnp.float32) + bq_l[hd]
        k = jnp.dot(hb, wk_l[hd], preferred_element_type=jnp.float32) + bk_l[hd]
        v = jnp.dot(hb, wv_l[hd], preferred_element_type=jnp.float32) + bv_l[hd]
        # scores = q @ k^T (contracting dot_general; no explicit transpose)
        s = jax.lax.dot_general(q.astype(cdt), k.astype(cdt),
                                (((1,), (1,)), ((), ())),
                                preferred_element_type=jnp.float32) * scale
        p = jnp.exp(s - jnp.max(s, axis=-1, keepdims=True))
        inv = pl.reciprocal(jnp.sum(p, axis=-1, keepdims=True), approx=False)
        a = p * inv
        heads.append(jnp.dot(a.astype(cdt), v.astype(cdt),
                             preferred_element_type=jnp.float32))  # (L, E)
    attn = jnp.concatenate(heads, axis=-1)                         # (L, D) f32
    # single K=D output projection on the concatenated heads
    attn = jnp.dot(attn.astype(cdt), wo_ref[0],
                   preferred_element_type=jnp.float32) + bo_ref[0]

    x1 = layernorm(h + attn, ln1g_ref[0], ln1b_ref[0])             # norm1(x + attn)

    # --- position-wise FFN (1x1 convs) --------------------------------------
    y = jnp.dot(x1.astype(cdt), ff1w_ref[0],
                preferred_element_type=jnp.float32) + ff1b_ref[0]
    if activation == "relu":
        y = jnp.maximum(y, 0.0)
    else:
        y = jax.nn.gelu(y, approximate=False)
    y = jnp.dot(y.astype(cdt), ff2w_ref[0],
                preferred_element_type=jnp.float32) + ff2b_ref[0]

    h_new = layernorm(x1 + y, ln2g_ref[0], ln2b_ref[0])            # norm2(x + y)
    h_ref[...] = h_new                                             # carry to next layer

    # --- encoder final LayerNorm + fc head (only on the last layer step) ----
    @pl.when(l_idx == pl.num_programs(1) - 1)
    def _():
        hf = layernorm(h_new, ng_ref[...], nb_ref[...])
        out_ref[...] = (jnp.dot(hf.astype(cdt), fcw_ref[...],
                                preferred_element_type=jnp.float32)
                        + fcb_ref[...]).astype(out_ref.dtype)


# ------------------------------- JAX glue ----------------------------------- #

def positional_embedding(L, d_model):
    position = jnp.arange(L, dtype=jnp.float32)[:, None]
    div_term = jnp.exp(
        jnp.arange(0, d_model, 2, dtype=jnp.float32) * (-math.log(10000.0) / d_model))
    pe = jnp.zeros((L, d_model), dtype=jnp.float32)
    pe = pe.at[:, 0::2].set(jnp.sin(position * div_term))
    pe = pe.at[:, 1::2].set(jnp.cos(position * div_term))
    return pe


def token_embedding_im2col(x):
    """x: (B, L, C) -> im2col windows (B*L, C*3) for a circular k=3 Conv1d."""
    B, L, C = x.shape
    xc = jnp.transpose(x, (0, 2, 1))                                    # (B, C, L)
    xpad = jnp.concatenate([xc[:, :, -1:], xc, xc[:, :, :1]], axis=-1)  # circular pad=1
    win = jnp.stack([xpad[:, :, k:k + L] for k in range(3)], axis=-1)   # (B, C, L, 3)
    win = jnp.transpose(win, (0, 2, 1, 3)).reshape(B * L, C * 3)
    return win


def init_params(key, c_in, d_model, n_heads, d_ff, e_layers, c_out):
    """Kernel-ready parameters (derived from the torch layouts)."""
    E = d_model // n_heads

    def dense(k, din, dout):
        kw, kb = jax.random.split(k)
        w = jax.random.normal(kw, (din, dout), jnp.float32) * 0.02
        b = jax.random.normal(kb, (dout,), jnp.float32) * 0.02
        return w, b

    keys = jax.random.split(key, 2 + e_layers)
    wq, bq, wk, bk, wv, bv = [], [], [], [], [], []
    wo, bo, ff1w, ff1b, ff2w, ff2b = [], [], [], [], [], []
    ln1g, ln1b, ln2g, ln2b = [], [], [], []
    ones = jnp.ones((1, d_model), jnp.float32)
    zeros = jnp.zeros((1, d_model), jnp.float32)
    for l in range(e_layers):
        ks = jax.random.split(keys[1 + l], 6)
        w_q, b_q = dense(ks[0], d_model, d_model)
        w_k, b_k = dense(ks[1], d_model, d_model)
        w_v, b_v = dense(ks[2], d_model, d_model)
        w_o, b_o = dense(ks[3], d_model, d_model)
        w1, b1 = dense(ks[4], d_model, d_ff)      # Conv1d(d_model, d_ff, 1)
        w2, b2 = dense(ks[5], d_ff, d_model)      # Conv1d(d_ff, d_model, 1)
        # head-major split of the projection output columns: (D, D) -> (H, D, E)
        wq.append(w_q.reshape(d_model, n_heads, E).transpose(1, 0, 2))
        wk.append(w_k.reshape(d_model, n_heads, E).transpose(1, 0, 2))
        wv.append(w_v.reshape(d_model, n_heads, E).transpose(1, 0, 2))
        bq.append(b_q.reshape(n_heads, 1, E))
        bk.append(b_k.reshape(n_heads, 1, E))
        bv.append(b_v.reshape(n_heads, 1, E))
        wo.append(w_o); bo.append(b_o[None, :])
        ff1w.append(w1); ff1b.append(b1[None, :])
        ff2w.append(w2); ff2b.append(b2[None, :])
        ln1g.append(ones); ln1b.append(zeros)
        ln2g.append(ones); ln2b.append(zeros)
    fc_w, fc_b = dense(keys[1 + e_layers], d_model, c_out)
    # Conv1d(c_in, d_model, k=3, bias=False) torch weight (O, C, K) -> (C*K, O)
    tok_w_torch = jax.random.normal(keys[0], (d_model, c_in, 3), jnp.float32) * 0.02
    tok_w = tok_w_torch.reshape(d_model, c_in * 3).T

    bf = MATMUL_DTYPE
    return {
        "tok_w": tok_w.astype(bf),
        "wq": jnp.stack(wq).astype(bf), "bq": jnp.stack(bq),
        "wk": jnp.stack(wk).astype(bf), "bk": jnp.stack(bk),
        "wv": jnp.stack(wv).astype(bf), "bv": jnp.stack(bv),
        "wo": jnp.stack(wo).astype(bf), "bo": jnp.stack(bo),
        "ff1_w": jnp.stack(ff1w).astype(bf), "ff1_b": jnp.stack(ff1b),
        "ff2_w": jnp.stack(ff2w).astype(bf), "ff2_b": jnp.stack(ff2b),
        "ln1_g": jnp.stack(ln1g), "ln1_b": jnp.stack(ln1b),
        "ln2_g": jnp.stack(ln2g), "ln2_b": jnp.stack(ln2b),
        "norm_g": ones, "norm_b": zeros,
        "fc_w": fc_w.astype(bf), "fc_b": fc_b,
    }


@functools.partial(jax.jit, static_argnames=("n_heads", "activation"))
def bert_inspired_forward(params, x_enc, n_heads, activation="relu"):
    B, L = x_enc.shape[0], x_enc.shape[1]
    x = x_enc.reshape(B, L, -1)                       # flatten trailing dims
    c_in = x.shape[-1]
    d_model = params["tok_w"].shape[1]
    e_layers = params["wq"].shape[0]
    d_ff = params["ff1_w"].shape[-1]
    c_out = params["fc_w"].shape[-1]
    E = d_model // n_heads
    assert d_model % n_heads == 0
    if B > 1:
        assert L % 8 == 0, "row tile (= seq_len) must be a multiple of 8 sublanes"

    win = token_embedding_im2col(x)                   # (B*L, 3*c_in) f32
    pe = positional_embedding(L, d_model)             # (L, D) f32

    # lane-dense fc head (pad output columns to a multiple of 128 lanes)
    c_out_pad = ((c_out + 127) // 128) * 128
    fc_w_pad = jnp.zeros((d_model, c_out_pad), MATMUL_DTYPE).at[:, :c_out].set(params["fc_w"])
    fc_b_pad = jnp.zeros((1, c_out_pad), jnp.float32).at[0, :c_out].set(params["fc_b"])

    # ---- BlockSpecs: row tile over batch, per-layer weight streaming -------
    def _resident(shape):
        nd = len(shape)
        return pl.BlockSpec(shape, lambda b, l, _nd=nd: (0,) * _nd)

    def _per_layer(shape):
        blk = (1,) + tuple(shape[1:])
        nd = len(shape)
        return pl.BlockSpec(blk, lambda b, l, _nd=nd: (l,) + (0,) * (_nd - 1))

    in_specs = [
        pl.BlockSpec((L, win.shape[1]), lambda b, l: (b, 0)),   # win row tile
        _resident(params["tok_w"].shape),
        _resident(pe.shape),
    ]
    for name in _LAYER_PARAMS:
        in_specs.append(_per_layer(params[name].shape))
    in_specs += [_resident(params["norm_g"].shape), _resident(params["norm_b"].shape),
                 _resident(fc_w_pad.shape), _resident(fc_b_pad.shape)]

    out_specs = pl.BlockSpec((L, c_out_pad), lambda b, l: (b, 0))

    operands = ([win, params["tok_w"], pe]
                + [params[n] for n in _LAYER_PARAMS]
                + [params["norm_g"], params["norm_b"], fc_w_pad, fc_b_pad])

    # ---- VMEM budget & cost estimate ---------------------------------------
    itm = jnp.dtype(MATMUL_DTYPE).itemsize
    per_layer_w = ((4 * d_model * d_model + 2 * d_model * d_ff) * itm
                   + (4 * d_model + 3 * d_model + d_ff + 4 * d_model) * 4)
    resident_w = ((3 * c_in * d_model + d_model * c_out_pad) * itm
                  + (L * d_model + 2 * d_model + c_out_pad) * 4)
    tile_io = (L * 3 * c_in + L * c_out_pad) * 4
    temps = (L * d_ff + 12 * L * d_model + 3 * L * L) * 4
    vmem_est = 2 * per_layer_w + 2 * resident_w + 2 * tile_io + temps + L * d_model * 4
    vmem_limit = int(min(max(2 * vmem_est, 32 * 2 ** 20), 64 * 2 ** 20))  # v7x-safe cap

    rows = B * L
    flops = 2 * rows * 3 * c_in * d_model                              # embedding
    flops += 2 * rows * e_layers * (4 * d_model * d_model + 2 * d_model * d_ff)
    flops += 4 * B * e_layers * n_heads * L * L * E                    # scores + AV
    flops += 2 * rows * d_model * c_out_pad                            # fc head
    transcendentals = B * e_layers * n_heads * L * L + (2 * e_layers + 1) * rows
    weight_bytes = sum(int(params[n].size) * params[n].dtype.itemsize for n in _LAYER_PARAMS)
    bytes_accessed = (int(win.size) * 4 + rows * c_out_pad * 4 + B * weight_bytes
                      + int(params["tok_w"].size) * itm + L * d_model * 4
                      + int(fc_w_pad.size) * itm + c_out_pad * 4)
    cost = pl.CostEstimate(flops=int(flops), transcendentals=int(transcendentals),
                           bytes_accessed=int(bytes_accessed))

    kernel = functools.partial(_fused_kernel, n_heads=n_heads, activation=activation,
                               eps=1e-5, compute_dtype=MATMUL_DTYPE)

    out = pl.pallas_call(
        kernel,
        out_shape=jax.ShapeDtypeStruct((B * L, c_out_pad), jnp.float32),
        grid_spec=pltpu.PrefetchScalarGridSpec(
            num_scalar_prefetch=0,
            grid=(B, e_layers),
            in_specs=in_specs,
            out_specs=out_specs,
            scratch_shapes=[pltpu.VMEM((L, d_model), jnp.float32)],   # carried hidden state
        ),
        compiler_params=pltpu.CompilerParams(
            dimension_semantics=("parallel", "arbitrary"),
            vmem_limit_bytes=vmem_limit),
        cost_estimate=cost,
    )(*operands)

    return out[:, :c_out].reshape(B, L, c_out)        # (B, L, c_out)


if __name__ == "__main__":
    key = jax.random.PRNGKey(0)
    B, L = 2, 8
    enc_in = (4, 4)                      # config.enc_in (tuple -> c_in = 16)
    c_in = math.prod(enc_in)
    d_model, n_heads, d_ff, e_layers, c_out = 32, 4, 64, 2, 8

    kp, kx = jax.random.split(key)
    params = init_params(kp, c_in, d_model, n_heads, d_ff, e_layers, c_out)
    x_enc = jax.random.normal(kx, (B, L) + enc_in, jnp.float32)

    out = bert_inspired_forward(params, x_enc, n_heads=n_heads, activation="relu")
    out = jax.block_until_ready(out)
    assert out.shape == (B, L, c_out) and out.dtype == jnp.float32
    print("KERNEL_OK")
</pallas_src>

<mosaic_0001>
module attributes {stable_mosaic.version = 11 : i64} {
  func.func @_fused_kernel(%arg0: i32, %arg1: i32, %arg2: memref<8x48xf32, #tpu.memory_space<vmem>>, %arg3: memref<48x32xbf16, #tpu.memory_space<vmem>>, %arg4: memref<8x32xf32, #tpu.memory_space<vmem>>, %arg5: memref<1x4x32x8xbf16, #tpu.memory_space<vmem>>, %arg6: memref<1x4x1x8xf32, #tpu.memory_space<vmem>>, %arg7: memref<1x4x32x8xbf16, #tpu.memory_space<vmem>>, %arg8: memref<1x4x1x8xf32, #tpu.memory_space<vmem>>, %arg9: memref<1x4x32x8xbf16, #tpu.memory_space<vmem>>, %arg10: memref<1x4x1x8xf32, #tpu.memory_space<vmem>>, %arg11: memref<1x32x32xbf16, #tpu.memory_space<vmem>>, %arg12: memref<1x1x32xf32, #tpu.memory_space<vmem>>, %arg13: memref<1x32x64xbf16, #tpu.memory_space<vmem>>, %arg14: memref<1x1x64xf32, #tpu.memory_space<vmem>>, %arg15: memref<1x64x32xbf16, #tpu.memory_space<vmem>>, %arg16: memref<1x1x32xf32, #tpu.memory_space<vmem>>, %arg17: memref<1x1x32xf32, #tpu.memory_space<vmem>>, %arg18: memref<1x1x32xf32, #tpu.memory_space<vmem>>, %arg19: memref<1x1x32xf32, #tpu.memory_space<vmem>>, %arg20: memref<1x1x32xf32, #tpu.memory_space<vmem>>, %arg21: memref<1x32xf32, #tpu.memory_space<vmem>>, %arg22: memref<1x32xf32, #tpu.memory_space<vmem>>, %arg23: memref<32x128xbf16, #tpu.memory_space<vmem>>, %arg24: memref<1x128xf32, #tpu.memory_space<vmem>>, %arg25: memref<8x128xf32, #tpu.memory_space<vmem>>, %arg26: memref<8x32xf32, #tpu.memory_space<vmem>>) attributes {dimension_semantics = [#tpu.dimension_semantics<parallel>, #tpu.dimension_semantics<arbitrary>], iteration_bounds = array<i64: 2, 2>, scalar_prefetch = 0 : i64, scratch_operands = 1 : i64, tpu.core_type = #tpu.core_type<tc>, window_params = [{transform_indices = @transform_0, window_bounds = array<i64: 8, 48>}, {pipeline_mode = #tpu.pipeline_mode<synchronous>, transform_indices = @transform_1, window_bounds = array<i64: 48, 32>}, {pipeline_mode = #tpu.pipeline_mode<synchronous>, transform_indices = @transform_2, window_bounds = array<i64: 8, 32>}, {transform_indices = @transform_3, window_bounds = array<i64: 1, 4, 32, 8>}, {transform_indices = @transform_4, window_bounds = array<i64: 1, 4, 1, 8>}, {transform_indices = @transform_5, window_bounds = array<i64: 1, 4, 32, 8>}, {transform_indices = @transform_6, window_bounds = array<i64: 1, 4, 1, 8>}, {transform_indices = @transform_7, window_bounds = array<i64: 1, 4, 32, 8>}, {transform_indices = @transform_8, window_bounds = array<i64: 1, 4, 1, 8>}, {transform_indices = @transform_9, window_bounds = array<i64: 1, 32, 32>}, {transform_indices = @transform_10, window_bounds = array<i64: 1, 1, 32>}, {transform_indices = @transform_11, window_bounds = array<i64: 1, 32, 64>}, {transform_indices = @transform_12, window_bounds = array<i64: 1, 1, 64>}, {transform_indices = @transform_13, window_bounds = array<i64: 1, 64, 32>}, {transform_indices = @transform_14, window_bounds = array<i64: 1, 1, 32>}, {transform_indices = @transform_15, window_bounds = array<i64: 1, 1, 32>}, {transform_indices = @transform_16, window_bounds = array<i64: 1, 1, 32>}, {transform_indices = @transform_17, window_bounds = array<i64: 1, 1, 32>}, {transform_indices = @transform_18, window_bounds = array<i64: 1, 1, 32>}, {pipeline_mode = #tpu.pipeline_mode<synchronous>, transform_indices = @transform_19, window_bounds = array<i64: 1, 32>}, {pipeline_mode = #tpu.pipeline_mode<synchronous>, transform_indices = @transform_20, window_bounds = array<i64: 1, 32>}, {pipeline_mode = #tpu.pipeline_mode<synchronous>, transform_indices = @transform_21, window_bounds = array<i64: 32, 128>}, {pipeline_mode = #tpu.pipeline_mode<synchronous>, transform_indices = @transform_22, window_bounds = array<i64: 1, 128>}, {transform_indices = @transform_23, window_bounds = array<i64: 8, 128>}]} {
    %c0_i32 = arith.constant 0 : i32
    %0 = arith.cmpi eq, %arg1, %c0_i32 : i32
    %1 = arith.extui %0 : i1 to i32
    %c0_i32_0 = arith.constant 0 : i32
    %2 = arith.cmpi ne, %1, %c0_i32_0 : i32
    scf.if %2 {
      %c0_104 = arith.constant 0 : index
      %c0_105 = arith.constant 0 : index
      %254 = vector.load %arg2[%c0_104, %c0_105] : memref<8x48xf32, #tpu.memory_space<vmem>>, vector<8x48xf32>
      %255 = arith.truncf %254 : vector<8x48xf32> to vector<8x48xbf16>
      %c0_106 = arith.constant 0 : index
      %c0_107 = arith.constant 0 : index
      %256 = vector.load %arg3[%c0_106, %c0_107] : memref<48x32xbf16, #tpu.memory_space<vmem>>, vector<48x32xbf16>
      %cst_108 = arith.constant dense<0.000000e+00> : vector<8x32xf32>
      %257 = tpu.matmul %255, %256, %cst_108 {dimension_numbers = #tpu.dot_dimension_numbers<[1], [0], [0], [1], [0, 0, 1, 1], [], []>} : vector<8x48xbf16>, vector<48x32xbf16>, vector<8x32xf32> -> vector<8x32xf32>
      %c0_109 = arith.constant 0 : index
      %c0_110 = arith.constant 0 : index
      %258 = vector.load %arg4[%c0_109, %c0_110] : memref<8x32xf32, #tpu.memory_space<vmem>>, vector<8x32xf32>
      %259 = arith.addf %257, %258 : vector<8x32xf32>
      %c0_111 = arith.constant 0 : index
      %c0_112 = arith.constant 0 : index
      %260 = vector.load %arg26[%c0_111, %c0_112] : memref<8x32xf32, #tpu.memory_space<vmem>>, vector<8x32xf32>
      tpu.vector_store %arg26[%c0_111, %c0_112], %259 {strides = array<i32>} : memref<8x32xf32, #tpu.memory_space<vmem>>, vector<8x32xf32>,
    } else {
    }
    %c0 = arith.constant 0 : index
    %c0_1 = arith.constant 0 : index
    %3 = vector.load %arg26[%c0, %c0_1] : memref<8x32xf32, #tpu.memory_space<vmem>>, vector<8x32xf32>
    %4 = arith.truncf %3 : vector<8x32xf32> to vector<8x32xbf16>
    %c0_2 = arith.constant 0 : index
    %c0_3 = arith.constant 0 : index
    %c0_4 = arith.constant 0 : index
    %c0_5 = arith.constant 0 : index
    %5 = vector.load %arg5[%c0_2, %c0_3, %c0_4, %c0_5] : memref<1x4x32x8xbf16, #tpu.memory_space<vmem>>, vector<1x4x32x8xbf16>
    %6 = vector.shape_cast %5 : vector<1x4x32x8xbf16> to vector<4x32x8xbf16>
    %c0_6 = arith.constant 0 : index
    %c0_7 = arith.constant 0 : index
    %c0_8 = arith.constant 0 : index
    %c0_9 = arith.constant 0 : index
    %7 = vector.load %arg7[%c0_6, %c0_7, %c0_8, %c0_9] : memref<1x4x32x8xbf16, #tpu.memory_space<vmem>>, vector<1x4x32x8xbf16>
    %8 = vector.shape_cast %7 : vector<1x4x32x8xbf16> to vector<4x32x8xbf16>
    %c0_10 = arith.constant 0 : index
    %c0_11 = arith.constant 0 : index
    %c0_12 = arith.constant 0 : index
    %c0_13 = arith.constant 0 : index
    %9 = vector.load %arg9[%c0_10, %c0_11, %c0_12, %c0_13] : memref<1x4x32x8xbf16, #tpu.memory_space<vmem>>, vector<1x4x32x8xbf16>
    %10 = vector.shape_cast %9 : vector<1x4x32x8xbf16> to vector<4x32x8xbf16>
    %c0_14 = arith.constant 0 : index
    %c0_15 = arith.constant 0 : index
    %c0_16 = arith.constant 0 : index
    %c0_17 = arith.constant 0 : index
    %11 = vector.load %arg6[%c0_14, %c0_15, %c0_16, %c0_17] : memref<1x4x1x8xf32, #tpu.memory_space<vmem>>, vector<1x4x1x8xf32>
    %12 = vector.shape_cast %11 : vector<1x4x1x8xf32> to vector<4x1x8xf32>
    %c0_18 = arith.constant 0 : index
    %c0_19 = arith.constant 0 : index
    %c0_20 = arith.constant 0 : index
    %c0_21 = arith.constant 0 : index
    %13 = vector.load %arg8[%c0_18, %c0_19, %c0_20, %c0_21] : memref<1x4x1x8xf32, #tpu.memory_space<vmem>>, vector<1x4x1x8xf32>
    %14 = vector.shape_cast %13 : vector<1x4x1x8xf32> to vector<4x1x8xf32>
    %c0_22 = arith.constant 0 : index
    %c0_23 = arith.constant 0 : index
    %c0_24 = arith.constant 0 : index
    %c0_25 = arith.constant 0 : index
    %15 = vector.load %arg10[%c0_22, %c0_23, %c0_24, %c0_25] : memref<1x4x1x8xf32, #tpu.memory_space<vmem>>, vector<1x4x1x8xf32>
    %16 = vector.shape_cast %15 : vector<1x4x1x8xf32> to vector<4x1x8xf32>
    %17 = vector.extract_strided_slice %6 {offsets = [0, 0, 0], sizes = [1, 32, 8], strides = [1, 1, 1]} : vector<4x32x8xbf16> to vector<1x32x8xbf16>
    %18 = vector.shape_cast %17 : vector<1x32x8xbf16> to vector<32x8xbf16>
    %cst = arith.constant dense<0.000000e+00> : vector<8x8xf32>
    %19 = tpu.matmul %4, %18, %cst {dimension_numbers = #tpu.dot_dimension_numbers<[1], [0], [0], [1], [0, 0, 1, 1], [], []>} : vector<8x32xbf16>, vector<32x8xbf16>, vector<8x8xf32> -> vector<8x8xf32>
    %20 = vector.extract_strided_slice %12 {offsets = [0, 0, 0], sizes = [1, 1, 8], strides = [1, 1, 1]} : vector<4x1x8xf32> to vector<1x1x8xf32>
    %21 = vector.shape_cast %20 : vector<1x1x8xf32> to vector<1x8xf32>
    %22 = vector.broadcast %21 : vector<1x8xf32> to vector<8x8xf32>
    %23 = arith.addf %19, %22 : vector<8x8xf32>
    %24 = vector.extract_strided_slice %8 {offsets = [0, 0, 0], sizes = [1, 32, 8], strides = [1, 1, 1]} : vector<4x32x8xbf16> to vector<1x32x8xbf16>
    %25 = vector.shape_cast %24 : vector<1x32x8xbf16> to vector<32x8xbf16>
    %cst_26 = arith.constant dense<0.000000e+00> : vector<8x8xf32>
    %26 = tpu.matmul %4, %25, %cst_26 {dimension_numbers = #tpu.dot_dimension_numbers<[1], [0], [0], [1], [0, 0, 1, 1], [], []>} : vector<8x32xbf16>, vector<32x8xbf16>, vector<8x8xf32> -> vector<8x8xf32>
    %27 = vector.extract_strided_slice %14 {offsets = [0, 0, 0], sizes = [1, 1, 8], strides = [1, 1, 1]} : vector<4x1x8xf32> to vector<1x1x8xf32>
    %28 = vector.shape_cast %27 : vector<1x1x8xf32> to vector<1x8xf32>
    %29 = vector.broadcast %28 : vector<1x8xf32> to vector<8x8xf32>
    %30 = arith.addf %26, %29 : vector<8x8xf32>
    %31 = vector.extract_strided_slice %10 {offsets = [0, 0, 0], sizes = [1, 32, 8], strides = [1, 1, 1]} : vector<4x32x8xbf16> to vector<1x32x8xbf16>
    %32 = vector.shape_cast %31 : vector<1x32x8xbf16> to vector<32x8xbf16>
    %cst_27 = arith.constant dense<0.000000e+00> : vector<8x8xf32>
    %33 = tpu.matmul %4, %32, %cst_27 {dimension_numbers = #tpu.dot_dimension_numbers<[1], [0], [0], [1], [0, 0, 1, 1], [], []>} : vector<8x32xbf16>, vector<32x8xbf16>, vector<8x8xf32> -> vector<8x8xf32>
    %34 = vector.extract_strided_slice %16 {offsets = [0, 0, 0], sizes = [1, 1, 8], strides = [1, 1, 1]} : vector<4x1x8xf32> to vector<1x1x8xf32>
    %35 = vector.shape_cast %34 : vector<1x1x8xf32> to vector<1x8xf32>
    %36 = vector.broadcast %35 : vector<1x8xf32> to vector<8x8xf32>
    %37 = arith.addf %33, %36 : vector<8x8xf32>
    %38 = arith.truncf %23 : vector<8x8xf32> to vector<8x8xbf16>
    %39 = arith.truncf %30 : vector<8x8xf32> to vector<8x8xbf16>
    %cst_28 = arith.constant dense<0.000000e+00> : vector<8x8xf32>
    %40 = tpu.matmul %38, %39, %cst_28 {dimension_numbers = #tpu.dot_dimension_numbers<[1], [1], [0], [0], [0, 0, 1, 0], [], []>} : vector<8x8xbf16>, vector<8x8xbf16>, vector<8x8xf32> -> vector<8x8xf32>
    %cst_29 = arith.constant 0.353553385 : f32
    %41 = vector.broadcast %cst_29 : f32 to vector<8x8xf32>
    %42 = arith.mulf %40, %41 : vector<8x8xf32>
    %cst_30 = arith.constant dense<0xFF800000> : vector<8xf32>
    %43 = vector.multi_reduction <maximumf>, %42, %cst_30 [1] : vector<8x8xf32> to vector<8xf32>
    %44 = vector.shape_cast %43 : vector<8xf32> to vector<8x1xf32>
    %45 = vector.broadcast %44 : vector<8x1xf32> to vector<8x8xf32>
    %46 = arith.subf %42, %45 : vector<8x8xf32>
    %47 = math.exp %46 : vector<8x8xf32>
    %cst_31 = arith.constant dense<0.000000e+00> : vector<8xf32>
    %48 = vector.multi_reduction <add>, %47, %cst_31 [1] : vector<8x8xf32> to vector<8xf32>
    %49 = vector.shape_cast %48 : vector<8xf32> to vector<8x1xf32>
    %50 = tpu.reciprocal %49 : vector<8x1xf32> -> vector<8x1xf32>
    %51 = vector.broadcast %50 : vector<8x1xf32> to vector<8x8xf32>
    %52 = arith.mulf %47, %51 : vector<8x8xf32>
    %53 = arith.truncf %52 : vector<8x8xf32> to vector<8x8xbf16>
    %54 = arith.truncf %37 : vector<8x8xf32> to vector<8x8xbf16>
    %cst_32 = arith.constant dense<0.000000e+00> : vector<8x8xf32>
    %55 = tpu.matmul %53, %54, %cst_32 {dimension_numbers = #tpu.dot_dimension_numbers<[1], [0], [0], [1], [0, 0, 1, 1], [], []>} : vector<8x8xbf16>, vector<8x8xbf16>, vector<8x8xf32> -> vector<8x8xf32>
    %56 = vector.extract_strided_slice %6 {offsets = [1, 0, 0], sizes = [1, 32, 8], strides = [1, 1, 1]} : vector<4x32x8xbf16> to vector<1x32x8xbf16>
    %57 = vector.shape_cast %56 : vector<1x32x8xbf16> to vector<32x8xbf16>
    %cst_33 = arith.constant dense<0.000000e+00> : vector<8x8xf32>
    %58 = tpu.matmul %4, %57, %cst_33 {dimension_numbers = #tpu.dot_dimension_numbers<[1], [0], [0], [1], [0, 0, 1, 1], [], []>} : vector<8x32xbf16>, vector<32x8xbf16>, vector<8x8xf32> -> vector<8x8xf32>
    %59 = vector.extract_strided_slice %12 {offsets = [1, 0, 0], sizes = [1, 1, 8], strides = [1, 1, 1]} : vector<4x1x8xf32> to vector<1x1x8xf32>
    %60 = vector.shape_cast %59 : vector<1x1x8xf32> to vector<1x8xf32>
    %61 = vector.broadcast %60 : vector<1x8xf32> to vector<8x8xf32>
    %62 = arith.addf %58, %61 : vector<8x8xf32>
    %63 = vector.extract_strided_slice %8 {offsets = [1, 0, 0], sizes = [1, 32, 8], strides = [1, 1, 1]} : vector<4x32x8xbf16> to vector<1x32x8xbf16>
    %64 = vector.shape_cast %63 : vector<1x32x8xbf16> to vector<32x8xbf16>
    %cst_34 = arith.constant dense<0.000000e+00> : vector<8x8xf32>
    %65 = tpu.matmul %4, %64, %cst_34 {dimension_numbers = #tpu.dot_dimension_numbers<[1], [0], [0], [1], [0, 0, 1, 1], [], []>} : vector<8x32xbf16>, vector<32x8xbf16>, vector<8x8xf32> -> vector<8x8xf32>
    %66 = vector.extract_strided_slice %14 {offsets = [1, 0, 0], sizes = [1, 1, 8], strides = [1, 1, 1]} : vector<4x1x8xf32> to vector<1x1x8xf32>
    %67 = vector.shape_cast %66 : vector<1x1x8xf32> to vector<1x8xf32>
    %68 = vector.broadcast %67 : vector<1x8xf32> to vector<8x8xf32>
    %69 = arith.addf %65, %68 : vector<8x8xf32>
    %70 = vector.extract_strided_slice %10 {offsets = [1, 0, 0], sizes = [1, 32, 8], strides = [1, 1, 1]} : vector<4x32x8xbf16> to vector<1x32x8xbf16>
    %71 = vector.shape_cast %70 : vector<1x32x8xbf16> to vector<32x8xbf16>
    %cst_35 = arith.constant dense<0.000000e+00> : vector<8x8xf32>
    %72 = tpu.matmul %4, %71, %cst_35 {dimension_numbers = #tpu.dot_dimension_numbers<[1], [0], [0], [1], [0, 0, 1, 1], [], []>} : vector<8x32xbf16>, vector<32x8xbf16>, vector<8x8xf32> -> vector<8x8xf32>
    %73 = vector.extract_strided_slice %16 {offsets = [1, 0, 0], sizes = [1, 1, 8], strides = [1, 1, 1]} : vector<4x1x8xf32> to vector<1x1x8xf32>
    %74 = vector.shape_cast %73 : vector<1x1x8xf32> to vector<1x8xf32>
    %75 = vector.broadcast %74 : vector<1x8xf32> to vector<8x8xf32>
    %76 = arith.addf %72, %75 : vector<8x8xf32>
    %77 = arith.truncf %62 : vector<8x8xf32> to vector<8x8xbf16>
    %78 = arith.truncf %69 : vector<8x8xf32> to vector<8x8xbf16>
    %cst_36 = arith.constant dense<0.000000e+00> : vector<8x8xf32>
    %79 = tpu.matmul %77, %78, %cst_36 {dimension_numbers = #tpu.dot_dimension_numbers<[1], [1], [0], [0], [0, 0, 1, 0], [], []>} : vector<8x8xbf16>, vector<8x8xbf16>, vector<8x8xf32> -> vector<8x8xf32>
    %cst_37 = arith.constant 0.353553385 : f32
    %80 = vector.broadcast %cst_37 : f32 to vector<8x8xf32>
    %81 = arith.mulf %79, %80 : vector<8x8xf32>
    %cst_38 = arith.constant dense<0xFF800000> : vector<8xf32>
    %82 = vector.multi_reduction <maximumf>, %81, %cst_38 [1] : vector<8x8xf32> to vector<8xf32>
    %83 = vector.shape_cast %82 : vector<8xf32> to vector<8x1xf32>
    %84 = vector.broadcast %83 : vector<8x1xf32> to vector<8x8xf32>
    %85 = arith.subf %81, %84 : vector<8x8xf32>
    %86 = math.exp %85 : vector<8x8xf32>
    %cst_39 = arith.constant dense<0.000000e+00> : vector<8xf32>
    %87 = vector.multi_reduction <add>, %86, %cst_39 [1] : vector<8x8xf32> to vector<8xf32>
    %88 = vector.shape_cast %87 : vector<8xf32> to vector<8x1xf32>
    %89 = tpu.reciprocal %88 : vector<8x1xf32> -> vector<8x1xf32>
    %90 = vector.broadcast %89 : vector<8x1xf32> to vector<8x8xf32>
    %91 = arith.mulf %86, %90 : vector<8x8xf32>
    %92 = arith.truncf %91 : vector<8x8xf32> to vector<8x8xbf16>
    %93 = arith.truncf %76 : vector<8x8xf32> to vector<8x8xbf16>
    %cst_40 = arith.constant dense<0.000000e+00> : vector<8x8xf32>
    %94 = tpu.matmul %92, %93, %cst_40 {dimension_numbers = #tpu.dot_dimension_numbers<[1], [0], [0], [1], [0, 0, 1, 1], [], []>} : vector<8x8xbf16>, vector<8x8xbf16>, vector<8x8xf32> -> vector<8x8xf32>
    %95 = vector.extract_strided_slice %6 {offsets = [2, 0, 0], sizes = [1, 32, 8], strides = [1, 1, 1]} : vector<4x32x8xbf16> to vector<1x32x8xbf16>
    %96 = vector.shape_cast %95 : vector<1x32x8xbf16> to vector<32x8xbf16>
    %cst_41 = arith.constant dense<0.000000e+00> : vector<8x8xf32>
    %97 = tpu.matmul %4, %96, %cst_41 {dimension_numbers = #tpu.dot_dimension_numbers<[1], [0], [0], [1], [0, 0, 1, 1], [], []>} : vector<8x32xbf16>, vector<32x8xbf16>, vector<8x8xf32> -> vector<8x8xf32>
    %98 = vector.extract_strided_slice %12 {offsets = [2, 0, 0], sizes = [1, 1, 8], strides = [1, 1, 1]} : vector<4x1x8xf32> to vector<1x1x8xf32>
    %99 = vector.shape_cast %98 : vector<1x1x8xf32> to vector<1x8xf32>
    %100 = vector.broadcast %99 : vector<1x8xf32> to vector<8x8xf32>
    %101 = arith.addf %97, %100 : vector<8x8xf32>
    %102 = vector.extract_strided_slice %8 {offsets = [2, 0, 0], sizes = [1, 32, 8], strides = [1, 1, 1]} : vector<4x32x8xbf16> to vector<1x32x8xbf16>
    %103 = vector.shape_cast %102 : vector<1x32x8xbf16> to vector<32x8xbf16>
    %cst_42 = arith.constant dense<0.000000e+00> : vector<8x8xf32>
    %104 = tpu.matmul %4, %103, %cst_42 {dimension_numbers = #tpu.dot_dimension_numbers<[1], [0], [0], [1], [0, 0, 1, 1], [], []>} : vector<8x32xbf16>, vector<32x8xbf16>, vector<8x8xf32> -> vector<8x8xf32>
    %105 = vector.extract_strided_slice %14 {offsets = [2, 0, 0], sizes = [1, 1, 8], strides = [1, 1, 1]} : vector<4x1x8xf32> to vector<1x1x8xf32>
    %106 = vector.shape_cast %105 : vector<1x1x8xf32> to vector<1x8xf32>
    %107 = vector.broadcast %106 : vector<1x8xf32> to vector<8x8xf32>
    %108 = arith.addf %104, %107 : vector<8x8xf32>
    %109 = vector.extract_strided_slice %10 {offsets = [2, 0, 0], sizes = [1, 32, 8], strides = [1, 1, 1]} : vector<4x32x8xbf16> to vector<1x32x8xbf16>
    %110 = vector.shape_cast %109 : vector<1x32x8xbf16> to vector<32x8xbf16>
    %cst_43 = arith.constant dense<0.000000e+00> : vector<8x8xf32>
    %111 = tpu.matmul %4, %110, %cst_43 {dimension_numbers = #tpu.dot_dimension_numbers<[1], [0], [0], [1], [0, 0, 1, 1], [], []>} : vector<8x32xbf16>, vector<32x8xbf16>, vector<8x8xf32> -> vector<8x8xf32>
    %112 = vector.extract_strided_slice %16 {offsets = [2, 0, 0], sizes = [1, 1, 8], strides = [1, 1, 1]} : vector<4x1x8xf32> to vector<1x1x8xf32>
    %113 = vector.shape_cast %112 : vector<1x1x8xf32> to vector<1x8xf32>
    %114 = vector.broadcast %113 : vector<1x8xf32> to vector<8x8xf32>
    %115 = arith.addf %111, %114 : vector<8x8xf32>
    %116 = arith.truncf %101 : vector<8x8xf32> to vector<8x8xbf16>
    %117 = arith.truncf %108 : vector<8x8xf32> to vector<8x8xbf16>
    %cst_44 = arith.constant dense<0.000000e+00> : vector<8x8xf32>
    %118 = tpu.matmul %116, %117, %cst_44 {dimension_numbers = #tpu.dot_dimension_numbers<[1], [1], [0], [0], [0, 0, 1, 0], [], []>} : vector<8x8xbf16>, vector<8x8xbf16>, vector<8x8xf32> -> vector<8x8xf32>
    %cst_45 = arith.constant 0.353553385 : f32
    %119 = vector.broadcast %cst_45 : f32 to vector<8x8xf32>
    %120 = arith.mulf %118, %119 : vector<8x8xf32>
    %cst_46 = arith.constant dense<0xFF800000> : vector<8xf32>
    %121 = vector.multi_reduction <maximumf>, %120, %cst_46 [1] : vector<8x8xf32> to vector<8xf32>
    %122 = vector.shape_cast %121 : vector<8xf32> to vector<8x1xf32>
    %123 = vector.broadcast %122 : vector<8x1xf32> to vector<8x8xf32>
    %124 = arith.subf %120, %123 : vector<8x8xf32>
    %125 = math.exp %124 : vector<8x8xf32>
    %cst_47 = arith.constant dense<0.000000e+00> : vector<8xf32>
    %126 = vector.multi_reduction <add>, %125, %cst_47 [1] : vector<8x8xf32> to vector<8xf32>
    %127 = vector.shape_cast %126 : vector<8xf32> to vector<8x1xf32>
    %128 = tpu.reciprocal %127 : vector<8x1xf32> -> vector<8x1xf32>
    %129 = vector.broadcast %128 : vector<8x1xf32> to vector<8x8xf32>
    %130 = arith.mulf %125, %129 : vector<8x8xf32>
    %131 = arith.truncf %130 : vector<8x8xf32> to vector<8x8xbf16>
    %132 = arith.truncf %115 : vector<8x8xf32> to vector<8x8xbf16>
    %cst_48 = arith.constant dense<0.000000e+00> : vector<8x8xf32>
    %133 = tpu.matmul %131, %132, %cst_48 {dimension_numbers = #tpu.dot_dimension_numbers<[1], [0], [0], [1], [0, 0, 1, 1], [], []>} : vector<8x8xbf16>, vector<8x8xbf16>, vector<8x8xf32> -> vector<8x8xf32>
    %134 = vector.extract_strided_slice %6 {offsets = [3, 0, 0], sizes = [1, 32, 8], strides = [1, 1, 1]} : vector<4x32x8xbf16> to vector<1x32x8xbf16>
    %135 = vector.shape_cast %134 : vector<1x32x8xbf16> to vector<32x8xbf16>
    %cst_49 = arith.constant dense<0.000000e+00> : vector<8x8xf32>
    %136 = tpu.matmul %4, %135, %cst_49 {dimension_numbers = #tpu.dot_dimension_numbers<[1], [0], [0], [1], [0, 0, 1, 1], [], []>} : vector<8x32xbf16>, vector<32x8xbf16>, vector<8x8xf32> -> vector<8x8xf32>
    %137 = vector.extract_strided_slice %12 {offsets = [3, 0, 0], sizes = [1, 1, 8], strides = [1, 1, 1]} : vector<4x1x8xf32> to vector<1x1x8xf32>
    %138 = vector.shape_cast %137 : vector<1x1x8xf32> to vector<1x8xf32>
    %139 = vector.broadcast %138 : vector<1x8xf32> to vector<8x8xf32>
    %140 = arith.addf %136, %139 : vector<8x8xf32>
    %141 = vector.extract_strided_slice %8 {offsets = [3, 0, 0], sizes = [1, 32, 8], strides = [1, 1, 1]} : vector<4x32x8xbf16> to vector<1x32x8xbf16>
    %142 = vector.shape_cast %141 : vector<1x32x8xbf16> to vector<32x8xbf16>
    %cst_50 = arith.constant dense<0.000000e+00> : vector<8x8xf32>
    %143 = tpu.matmul %4, %142, %cst_50 {dimension_numbers = #tpu.dot_dimension_numbers<[1], [0], [0], [1], [0, 0, 1, 1], [], []>} : vector<8x32xbf16>, vector<32x8xbf16>, vector<8x8xf32> -> vector<8x8xf32>
    %144 = vector.extract_strided_slice %14 {offsets = [3, 0, 0], sizes = [1, 1, 8], strides = [1, 1, 1]} : vector<4x1x8xf32> to vector<1x1x8xf32>
    %145 = vector.shape_cast %144 : vector<1x1x8xf32> to vector<1x8xf32>
    %146 = vector.broadcast %145 : vector<1x8xf32> to vector<8x8xf32>
    %147 = arith.addf %143, %146 : vector<8x8xf32>
    %148 = vector.extract_strided_slice %10 {offsets = [3, 0, 0], sizes = [1, 32, 8], strides = [1, 1, 1]} : vector<4x32x8xbf16> to vector<1x32x8xbf16>
    %149 = vector.shape_cast %148 : vector<1x32x8xbf16> to vector<32x8xbf16>
    %cst_51 = arith.constant dense<0.000000e+00> : vector<8x8xf32>
    %150 = tpu.matmul %4, %149, %cst_51 {dimension_numbers = #tpu.dot_dimension_numbers<[1], [0], [0], [1], [0, 0, 1, 1], [], []>} : vector<8x32xbf16>, vector<32x8xbf16>, vector<8x8xf32> -> vector<8x8xf32>
    %151 = vector.extract_strided_slice %16 {offsets = [3, 0, 0], sizes = [1, 1, 8], strides = [1, 1, 1]} : vector<4x1x8xf32> to vector<1x1x8xf32>
    %152 = vector.shape_cast %151 : vector<1x1x8xf32> to vector<1x8xf32>
    %153 = vector.broadcast %152 : vector<1x8xf32> to vector<8x8xf32>
    %154 = arith.addf %150, %153 : vector<8x8xf32>
    %155 = arith.truncf %140 : vector<8x8xf32> to vector<8x8xbf16>
    %156 = arith.truncf %147 : vector<8x8xf32> to vector<8x8xbf16>
    %cst_52 = arith.constant dense<0.000000e+00> : vector<8x8xf32>
    %157 = tpu.matmul %155, %156, %cst_52 {dimension_numbers = #tpu.dot_dimension_numbers<[1], [1], [0], [0], [0, 0, 1, 0], [], []>} : vector<8x8xbf16>, vector<8x8xbf16>, vector<8x8xf32> -> vector<8x8xf32>
    %cst_53 = arith.constant 0.353553385 : f32
    %158 = vector.broadcast %cst_53 : f32 to vector<8x8xf32>
    %159 = arith.mulf %157, %158 : vector<8x8xf32>
    %cst_54 = arith.constant dense<0xFF800000> : vector<8xf32>
    %160 = vector.multi_reduction <maximumf>, %159, %cst_54 [1] : vector<8x8xf32> to vector<8xf32>
    %161 = vector.shape_cast %160 : vector<8xf32> to vector<8x1xf32>
    %162 = vector.broadcast %161 : vector<8x1xf32> to vector<8x8xf32>
    %163 = arith.subf %159, %162 : vector<8x8xf32>
    %164 = math.exp %163 : vector<8x8xf32>
    %cst_55 = arith.constant dense<0.000000e+00> : vector<8xf32>
    %165 = vector.multi_reduction <add>, %164, %cst_55 [1] : vector<8x8xf32> to vector<8xf32>
    %166 = vector.shape_cast %165 : vector<8xf32> to vector<8x1xf32>
    %167 = tpu.reciprocal %166 : vector<8x1xf32> -> vector<8x1xf32>
    %168 = vector.broadcast %167 : vector<8x1xf32> to vector<8x8xf32>
    %169 = arith.mulf %164, %168 : vector<8x8xf32>
    %170 = arith.truncf %169 : vector<8x8xf32> to vector<8x8xbf16>
    %171 = arith.truncf %154 : vector<8x8xf32> to vector<8x8xbf16>
    %cst_56 = arith.constant dense<0.000000e+00> : vector<8x8xf32>
    %172 = tpu.matmul %170, %171, %cst_56 {dimension_numbers = #tpu.dot_dimension_numbers<[1], [0], [0], [1], [0, 0, 1, 1], [], []>} : vector<8x8xbf16>, vector<8x8xbf16>, vector<8x8xf32> -> vector<8x8xf32>
    %173 = tpu.concatenate %55, %94, %133, %172 in 1 : vector<8x8xf32>, vector<8x8xf32>, vector<8x8xf32>, vector<8x8xf32> -> vector<8x32xf32>
    %174 = arith.truncf %173 : vector<8x32xf32> to vector<8x32xbf16>
    %c0_57 = arith.constant 0 : index
    %c0_58 = arith.constant 0 : index
    %c0_59 = arith.constant 0 : index
    %175 = vector.load %arg11[%c0_57, %c0_58, %c0_59] : memref<1x32x32xbf16, #tpu.memory_space<vmem>>, vector<1x32x32xbf16>
    %176 = vector.shape_cast %175 : vector<1x32x32xbf16> to vector<32x32xbf16>
    %cst_60 = arith.constant dense<0.000000e+00> : vector<8x32xf32>
    %177 = tpu.matmul %174, %176, %cst_60 {dimension_numbers = #tpu.dot_dimension_numbers<[1], [0], [0], [1], [0, 0, 1, 1], [], []>} : vector<8x32xbf16>, vector<32x32xbf16>, vector<8x32xf32> -> vector<8x32xf32>
    %c0_61 = arith.constant 0 : index
    %c0_62 = arith.constant 0 : index
    %c0_63 = arith.constant 0 : index
    %178 = vector.load %arg12[%c0_61, %c0_62, %c0_63] : memref<1x1x32xf32, #tpu.memory_space<vmem>>, vector<1x1x32xf32>
    %179 = vector.shape_cast %178 : vector<1x1x32xf32> to vector<1x32xf32>
    %180 = vector.broadcast %179 : vector<1x32xf32> to vector<8x32xf32>
    %181 = arith.addf %177, %180 : vector<8x32xf32>
    %182 = arith.addf %3, %181 : vector<8x32xf32>
    %c0_64 = arith.constant 0 : index
    %c0_65 = arith.constant 0 : index
    %c0_66 = arith.constant 0 : index
    %183 = vector.load %arg17[%c0_64, %c0_65, %c0_66] : memref<1x1x32xf32, #tpu.memory_space<vmem>>, vector<1x1x32xf32>
    %184 = vector.shape_cast %183 : vector<1x1x32xf32> to vector<1x32xf32>
    %c0_67 = arith.constant 0 : index
    %c0_68 = arith.constant 0 : index
    %c0_69 = arith.constant 0 : index
    %185 = vector.load %arg18[%c0_67, %c0_68, %c0_69] : memref<1x1x32xf32, #tpu.memory_space<vmem>>, vector<1x1x32xf32>
    %186 = vector.shape_cast %185 : vector<1x1x32xf32> to vector<1x32xf32>
    %cst_70 = arith.constant dense<0.000000e+00> : vector<8xf32>
    %187 = vector.multi_reduction <add>, %182, %cst_70 [1] : vector<8x32xf32> to vector<8xf32>
    %188 = vector.shape_cast %187 : vector<8xf32> to vector<8x1xf32>
    %cst_71 = arith.constant 3.200000e+01 : f32
    %189 = vector.broadcast %cst_71 : f32 to vector<8x1xf32>
    %190 = arith.divf %188, %189 : vector<8x1xf32>
    %191 = vector.broadcast %190 : vector<8x1xf32> to vector<8x32xf32>
    %192 = arith.subf %182, %191 : vector<8x32xf32>
    %193 = arith.mulf %192, %192 : vector<8x32xf32>
    %cst_72 = arith.constant dense<0.000000e+00> : vector<8xf32>
    %194 = vector.multi_reduction <add>, %193, %cst_72 [1] : vector<8x32xf32> to vector<8xf32>
    %195 = vector.shape_cast %194 : vector<8xf32> to vector<8x1xf32>
    %cst_73 = arith.constant 3.200000e+01 : f32
    %196 = vector.broadcast %cst_73 : f32 to vector<8x1xf32>
    %197 = arith.divf %195, %196 : vector<8x1xf32>
    %cst_74 = arith.constant 9.99999974E-6 : f32
    %198 = vector.broadcast %cst_74 : f32 to vector<8x1xf32>
    %199 = arith.addf %197, %198 : vector<8x1xf32>
    %200 = math.rsqrt %199 : vector<8x1xf32>
    %201 = vector.broadcast %200 : vector<8x1xf32> to vector<8x32xf32>
    %202 = arith.mulf %192, %201 : vector<8x32xf32>
    %203 = vector.broadcast %184 : vector<1x32xf32> to vector<8x32xf32>
    %204 = arith.mulf %202, %203 : vector<8x32xf32>
    %205 = vector.broadcast %186 : vector<1x32xf32> to vector<8x32xf32>
    %206 = arith.addf %204, %205 : vector<8x32xf32>
    %207 = arith.truncf %206 : vector<8x32xf32> to vector<8x32xbf16>
    %c0_75 = arith.constant 0 : index
    %c0_76 = arith.constant 0 : index
    %c0_77 = arith.constant 0 : index
    %208 = vector.load %arg13[%c0_75, %c0_76, %c0_77] : memref<1x32x64xbf16, #tpu.memory_space<vmem>>, vector<1x32x64xbf16>
    %209 = vector.shape_cast %208 : vector<1x32x64xbf16> to vector<32x64xbf16>
    %cst_78 = arith.constant dense<0.000000e+00> : vector<8x64xf32>
    %210 = tpu.matmul %207, %209, %cst_78 {dimension_numbers = #tpu.dot_dimension_numbers<[1], [0], [0], [1], [0, 0, 1, 1], [], []>} : vector<8x32xbf16>, vector<32x64xbf16>, vector<8x64xf32> -> vector<8x64xf32>
    %c0_79 = arith.constant 0 : index
    %c0_80 = arith.constant 0 : index
    %c0_81 = arith.constant 0 : index
    %211 = vector.load %arg14[%c0_79, %c0_80, %c0_81] : memref<1x1x64xf32, #tpu.memory_space<vmem>>, vector<1x1x64xf32>
    %212 = vector.shape_cast %211 : vector<1x1x64xf32> to vector<1x64xf32>
    %213 = vector.broadcast %212 : vector<1x64xf32> to vector<8x64xf32>
    %214 = arith.addf %210, %213 : vector<8x64xf32>
    %cst_82 = arith.constant 0.000000e+00 : f32
    %215 = vector.broadcast %cst_82 : f32 to vector<8x64xf32>
    %216 = arith.maximumf %214, %215 : vector<8x64xf32>
    %217 = arith.truncf %216 : vector<8x64xf32> to vector<8x64xbf16>
    %c0_83 = arith.constant 0 : index
    %c0_84 = arith.constant 0 : index
    %c0_85 = arith.constant 0 : index
    %218 = vector.load %arg15[%c0_83, %c0_84, %c0_85] : memref<1x64x32xbf16, #tpu.memory_space<vmem>>, vector<1x64x32xbf16>
    %219 = vector.shape_cast %218 : vector<1x64x32xbf16> to vector<64x32xbf16>
    %cst_86 = arith.constant dense<0.000000e+00> : vector<8x32xf32>
    %220 = tpu.matmul %217, %219, %cst_86 {dimension_numbers = #tpu.dot_dimension_numbers<[1], [0], [0], [1], [0, 0, 1, 1], [], []>} : vector<8x64xbf16>, vector<64x32xbf16>, vector<8x32xf32> -> vector<8x32xf32>
    %c0_87 = arith.constant 0 : index
    %c0_88 = arith.constant 0 : index
    %c0_89 = arith.constant 0 : index
    %221 = vector.load %arg16[%c0_87, %c0_88, %c0_89] : memref<1x1x32xf32, #tpu.memory_space<vmem>>, vector<1x1x32xf32>
    %222 = vector.shape_cast %221 : vector<1x1x32xf32> to vector<1x32xf32>
    %223 = vector.broadcast %222 : vector<1x32xf32> to vector<8x32xf32>
    %224 = arith.addf %220, %223 : vector<8x32xf32>
    %225 = arith.addf %206, %224 : vector<8x32xf32>
    %c0_90 = arith.constant 0 : index
    %c0_91 = arith.constant 0 : index
    %c0_92 = arith.constant 0 : index
    %226 = vector.load %arg19[%c0_90, %c0_91, %c0_92] : memref<1x1x32xf32, #tpu.memory_space<vmem>>, vector<1x1x32xf32>
    %227 = vector.shape_cast %226 : vector<1x1x32xf32> to vector<1x32xf32>
    %c0_93 = arith.constant 0 : index
    %c0_94 = arith.constant 0 : index
    %c0_95 = arith.constant 0 : index
    %228 = vector.load %arg20[%c0_93, %c0_94, %c0_95] : memref<1x1x32xf32, #tpu.memory_space<vmem>>, vector<1x1x32xf32>
    %229 = vector.shape_cast %228 : vector<1x1x32xf32> to vector<1x32xf32>
    %cst_96 = arith.constant dense<0.000000e+00> : vector<8xf32>
    %230 = vector.multi_reduction <add>, %225, %cst_96 [1] : vector<8x32xf32> to vector<8xf32>
    %231 = vector.shape_cast %230 : vector<8xf32> to vector<8x1xf32>
    %cst_97 = arith.constant 3.200000e+01 : f32
    %232 = vector.broadcast %cst_97 : f32 to vector<8x1xf32>
    %233 = arith.divf %231, %232 : vector<8x1xf32>
    %234 = vector.broadcast %233 : vector<8x1xf32> to vector<8x32xf32>
    %235 = arith.subf %225, %234 : vector<8x32xf32>
    %236 = arith.mulf %235, %235 : vector<8x32xf32>
    %cst_98 = arith.constant dense<0.000000e+00> : vector<8xf32>
    %237 = vector.multi_reduction <add>, %236, %cst_98 [1] : vector<8x32xf32> to vector<8xf32>
    %238 = vector.shape_cast %237 : vector<8xf32> to vector<8x1xf32>
    %cst_99 = arith.constant 3.200000e+01 : f32
    %239 = vector.broadcast %cst_99 : f32 to vector<8x1xf32>
    %240 = arith.divf %238, %239 : vector<8x1xf32>
    %cst_100 = arith.constant 9.99999974E-6 : f32
    %241 = vector.broadcast %cst_100 : f32 to vector<8x1xf32>
    %242 = arith.addf %240, %241 : vector<8x1xf32>
    %243 = math.rsqrt %242 : vector<8x1xf32>
    %244 = vector.broadcast %243 : vector<8x1xf32> to vector<8x32xf32>
    %245 = arith.mulf %235, %244 : vector<8x32xf32>
    %246 = vector.broadcast %227 : vector<1x32xf32> to vector<8x32xf32>
    %247 = arith.mulf %245, %246 : vector<8x32xf32>
    %248 = vector.broadcast %229 : vector<1x32xf32> to vector<8x32xf32>
    %249 = arith.addf %247, %248 : vector<8x32xf32>
    %c0_101 = arith.constant 0 : index
    %c0_102 = arith.constant 0 : index
    %250 = vector.load %arg26[%c0_101, %c0_102] : memref<8x32xf32, #tpu.memory_space<vmem>>, vector<8x32xf32>
    tpu.vector_store %arg26[%c0_101, %c0_102], %249 {strides = array<i32>} : memref<8x32xf32, #tpu.memory_space<vmem>>, vector<8x32xf32>,
    %c1_i32 = arith.constant 1 : i32
    %251 = arith.cmpi eq, %arg1, %c1_i32 : i32
    %252 = arith.extui %251 : i1 to i32
    %c0_i32_103 = arith.constant 0 : i32
    %253 = arith.cmpi ne, %252, %c0_i32_103 : i32
    scf.if %253 {
      %c0_104 = arith.constant 0 : index
      %c0_105 = arith.constant 0 : index
      %254 = vector.load %arg21[%c0_104, %c0_105] : memref<1x32xf32, #tpu.memory_space<vmem>>, vector<1x32xf32>
      %c0_106 = arith.constant 0 : index
      %c0_107 = arith.constant 0 : index
      %255 = vector.load %arg22[%c0_106, %c0_107] : memref<1x32xf32, #tpu.memory_space<vmem>>, vector<1x32xf32>
      %cst_108 = arith.constant dense<0.000000e+00> : vector<8xf32>
      %256 = vector.multi_reduction <add>, %249, %cst_108 [1] : vector<8x32xf32> to vector<8xf32>
      %257 = vector.shape_cast %256 : vector<8xf32> to vector<8x1xf32>
      %cst_109 = arith.constant 3.200000e+01 : f32
      %258 = vector.broadcast %cst_109 : f32 to vector<8x1xf32>
      %259 = arith.divf %257, %258 : vector<8x1xf32>
      %260 = vector.broadcast %259 : vector<8x1xf32> to vector<8x32xf32>
      %261 = arith.subf %249, %260 : vector<8x32xf32>
      %262 = arith.mulf %261, %261 : vector<8x32xf32>
      %cst_110 = arith.constant dense<0.000000e+00> : vector<8xf32>
      %263 = vector.multi_reduction <add>, %262, %cst_110 [1] : vector<8x32xf32> to vector<8xf32>
      %264 = vector.shape_cast %263 : vector<8xf32> to vector<8x1xf32>
      %cst_111 = arith.constant 3.200000e+01 : f32
      %265 = vector.broadcast %cst_111 : f32 to vector<8x1xf32>
      %266 = arith.divf %264, %265 : vector<8x1xf32>
      %cst_112 = arith.constant 9.99999974E-6 : f32
      %267 = vector.broadcast %cst_112 : f32 to vector<8x1xf32>
      %268 = arith.addf %266, %267 : vector<8x1xf32>
      %269 = math.rsqrt %268 : vector<8x1xf32>
      %270 = vector.broadcast %269 : vector<8x1xf32> to vector<8x32xf32>
      %271 = arith.mulf %261, %270 : vector<8x32xf32>
      %272 = vector.broadcast %254 : vector<1x32xf32> to vector<8x32xf32>
      %273 = arith.mulf %271, %272 : vector<8x32xf32>
      %274 = vector.broadcast %255 : vector<1x32xf32> to vector<8x32xf32>
      %275 = arith.addf %273, %274 : vector<8x32xf32>
      %276 = arith.truncf %275 : vector<8x32xf32> to vector<8x32xbf16>
      %c0_113 = arith.constant 0 : index
      %c0_114 = arith.constant 0 : index
      %277 = vector.load %arg23[%c0_113, %c0_114] : memref<32x128xbf16, #tpu.memory_space<vmem>>, vector<32x128xbf16>
      %cst_115 = arith.constant dense<0.000000e+00> : vector<8x128xf32>
      %278 = tpu.matmul %276, %277, %cst_115 {dimension_numbers = #tpu.dot_dimension_numbers<[1], [0], [0], [1], [0, 0, 1, 1], [], []>} : vector<8x32xbf16>, vector<32x128xbf16>, vector<8x128xf32> -> vector<8x128xf32>
      %c0_116 = arith.constant 0 : index
      %c0_117 = arith.constant 0 : index
      %279 = vector.load %arg24[%c0_116, %c0_117] : memref<1x128xf32, #tpu.memory_space<vmem>>, vector<1x128xf32>
      %280 = vector.broadcast %279 : vector<1x128xf32> to vector<8x128xf32>
      %281 = arith.addf %278, %280 : vector<8x128xf32>
      %c0_118 = arith.constant 0 : index
      %c0_119 = arith.constant 0 : index
      %282 = vector.load %arg25[%c0_118, %c0_119] : memref<8x128xf32, #tpu.memory_space<vmem>>, vector<8x128xf32>
      tpu.vector_store %arg25[%c0_118, %c0_119], %281 {strides = array<i32>} : memref<8x128xf32, #tpu.memory_space<vmem>>, vector<8x128xf32>,
    } else {
    }
    return
  }
  func.func @transform_0(%arg0: i32, %arg1: i32) -> (i32, i32) {
    %c0_i32 = arith.constant 0 : i32
    %c0_i32_0 = arith.constant 0 : i32
    return %arg0, %c0_i32 : i32, i32
  }
  func.func @transform_1(%arg0: i32, %arg1: i32) -> (i32, i32) {
    %c0_i32 = arith.constant 0 : i32
    %c0_i32_0 = arith.constant 0 : i32
    %c0_i32_1 = arith.constant 0 : i32
    return %c0_i32, %c0_i32_0 : i32, i32
  }
  func.func @transform_2(%arg0: i32, %arg1: i32) -> (i32, i32) {
    %c0_i32 = arith.constant 0 : i32
    %c0_i32_0 = arith.constant 0 : i32
    %c0_i32_1 = arith.constant 0 : i32
    return %c0_i32, %c0_i32_0 : i32, i32
  }
  func.func @transform_3(%arg0: i32, %arg1: i32) -> (i32, i32, i32, i32) {
    %c0_i32 = arith.constant 0 : i32
    %c0_i32_0 = arith.constant 0 : i32
    %c0_i32_1 = arith.constant 0 : i32
    %c0_i32_2 = arith.constant 0 : i32
    return %arg1, %c0_i32, %c0_i32_0, %c0_i32_1 : i32, i32, i32, i32
  }
  func.func @transform_4(%arg0: i32, %arg1: i32) -> (i32, i32, i32, i32) {
    %c0_i32 = arith.constant 0 : i32
    %c0_i32_0 = arith.constant 0 : i32
    %c0_i32_1 = arith.constant 0 : i32
    %c0_i32_2 = arith.constant 0 : i32
    return %arg1, %c0_i32, %c0_i32_0, %c0_i32_1 : i32, i32, i32, i32
  }
  func.func @transform_5(%arg0: i32, %arg1: i32) -> (i32, i32, i32, i32) {
    %c0_i32 = arith.constant 0 : i32
    %c0_i32_0 = arith.constant 0 : i32
    %c0_i32_1 = arith.constant 0 : i32
    %c0_i32_2 = arith.constant 0 : i32
    return %arg1, %c0_i32, %c0_i32_0, %c0_i32_1 : i32, i32, i32, i32
  }
  func.func @transform_6(%arg0: i32, %arg1: i32) -> (i32, i32, i32, i32) {
    %c0_i32 = arith.constant 0 : i32
    %c0_i32_0 = arith.constant 0 : i32
    %c0_i32_1 = arith.constant 0 : i32
    %c0_i32_2 = arith.constant 0 : i32
    return %arg1, %c0_i32, %c0_i32_0, %c0_i32_1 : i32, i32, i32, i32
  }
  func.func @transform_7(%arg0: i32, %arg1: i32) -> (i32, i32, i32, i32) {
    %c0_i32 = arith.constant 0 : i32
    %c0_i32_0 = arith.constant 0 : i32
    %c0_i32_1 = arith.constant 0 : i32
    %c0_i32_2 = arith.constant 0 : i32
    return %arg1, %c0_i32, %c0_i32_0, %c0_i32_1 : i32, i32, i32, i32
  }
  func.func @transform_8(%arg0: i32, %arg1: i32) -> (i32, i32, i32, i32) {
    %c0_i32 = arith.constant 0 : i32
    %c0_i32_0 = arith.constant 0 : i32
    %c0_i32_1 = arith.constant 0 : i32
    %c0_i32_2 = arith.constant 0 : i32
    return %arg1, %c0_i32, %c0_i32_0, %c0_i32_1 : i32, i32, i32, i32
  }
  func.func @transform_9(%arg0: i32, %arg1: i32) -> (i32, i32, i32) {
    %c0_i32 = arith.constant 0 : i32
    %c0_i32_0 = arith.constant 0 : i32
    %c0_i32_1 = arith.constant 0 : i32
    return %arg1, %c0_i32, %c0_i32_0 : i32, i32, i32
  }
  func.func @transform_10(%arg0: i32, %arg1: i32) -> (i32, i32, i32) {
    %c0_i32 = arith.constant 0 : i32
    %c0_i32_0 = arith.constant 0 : i32
    %c0_i32_1 = arith.constant 0 : i32
    return %arg1, %c0_i32, %c0_i32_0 : i32, i32, i32
  }
  func.func @transform_11(%arg0: i32, %arg1: i32) -> (i32, i32, i32) {
    %c0_i32 = arith.constant 0 : i32
    %c0_i32_0 = arith.constant 0 : i32
    %c0_i32_1 = arith.constant 0 : i32
    return %arg1, %c0_i32, %c0_i32_0 : i32, i32, i32
  }
  func.func @transform_12(%arg0: i32, %arg1: i32) -> (i32, i32, i32) {
    %c0_i32 = arith.constant 0 : i32
    %c0_i32_0 = arith.constant 0 : i32
    %c0_i32_1 = arith.constant 0 : i32
    return %arg1, %c0_i32, %c0_i32_0 : i32, i32, i32
  }
  func.func @transform_13(%arg0: i32, %arg1: i32) -> (i32, i32, i32) {
    %c0_i32 = arith.constant 0 : i32
    %c0_i32_0 = arith.constant 0 : i32
    %c0_i32_1 = arith.constant 0 : i32
    return %arg1, %c0_i32, %c0_i32_0 : i32, i32, i32
  }
  func.func @transform_14(%arg0: i32, %arg1: i32) -> (i32, i32, i32) {
    %c0_i32 = arith.constant 0 : i32
    %c0_i32_0 = arith.constant 0 : i32
    %c0_i32_1 = arith.constant 0 : i32
    return %arg1, %c0_i32, %c0_i32_0 : i32, i32, i32
  }
  func.func @transform_15(%arg0: i32, %arg1: i32) -> (i32, i32, i32) {
    %c0_i32 = arith.constant 0 : i32
    %c0_i32_0 = arith.constant 0 : i32
    %c0_i32_1 = arith.constant 0 : i32
    return %arg1, %c0_i32, %c0_i32_0 : i32, i32, i32
  }
  func.func @transform_16(%arg0: i32, %arg1: i32) -> (i32, i32, i32) {
    %c0_i32 = arith.constant 0 : i32
    %c0_i32_0 = arith.constant 0 : i32
    %c0_i32_1 = arith.constant 0 : i32
    return %arg1, %c0_i32, %c0_i32_0 : i32, i32, i32
  }
  func.func @transform_17(%arg0: i32, %arg1: i32) -> (i32, i32, i32) {
    %c0_i32 = arith.constant 0 : i32
    %c0_i32_0 = arith.constant 0 : i32
    %c0_i32_1 = arith.constant 0 : i32
    return %arg1, %c0_i32, %c0_i32_0 : i32, i32, i32
  }
  func.func @transform_18(%arg0: i32, %arg1: i32) -> (i32, i32, i32) {
    %c0_i32 = arith.constant 0 : i32
    %c0_i32_0 = arith.constant 0 : i32
    %c0_i32_1 = arith.constant 0 : i32
    return %arg1, %c0_i32, %c0_i32_0 : i32, i32, i32
  }
  func.func @transform_19(%arg0: i32, %arg1: i32) -> (i32, i32) {
    %c0_i32 = arith.constant 0 : i32
    %c0_i32_0 = arith.constant 0 : i32
    %c0_i32_1 = arith.constant 0 : i32
    return %c0_i32, %c0_i32_0 : i32, i32
  }
  func.func @transform_20(%arg0: i32, %arg1: i32) -> (i32, i32) {
    %c0_i32 = arith.constant 0 : i32
    %c0_i32_0 = arith.constant 0 : i32
    %c0_i32_1 = arith.constant 0 : i32
    return %c0_i32, %c0_i32_0 : i32, i32
  }
  func.func @transform_21(%arg0: i32, %arg1: i32) -> (i32, i32) {
    %c0_i32 = arith.constant 0 : i32
    %c0_i32_0 = arith.constant 0 : i32
    %c0_i32_1 = arith.constant 0 : i32
    return %c0_i32, %c0_i32_0 : i32, i32
  }
  func.func @transform_22(%arg0: i32, %arg1: i32) -> (i32, i32) {
    %c0_i32 = arith.constant 0 : i32
    %c0_i32_0 = arith.constant 0 : i32
    %c0_i32_1 = arith.constant 0 : i32
    return %c0_i32, %c0_i32_0 : i32, i32
  }
  func.func @transform_23(%arg0: i32, %arg1: i32) -> (i32, i32) {
    %c0_i32 = arith.constant 0 : i32
    %c0_i32_0 = arith.constant 0 : i32
    return %arg0, %c0_i32 : i32, i32
  }
}

</mosaic_0001>

<llo_original>
// kernel: bert_inspired_forward.1
$region0: #{bert_inspired_forward.1}
  #allocation0 [shape = 'u32[]', space=smem, size = 0x4, offset = 0x4, fixed_abs, tag = 'smem constant byte address 0x4 - core index']
  #allocation1 [shape = 'u32[144,128]{1,0:T(1,128)}', space=vmem, size = 0x12000, scoped, tag = 'internal scratch']
  #allocation2 [shape = 'f32[8,32]{1,0:T(8,128)}', space=vmem, size = 0x1000, scoped, tag = 'scratch operand']
  %s0 = inlined_call_operand.vmem [shape: f32[16,48], index: 0, kind: input, shape index: {}]
  %s1 = inlined_call_operand.vmem [shape: bf16[48,32], index: 1, kind: input, shape index: {}]
  %s2 = inlined_call_operand.vmem [shape: f32[8,32], index: 2, kind: input, shape index: {}]
  %s3 = inlined_call_operand.vmem [shape: bf16[2,4,32,8], index: 3, kind: input, shape index: {}]
  %s4 = inlined_call_operand.vmem [shape: f32[2,4,1,8], index: 4, kind: input, shape index: {}]
  %s5 = inlined_call_operand.vmem [shape: bf16[2,4,32,8], index: 5, kind: input, shape index: {}]
  %s6 = inlined_call_operand.vmem [shape: f32[2,4,1,8], index: 6, kind: input, shape index: {}]
  %s7 = inlined_call_operand.vmem [shape: bf16[2,4,32,8], index: 7, kind: input, shape index: {}]
  %s8 = inlined_call_operand.vmem [shape: f32[2,4,1,8], index: 8, kind: input, shape index: {}]
  %s9 = inlined_call_operand.vmem [shape: bf16[2,32,32], index: 9, kind: input, shape index: {}]
  %s10 = inlined_call_operand.vmem [shape: f32[2,1,32], index: 10, kind: input, shape index: {}]
  %s11 = inlined_call_operand.vmem [shape: bf16[2,32,64], index: 11, kind: input, shape index: {}]
  %s12 = inlined_call_operand.vmem [shape: f32[2,1,64], index: 12, kind: input, shape index: {}]
  %s13 = inlined_call_operand.vmem [shape: bf16[2,64,32], index: 13, kind: input, shape index: {}]
  %s14 = inlined_call_operand.vmem [shape: f32[2,1,32], index: 14, kind: input, shape index: {}]
  %s15 = inlined_call_operand.vmem [shape: f32[2,1,32], index: 15, kind: input, shape index: {}]
  %s16 = inlined_call_operand.vmem [shape: f32[2,1,32], index: 16, kind: input, shape index: {}]
  %s17 = inlined_call_operand.vmem [shape: f32[2,1,32], index: 17, kind: input, shape index: {}]
  %s18 = inlined_call_operand.vmem [shape: f32[2,1,32], index: 18, kind: input, shape index: {}]
  %s19 = inlined_call_operand.vmem [shape: f32[1,32], index: 19, kind: input, shape index: {}]
  %s20 = inlined_call_operand.vmem [shape: f32[1,32], index: 20, kind: input, shape index: {}]
  %s21 = inlined_call_operand.vmem [shape: bf16[32,128], index: 21, kind: input, shape index: {}]
  %s22 = inlined_call_operand.vmem [shape: f32[1,128], index: 22, kind: input, shape index: {}]
  %s23 = inlined_call_operand.vmem [shape: f32[16,128], index: 23, kind: output, shape index: {}]
  %s24 = sld [smem:[#allocation0]]
  $region133: #{bert_inspired_forward.1} parent=0
    _
  %s26 = ssub.s32 1, %s24
  %s27 = scalar_select 0, %s26, %s24
  loop: start=0, step=1, limit=6
  $region2: #{bert_inspired_forward.1} parent=0 // loop_pre_header
    _
  $region3: #{bert_inspired_forward.1} parent=0 // loop_header
    %s29 = sphi 0, %s33
    %p30 = scmp.ge.s32.totalorder %s29, 6
    %s36 = sphi 0, %s48
    %s37 = sphi 0, %s44
    %s38 = sphi 0, %s36
    %s39 = sphi 0, %s37
    %s40 = sphi 0, %s38
    %s41 = sphi 0, %s39
    %s51 = sphi 0, %s53
    %s54 = sphi 0, %s51
    %s55 = sphi 0, %s54
    %s71 = sphi 0, %s55
    %s75 = sphi 0, %s75
    %s77 = sphi 0, %s75
    %s78 = sphi 0, %s77
    %s92 = sphi 0, %s78
    %s96 = sphi 0, %s96
    %s98 = sphi 0, %s96
    %s99 = sphi 0, %s98
    %s113 = sphi 0, %s99
    %s119 = sphi 0, %s121
    %s122 = sphi 0, %s119
    %s123 = sphi 0, %s122
    %s139 = sphi 0, %s123
    %s145 = sphi 0, %s147
    %s148 = sphi 0, %s145
    %s149 = sphi 0, %s148
    %s165 = sphi 0, %s149
    %s171 = sphi 0, %s173
    %s174 = sphi 0, %s171
    %s175 = sphi 0, %s174
    %s191 = sphi 0, %s175
    %s197 = sphi 0, %s199
    %s200 = sphi 0, %s197
    %s201 = sphi 0, %s200
    %s217 = sphi 0, %s201
    %s223 = sphi 0, %s225
    %s226 = sphi 0, %s223
    %s227 = sphi 0, %s226
    %s243 = sphi 0, %s227
    %s249 = sphi 0, %s251
    %s252 = sphi 0, %s249
    %s253 = sphi 0, %s252
    %s269 = sphi 0, %s253
    %s275 = sphi 0, %s277
    %s278 = sphi 0, %s275
    %s279 = sphi 0, %s278
    %s295 = sphi 0, %s279
    %s301 = sphi 0, %s303
    %s304 = sphi 0, %s301
    %s305 = sphi 0, %s304
    %s321 = sphi 0, %s305
    %s327 = sphi 0, %s329
    %s330 = sphi 0, %s327
    %s331 = sphi 0, %s330
    %s347 = sphi 0, %s331
    %s353 = sphi 0, %s355
    %s356 = sphi 0, %s353
    %s357 = sphi 0, %s356
    %s373 = sphi 0, %s357
    %s379 = sphi 0, %s381
    %s382 = sphi 0, %s379
    %s383 = sphi 0, %s382
    %s399 = sphi 0, %s383
    %s405 = sphi 0, %s407
    %s408 = sphi 0, %s405
    %s409 = sphi 0, %s408
    %s425 = sphi 0, %s409
    %s431 = sphi 0, %s433
    %s434 = sphi 0, %s431
    %s435 = sphi 0, %s434
    %s451 = sphi 0, %s435
    %s457 = sphi 0, %s459
    %s460 = sphi 0, %s457
    %s461 = sphi 0, %s460
    %s477 = sphi 0, %s461
    %s483 = sphi 0, %s485
    %s486 = sphi 0, %s483
    %s487 = sphi 0, %s486
    %s503 = sphi 0, %s487
    %s509 = sphi 0, %s511
    %s512 = sphi 0, %s509
    %s513 = sphi 0, %s512
    %s529 = sphi 0, %s513
    %s533 = sphi 0, %s533
    %s535 = sphi 0, %s533
    %s536 = sphi 0, %s535
    %s550 = sphi 0, %s536
    %s554 = sphi 0, %s554
    %s556 = sphi 0, %s554
    %s557 = sphi 0, %s556
    %s571 = sphi 0, %s557
    %s575 = sphi 0, %s575
    %s577 = sphi 0, %s575
    %s578 = sphi 0, %s577
    %s592 = sphi 0, %s578
    %s596 = sphi 0, %s596
    %s598 = sphi 0, %s596
    %s599 = sphi 0, %s598
    %s613 = sphi 0, %s599
    %s619 = sphi 0, %s621
    %s622 = sphi 0, %s619
    %s623 = sphi 0, %s622
    %s639 = sphi 0, %s623
  $region4: #{bert_inspired_forward.1} parent=0 // loop_header_branch
    %32 = sbr.rel (%p30) target = $region8
  $region5: #{bert_inspired_forward.1} parent=0 // loop_body
    %s34 = ssub.s32 %s29, 1
    %s35 = ssub.s32 %s29, 2
    %s42 = sadd.s32 1, %s37
    %p43 = scmp.ge.s32.totalorder %s42, 2
    %s44 = scalar_select %p43, 0, %s42
    %s45 = sadd.s32 1, %s36
    %s46 = scalar_select %p43, %s45, %s36
    %p47 = scmp.ge.s32.totalorder %s46, 2
    %s48 = scalar_select %p47, 0, %s46
    %s49 = ssub.s32 %s36, %s48
    %p50 = scmp.eq.s32.totalorder %s49, 0
    %s52 = sadd.s32 %s51, 1
    %s53 = scalar_select %p50, %s51, %s52
    %p56 = pneg %p50
    %p57 = scmp.eq.s32.totalorder %s29, 3
    %p58 = por %p56, %p57
    %p59 = scmp.ne.s32.totalorder %s51, %s54
    %p60 = scmp.eq.s32.totalorder %s29, 0
    %p61 = por %p59, %p60
    %p62 = scmp.ne.s32.totalorder %s51, %s54
    %p63 = scmp.eq.s32.totalorder %s34, 3
    %p64 = por %p62, %p63
    %p65 = scmp.ne.s32.totalorder %s54, %s55
    %p66 = scmp.eq.s32.totalorder %s34, 0
    %p67 = por %p65, %p66
    %p68 = scmp.ne.s32.totalorder %s54, %s55
    %p69 = scmp.eq.s32.totalorder %s35, 3
    %p70 = por %p68, %p69
    %p72 = scmp.ne.s32.totalorder %s55, %s71
    %p73 = scmp.eq.s32.totalorder %s35, 0
    %p74 = por %p72, %p73
    %s76 = sadd.s32 %s75, 1
    %p79 = scmp.eq.s32.totalorder %s29, 3
    %p80 = scmp.ne.s32.totalorder %s75, %s77
    %p81 = scmp.eq.s32.totalorder %s29, 0
    %p82 = por %p80, %p81
    %p83 = scmp.ne.s32.totalorder %s75, %s77
    %p84 = scmp.eq.s32.totalorder %s34, 3
    %p85 = por %p83, %p84
    %p86 = scmp.ne.s32.totalorder %s77, %s78
    %p87 = scmp.eq.s32.totalorder %s34, 0
    %p88 = por %p86, %p87
    %p89 = scmp.ne.s32.totalorder %s77, %s78
    %p90 = scmp.eq.s32.totalorder %s35, 3
    %p91 = por %p89, %p90
    %p93 = scmp.ne.s32.totalorder %s78, %s92
    %p94 = scmp.eq.s32.totalorder %s35, 0
    %p95 = por %p93, %p94
    %s97 = sadd.s32 %s96, 1
    %p100 = scmp.eq.s32.totalorder %s29, 3
    %p101 = scmp.ne.s32.totalorder %s96, %s98
    %p102 = scmp.eq.s32.totalorder %s29, 0
    %p103 = por %p101, %p102
    %p104 = scmp.ne.s32.totalorder %s96, %s98
    %p105 = scmp.eq.s32.totalorder %s34, 3
    %p106 = por %p104, %p105
    %p107 = scmp.ne.s32.totalorder %s98, %s99
    %p108 = scmp.eq.s32.totalorder %s34, 0
    %p109 = por %p107, %p108
    %p110 = scmp.ne.s32.totalorder %s98, %s99
    %p111 = scmp.eq.s32.totalorder %s35, 3
    %p112 = por %p110, %p111
    %p114 = scmp.ne.s32.totalorder %s99, %s113
    %p115 = scmp.eq.s32.totalorder %s35, 0
    %p116 = por %p114, %p115
    %s117 = ssub.s32 %s37, %s44
    %p118 = scmp.eq.s32.totalorder %s117, 0
    %s120 = sadd.s32 %s119, 1
    %s121 = scalar_select %p118, %s119, %s120
    %p124 = pneg %p118
    %p125 = scmp.eq.s32.totalorder %s29, 3
    %p126 = por %p124, %p125
    %p127 = scmp.ne.s32.totalorder %s119, %s122
    %p128 = scmp.eq.s32.totalorder %s29, 0
    %p129 = por %p127, %p128
    %p130 = scmp.ne.s32.totalorder %s119, %s122
    %p131 = scmp.eq.s32.totalorder %s34, 3
    %p132 = por %p130, %p131
    %p133 = scmp.ne.s32.totalorder %s122, %s123
    %p134 = scmp.eq.s32.totalorder %s34, 0
    %p135 = por %p133, %p134
    %p136 = scmp.ne.s32.totalorder %s122, %s123
    %p137 = scmp.eq.s32.totalorder %s35, 3
    %p138 = por %p136, %p137
    %p140 = scmp.ne.s32.totalorder %s123, %s139
    %p141 = scmp.eq.s32.totalorder %s35, 0
    %p142 = por %p140, %p141
    %s143 = ssub.s32 %s37, %s44
    %p144 = scmp.eq.s32.totalorder %s143, 0
    %s146 = sadd.s32 %s145, 1
    %s147 = scalar_select %p144, %s145, %s146
    %p150 = pneg %p144
    %p151 = scmp.eq.s32.totalorder %s29, 3
    %p152 = por %p150, %p151
    %p153 = scmp.ne.s32.totalorder %s145, %s148
    %p154 = scmp.eq.s32.totalorder %s29, 0
    %p155 = por %p153, %p154
    %p156 = scmp.ne.s32.totalorder %s145, %s148
    %p157 = scmp.eq.s32.totalorder %s34, 3
    %p158 = por %p156, %p157
    %p159 = scmp.ne.s32.totalorder %s148, %s149
    %p160 = scmp.eq.s32.totalorder %s34, 0
    %p161 = por %p159, %p160
    %p162 = scmp.ne.s32.totalorder %s148, %s149
    %p163 = scmp.eq.s32.totalorder %s35, 3
    %p164 = por %p162, %p163
    %p166 = scmp.ne.s32.totalorder %s149, %s165
    %p167 = scmp.eq.s32.totalorder %s35, 0
    %p168 = por %p166, %p167
    %s169 = ssub.s32 %s37, %s44
    %p170 = scmp.eq.s32.totalorder %s169, 0
    %s172 = sadd.s32 %s171, 1
    %s173 = scalar_select %p170, %s171, %s172
    %p176 = pneg %p170
    %p177 = scmp.eq.s32.totalorder %s29, 3
    %p178 = por %p176, %p177
    %p179 = scmp.ne.s32.totalorder %s171, %s174
    %p180 = scmp.eq.s32.totalorder %s29, 0
    %p181 = por %p179, %p180
    %p182 = scmp.ne.s32.totalorder %s171, %s174
    %p183 = scmp.eq.s32.totalorder %s34, 3
    %p184 = por %p182, %p183
    %p185 = scmp.ne.s32.totalorder %s174, %s175
    %p186 = scmp.eq.s32.totalorder %s34, 0
    %p187 = por %p185, %p186
    %p188 = scmp.ne.s32.totalorder %s174, %s175
    %p189 = scmp.eq.s32.totalorder %s35, 3
    %p190 = por %p188, %p189
    %p192 = scmp.ne.s32.totalorder %s175, %s191
    %p193 = scmp.eq.s32.totalorder %s35, 0
    %p194 = por %p192, %p193
    %s195 = ssub.s32 %s37, %s44
    %p196 = scmp.eq.s32.totalorder %s195, 0
    %s198 = sadd.s32 %s197, 1
    %s199 = scalar_select %p196, %s197, %s198
    %p202 = pneg %p196
    %p203 = scmp.eq.s32.totalorder %s29, 3
    %p204 = por %p202, %p203
    %p205 = scmp.ne.s32.totalorder %s197, %s200
    %p206 = scmp.eq.s32.totalorder %s29, 0
    %p207 = por %p205, %p206
    %p208 = scmp.ne.s32.totalorder %s197, %s200
    %p209 = scmp.eq.s32.totalorder %s34, 3
    %p210 = por %p208, %p209
    %p211 = scmp.ne.s32.totalorder %s200, %s201
    %p212 = scmp.eq.s32.totalorder %s34, 0
    %p213 = por %p211, %p212
    %p214 = scmp.ne.s32.totalorder %s200, %s201
    %p215 = scmp.eq.s32.totalorder %s35, 3
    %p216 = por %p214, %p215
    %p218 = scmp.ne.s32.totalorder %s201, %s217
    %p219 = scmp.eq.s32.totalorder %s35, 0
    %p220 = por %p218, %p219
    %s221 = ssub.s32 %s37, %s44
    %p222 = scmp.eq.s32.totalorder %s221, 0
    %s224 = sadd.s32 %s223, 1
    %s225 = scalar_select %p222, %s223, %s224
    %p228 = pneg %p222
    %p229 = scmp.eq.s32.totalorder %s29, 3
    %p230 = por %p228, %p229
    %p231 = scmp.ne.s32.totalorder %s223, %s226
    %p232 = scmp.eq.s32.totalorder %s29, 0
    %p233 = por %p231, %p232
    %p234 = scmp.ne.s32.totalorder %s223, %s226
    %p235 = scmp.eq.s32.totalorder %s34, 3
    %p236 = por %p234, %p235
    %p237 = scmp.ne.s32.totalorder %s226, %s227
    %p238 = scmp.eq.s32.totalorder %s34, 0
    %p239 = por %p237, %p238
    %p240 = scmp.ne.s32.totalorder %s226, %s227
    %p241 = scmp.eq.s32.totalorder %s35, 3
    %p242 = por %p240, %p241
    %p244 = scmp.ne.s32.totalorder %s227, %s243
    %p245 = scmp.eq.s32.totalorder %s35, 0
    %p246 = por %p244, %p245
    %s247 = ssub.s32 %s37, %s44
    %p248 = scmp.eq.s32.totalorder %s247, 0
    %s250 = sadd.s32 %s249, 1
    %s251 = scalar_select %p248, %s249, %s250
    %p254 = pneg %p248
    %p255 = scmp.eq.s32.totalorder %s29, 3
    %p256 = por %p254, %p255
    %p257 = scmp.ne.s32.totalorder %s249, %s252
    %p258 = scmp.eq.s32.totalorder %s29, 0
    %p259 = por %p257, %p258
    %p260 = scmp.ne.s32.totalorder %s249, %s252
    %p261 = scmp.eq.s32.totalorder %s34, 3
    %p262 = por %p260, %p261
    %p263 = scmp.ne.s32.totalorder %s252, %s253
    %p264 = scmp.eq.s32.totalorder %s34, 0
    %p265 = por %p263, %p264
    %p266 = scmp.ne.s32.totalorder %s252, %s253
    %p267 = scmp.eq.s32.totalorder %s35, 3
    %p268 = por %p266, %p267
    %p270 = scmp.ne.s32.totalorder %s253, %s269
    %p271 = scmp.eq.s32.totalorder %s35, 0
    %p272 = por %p270, %p271
    %s273 = ssub.s32 %s37, %s44
    %p274 = scmp.eq.s32.totalorder %s273, 0
    %s276 = sadd.s32 %s275, 1
    %s277 = scalar_select %p274, %s275, %s276
    %p280 = pneg %p274
    %p281 = scmp.eq.s32.totalorder %s29, 3
    %p282 = por %p280, %p281
    %p283 = scmp.ne.s32.totalorder %s275, %s278
    %p284 = scmp.eq.s32.totalorder %s29, 0
    %p285 = por %p283, %p284
    %p286 = scmp.ne.s32.totalorder %s275, %s278
    %p287 = scmp.eq.s32.totalorder %s34, 3
    %p288 = por %p286, %p287
    %p289 = scmp.ne.s32.totalorder %s278, %s279
    %p290 = scmp.eq.s32.totalorder %s34, 0
    %p291 = por %p289, %p290
    %p292 = scmp.ne.s32.totalorder %s278, %s279
    %p293 = scmp.eq.s32.totalorder %s35, 3
    %p294 = por %p292, %p293
    %p296 = scmp.ne.s32.totalorder %s279, %s295
    %p297 = scmp.eq.s32.totalorder %s35, 0
    %p298 = por %p296, %p297
    %s299 = ssub.s32 %s37, %s44
    %p300 = scmp.eq.s32.totalorder %s299, 0
    %s302 = sadd.s32 %s301, 1
    %s303 = scalar_select %p300, %s301, %s302
    %p306 = pneg %p300
    %p307 = scmp.eq.s32.totalorder %s29, 3
    %p308 = por %p306, %p307
    %p309 = scmp.ne.s32.totalorder %s301, %s304
    %p310 = scmp.eq.s32.totalorder %s29, 0
    %p311 = por %p309, %p310
    %p312 = scmp.ne.s32.totalorder %s301, %s304
    %p313 = scmp.eq.s32.totalorder %s34, 3
    %p314 = por %p312, %p313
    %p315 = scmp.ne.s32.totalorder %s304, %s305
    %p316 = scmp.eq.s32.totalorder %s34, 0
    %p317 = por %p315, %p316
    %p318 = scmp.ne.s32.totalorder %s304, %s305
    %p319 = scmp.eq.s32.totalorder %s35, 3
    %p320 = por %p318, %p319
    %p322 = scmp.ne.s32.totalorder %s305, %s321
    %p323 = scmp.eq.s32.totalorder %s35, 0
    %p324 = por %p322, %p323
    %s325 = ssub.s32 %s37, %s44
    %p326 = scmp.eq.s32.totalorder %s325, 0
    %s328 = sadd.s32 %s327, 1
    %s329 = scalar_select %p326, %s327, %s328
    %p332 = pneg %p326
    %p333 = scmp.eq.s32.totalorder %s29, 3
    %p334 = por %p332, %p333
    %p335 = scmp.ne.s32.totalorder %s327, %s330
    %p336 = scmp.eq.s32.totalorder %s29, 0
    %p337 = por %p335, %p336
    %p338 = scmp.ne.s32.totalorder %s327, %s330
    %p339 = scmp.eq.s32.totalorder %s34, 3
    %p340 = por %p338, %p339
    %p341 = scmp.ne.s32.totalorder %s330, %s331
    %p342 = scmp.eq.s32.totalorder %s34, 0
    %p343 = por %p341, %p342
    %p344 = scmp.ne.s32.totalorder %s330, %s331
    %p345 = scmp.eq.s32.totalorder %s35, 3
    %p346 = por %p344, %p345
    %p348 = scmp.ne.s32.totalorder %s331, %s347
    %p349 = scmp.eq.s32.totalorder %s35, 0
    %p350 = por %p348, %p349
    %s351 = ssub.s32 %s37, %s44
    %p352 = scmp.eq.s32.totalorder %s351, 0
    %s354 = sadd.s32 %s353, 1
    %s355 = scalar_select %p352, %s353, %s354
    %p358 = pneg %p352
    %p359 = scmp.eq.s32.totalorder %s29, 3
    %p360 = por %p358, %p359
    %p361 = scmp.ne.s32.totalorder %s353, %s356
    %p362 = scmp.eq.s32.totalorder %s29, 0
    %p363 = por %p361, %p362
    %p364 = scmp.ne.s32.totalorder %s353, %s356
    %p365 = scmp.eq.s32.totalorder %s34, 3
    %p366 = por %p364, %p365
    %p367 = scmp.ne.s32.totalorder %s356, %s357
    %p368 = scmp.eq.s32.totalorder %s34, 0
    %p369 = por %p367, %p368
    %p370 = scmp.ne.s32.totalorder %s356, %s357
    %p371 = scmp.eq.s32.totalorder %s35, 3
    %p372 = por %p370, %p371
    %p374 = scmp.ne.s32.totalorder %s357, %s373
    %p375 = scmp.eq.s32.totalorder %s35, 0
    %p376 = por %p374, %p375
    %s377 = ssub.s32 %s37, %s44
    %p378 = scmp.eq.s32.totalorder %s377, 0
    %s380 = sadd.s32 %s379, 1
    %s381 = scalar_select %p378, %s379, %s380
    %p384 = pneg %p378
    %p385 = scmp.eq.s32.totalorder %s29, 3
    %p386 = por %p384, %p385
    %p387 = scmp.ne.s32.totalorder %s379, %s382
    %p388 = scmp.eq.s32.totalorder %s29, 0
    %p389 = por %p387, %p388
    %p390 = scmp.ne.s32.totalorder %s379, %s382
    %p391 = scmp.eq.s32.totalorder %s34, 3
    %p392 = por %p390, %p391
    %p393 = scmp.ne.s32.totalorder %s382, %s383
    %p394 = scmp.eq.s32.totalorder %s34, 0
    %p395 = por %p393, %p394
    %p396 = scmp.ne.s32.totalorder %s382, %s383
    %p397 = scmp.eq.s32.totalorder %s35, 3
    %p398 = por %p396, %p397
    %p400 = scmp.ne.s32.totalorder %s383, %s399
    %p401 = scmp.eq.s32.totalorder %s35, 0
    %p402 = por %p400, %p401
    %s403 = ssub.s32 %s37, %s44
    %p404 = scmp.eq.s32.totalorder %s403, 0
    %s406 = sadd.s32 %s405, 1
    %s407 = scalar_select %p404, %s405, %s406
    %p410 = pneg %p404
    %p411 = scmp.eq.s32.totalorder %s29, 3
    %p412 = por %p410, %p411
    %p413 = scmp.ne.s32.totalorder %s405, %s408
    %p414 = scmp.eq.s32.totalorder %s29, 0
    %p415 = por %p413, %p414
    %p416 = scmp.ne.s32.totalorder %s405, %s408
    %p417 = scmp.eq.s32.totalorder %s34, 3
    %p418 = por %p416, %p417
    %p419 = scmp.ne.s32.totalorder %s408, %s409
    %p420 = scmp.eq.s32.totalorder %s34, 0
    %p421 = por %p419, %p420
    %p422 = scmp.ne.s32.totalorder %s408, %s409
    %p423 = scmp.eq.s32.totalorder %s35, 3
    %p424 = por %p422, %p423
    %p426 = scmp.ne.s32.totalorder %s409, %s425
    %p427 = scmp.eq.s32.totalorder %s35, 0
    %p428 = por %p426, %p427
    %s429 = ssub.s32 %s37, %s44
    %p430 = scmp.eq.s32.totalorder %s429, 0
    %s432 = sadd.s32 %s431, 1
    %s433 = scalar_select %p430, %s431, %s432
    %p436 = pneg %p430
    %p437 = scmp.eq.s32.totalorder %s29, 3
    %p438 = por %p436, %p437
    %p439 = scmp.ne.s32.totalorder %s431, %s434
    %p440 = scmp.eq.s32.totalorder %s29, 0
    %p441 = por %p439, %p440
    %p442 = scmp.ne.s32.totalorder %s431, %s434
    %p443 = scmp.eq.s32.totalorder %s34, 3
    %p444 = por %p442, %p443
    %p445 = scmp.ne.s32.totalorder %s434, %s435
    %p446 = scmp.eq.s32.totalorder %s34, 0
    %p447 = por %p445, %p446
    %p448 = scmp.ne.s32.totalorder %s434, %s435
    %p449 = scmp.eq.s32.totalorder %s35, 3
    %p450 = por %p448, %p449
    %p452 = scmp.ne.s32.totalorder %s435, %s451
    %p453 = scmp.eq.s32.totalorder %s35, 0
    %p454 = por %p452, %p453
    %s455 = ssub.s32 %s37, %s44
    %p456 = scmp.eq.s32.totalorder %s455, 0
    %s458 = sadd.s32 %s457, 1
    %s459 = scalar_select %p456, %s457, %s458
    %p462 = pneg %p456
    %p463 = scmp.eq.s32.totalorder %s29, 3
    %p464 = por %p462, %p463
    %p465 = scmp.ne.s32.totalorder %s457, %s460
    %p466 = scmp.eq.s32.totalorder %s29, 0
    %p467 = por %p465, %p466
    %p468 = scmp.ne.s32.totalorder %s457, %s460
    %p469 = scmp.eq.s32.totalorder %s34, 3
    %p470 = por %p468, %p469
    %p471 = scmp.ne.s32.totalorder %s460, %s461
    %p472 = scmp.eq.s32.totalorder %s34, 0
    %p473 = por %p471, %p472
    %p474 = scmp.ne.s32.totalorder %s460, %s461
    %p475 = scmp.eq.s32.totalorder %s35, 3
    %p476 = por %p474, %p475
    %p478 = scmp.ne.s32.totalorder %s461, %s477
    %p479 = scmp.eq.s32.totalorder %s35, 0
    %p480 = por %p478, %p479
    %s481 = ssub.s32 %s37, %s44
    %p482 = scmp.eq.s32.totalorder %s481, 0
    %s484 = sadd.s32 %s483, 1
    %s485 = scalar_select %p482, %s483, %s484
    %p488 = pneg %p482
    %p489 = scmp.eq.s32.totalorder %s29, 3
    %p490 = por %p488, %p489
    %p491 = scmp.ne.s32.totalorder %s483, %s486
    %p492 = scmp.eq.s32.totalorder %s29, 0
    %p493 = por %p491, %p492
    %p494 = scmp.ne.s32.totalorder %s483, %s486
    %p495 = scmp.eq.s32.totalorder %s34, 3
    %p496 = por %p494, %p495
    %p497 = scmp.ne.s32.totalorder %s486, %s487
    %p498 = scmp.eq.s32.totalorder %s34, 0
    %p499 = por %p497, %p498
    %p500 = scmp.ne.s32.totalorder %s486, %s487
    %p501 = scmp.eq.s32.totalorder %s35, 3
    %p502 = por %p500, %p501
    %p504 = scmp.ne.s32.totalorder %s487, %s503
    %p505 = scmp.eq.s32.totalorder %s35, 0
    %p506 = por %p504, %p505
    %s507 = ssub.s32 %s37, %s44
    %p508 = scmp.eq.s32.totalorder %s507, 0
    %s510 = sadd.s32 %s509, 1
    %s511 = scalar_select %p508, %s509, %s510
    %p514 = pneg %p508
    %p515 = scmp.eq.s32.totalorder %s29, 3
    %p516 = por %p514, %p515
    %p517 = scmp.ne.s32.totalorder %s509, %s512
    %p518 = scmp.eq.s32.totalorder %s29, 0
    %p519 = por %p517, %p518
    %p520 = scmp.ne.s32.totalorder %s509, %s512
    %p521 = scmp.eq.s32.totalorder %s34, 3
    %p522 = por %p520, %p521
    %p523 = scmp.ne.s32.totalorder %s512, %s513
    %p524 = scmp.eq.s32.totalorder %s34, 0
    %p525 = por %p523, %p524
    %p526 = scmp.ne.s32.totalorder %s512, %s513
    %p527 = scmp.eq.s32.totalorder %s35, 3
    %p528 = por %p526, %p527
    %p530 = scmp.ne.s32.totalorder %s513, %s529
    %p531 = scmp.eq.s32.totalorder %s35, 0
    %p532 = por %p530, %p531
    %s534 = sadd.s32 %s533, 1
    %p537 = scmp.eq.s32.totalorder %s29, 3
    %p538 = scmp.ne.s32.totalorder %s533, %s535
    %p539 = scmp.eq.s32.totalorder %s29, 0
    %p540 = por %p538, %p539
    %p541 = scmp.ne.s32.totalorder %s533, %s535
    %p542 = scmp.eq.s32.totalorder %s34, 3
    %p543 = por %p541, %p542
    %p544 = scmp.ne.s32.totalorder %s535, %s536
    %p545 = scmp.eq.s32.totalorder %s34, 0
    %p546 = por %p544, %p545
    %p547 = scmp.ne.s32.totalorder %s535, %s536
    %p548 = scmp.eq.s32.totalorder %s35, 3
    %p549 = por %p547, %p548
    %p551 = scmp.ne.s32.totalorder %s536, %s550
    %p552 = scmp.eq.s32.totalorder %s35, 0
    %p553 = por %p551, %p552
    %s555 = sadd.s32 %s554, 1
    %p558 = scmp.eq.s32.totalorder %s29, 3
    %p559 = scmp.ne.s32.totalorder %s554, %s556
    %p560 = scmp.eq.s32.totalorder %s29, 0
    %p561 = por %p559, %p560
    %p562 = scmp.ne.s32.totalorder %s554, %s556
    %p563 = scmp.eq.s32.totalorder %s34, 3
    %p564 = por %p562, %p563
    %p565 = scmp.ne.s32.totalorder %s556, %s557
    %p566 = scmp.eq.s32.totalorder %s34, 0
    %p567 = por %p565, %p566
    %p568 = scmp.ne.s32.totalorder %s556, %s557
    %p569 = scmp.eq.s32.totalorder %s35, 3
    %p570 = por %p568, %p569
    %p572 = scmp.ne.s32.totalorder %s557, %s571
    %p573 = scmp.eq.s32.totalorder %s35, 0
    %p574 = por %p572, %p573
    %s576 = sadd.s32 %s575, 1
    %p579 = scmp.eq.s32.totalorder %s29, 3
    %p580 = scmp.ne.s32.totalorder %s575, %s577
    %p581 = scmp.eq.s32.totalorder %s29, 0
    %p582 = por %p580, %p581
    %p583 = scmp.ne.s32.totalorder %s575, %s577
    %p584 = scmp.eq.s32.totalorder %s34, 3
    %p585 = por %p583, %p584
    %p586 = scmp.ne.s32.totalorder %s577, %s578
    %p587 = scmp.eq.s32.totalorder %s34, 0
    %p588 = por %p586, %p587
    %p589 = scmp.ne.s32.totalorder %s577, %s578
    %p590 = scmp.eq.s32.totalorder %s35, 3
    %p591 = por %p589, %p590
    %p593 = scmp.ne.s32.totalorder %s578, %s592
    %p594 = scmp.eq.s32.totalorder %s35, 0
    %p595 = por %p593, %p594
    %s597 = sadd.s32 %s596, 1
    %p600 = scmp.eq.s32.totalorder %s29, 3
    %p601 = scmp.ne.s32.totalorder %s596, %s598
    %p602 = scmp.eq.s32.totalorder %s29, 0
    %p603 = por %p601, %p602
    %p604 = scmp.ne.s32.totalorder %s596, %s598
    %p605 = scmp.eq.s32.totalorder %s34, 3
    %p606 = por %p604, %p605
    %p607 = scmp.ne.s32.totalorder %s598, %s599
    %p608 = scmp.eq.s32.totalorder %s34, 0
    %p609 = por %p607, %p608
    %p610 = scmp.ne.s32.totalorder %s598, %s599
    %p611 = scmp.eq.s32.totalorder %s35, 3
    %p612 = por %p610, %p611
    %p614 = scmp.ne.s32.totalorder %s599, %s613
    %p615 = scmp.eq.s32.totalorder %s35, 0
    %p616 = por %p614, %p615
    %s617 = ssub.s32 %s36, %s48
    %p618 = scmp.eq.s32.totalorder %s617, 0
    %s620 = sadd.s32 %s619, 1
    %s621 = scalar_select %p618, %s619, %s620
    %p624 = pneg %p618
    %p625 = scmp.eq.s32.totalorder %s29, 3
    %p626 = por %p624, %p625
    %p627 = scmp.ne.s32.totalorder %s619, %s622
    %p628 = scmp.eq.s32.totalorder %s29, 0
    %p629 = por %p627, %p628
    %p630 = scmp.ne.s32.totalorder %s619, %s622
    %p631 = scmp.eq.s32.totalorder %s34, 3
    %p632 = por %p630, %p631
    %p633 = scmp.ne.s32.totalorder %s622, %s623
    %p634 = scmp.eq.s32.totalorder %s34, 0
    %p635 = por %p633, %p634
    %p636 = scmp.ne.s32.totalorder %s622, %s623
    %p637 = scmp.eq.s32.totalorder %s35, 3
    %p638 = por %p636, %p637
    %p640 = scmp.ne.s32.totalorder %s623, %s639
    %p641 = scmp.eq.s32.totalorder %s35, 0
    %p642 = por %p640, %p641
    %p643 = scmp.le.s32.totalorder 1, %s29
    %p644 = scmp.lt.s32.totalorder %s29, 5
    %p645 = pnand %p643, %p644
    %p646 = pneg %p645
    // Predicated region
    $region9: #{bert_inspired_forward.1} parent=5 // pred_check
      _
    $region10: #{bert_inspired_forward.1} parent=5 // pred_check_branch
      %648 = sbr.rel (%p645) target = $region12
    $region11: #{bert_inspired_forward.1} parent=5 // pred_region
      %s649 = ssub.s32 %s29, 1
      // Predicated region
      $region13: #{bert_inspired_forward.1} parent=11 // pred_check
        %p650 = pneg %p88
      $region14: #{bert_inspired_forward.1} parent=11 // pred_check_branch
        %652 = sbr.rel (%p650) target = $region16
      $region15: #{bert_inspired_forward.1} parent=11 // pred_region
        _
      $region16: #{bert_inspired_forward.1} parent=11 // pred_fallthru
        _
      // Predicated region
      $region17: #{bert_inspired_forward.1} parent=11 // pred_check
        %p653 = pneg %p109
      $region18: #{bert_inspired_forward.1} parent=11 // pred_check_branch
        %655 = sbr.rel (%p653) target = $region20
      $region19: #{bert_inspired_forward.1} parent=11 // pred_region
        _
      $region20: #{bert_inspired_forward.1} parent=11 // pred_fallthru
        _
      // Predicated region
      $region21: #{bert_inspired_forward.1} parent=11 // pred_check
        %p656 = pneg %p546
      $region22: #{bert_inspired_forward.1} parent=11 // pred_check_branch
        %658 = sbr.rel (%p656) target = $region24
      $region23: #{bert_inspired_forward.1} parent=11 // pred_region
        _
      $region24: #{bert_inspired_forward.1} parent=11 // pred_fallthru
        _
      // Predicated region
      $region25: #{bert_inspired_forward.1} parent=11 // pred_check
        %p659 = pneg %p567
      $region26: #{bert_inspired_forward.1} parent=11 // pred_check_branch
        %661 = sbr.rel (%p659) target = $region28
      $region27: #{bert_inspired_forward.1} parent=11 // pred_region
        _
      $region28: #{bert_inspired_forward.1} parent=11 // pred_fallthru
        _
      // Predicated region
      $region29: #{bert_inspired_forward.1} parent=11 // pred_check
        %p662 = pneg %p588
      $region30: #{bert_inspired_forward.1} parent=11 // pred_check_branch
        %664 = sbr.rel (%p662) target = $region32
      $region31: #{bert_inspired_forward.1} parent=11 // pred_region
        _
      $region32: #{bert_inspired_forward.1} parent=11 // pred_fallthru
        _
      // Predicated region
      $region33: #{bert_inspired_forward.1} parent=11 // pred_check
        %p665 = pneg %p609
      $region34: #{bert_inspired_forward.1} parent=11 // pred_check_branch
        %667 = sbr.rel (%p665) target = $region36
      $region35: #{bert_inspired_forward.1} parent=11 // pred_region
        _
      $region36: #{bert_inspired_forward.1} parent=11 // pred_fallthru
        _
    $region12: #{bert_inspired_forward.1} parent=5 // pred_fallthru
      _
    %p668 = scmp.lt.s32.totalorder %s29, 4
    // Predicated region
    $region37: #{bert_inspired_forward.1} parent=5 // pred_check
      %p669 = pneg %p668
    $region38: #{bert_inspired_forward.1} parent=5 // pred_check_branch
      %671 = sbr.rel (%p669) target = $region40
    $region39: #{bert_inspired_forward.1} parent=5 // pred_region
      // Predicated region
      $region41: #{bert_inspired_forward.1} parent=39 // pred_check
        %p672 = pneg %p61
      $region42: #{bert_inspired_forward.1} parent=39 // pred_check_branch
        %674 = sbr.rel (%p672) target = $region44
      $region43: #{bert_inspired_forward.1} parent=39 // pred_region
        %p675 = scmp.lt.s32.totalorder %s36, 1
        %s676 = scalar_select %p675, %s36, 1
        %s677 = smul.addr %s676, 8
        %s678 = scalar_lea.vmem %s0, %s677
      $region44: #{bert_inspired_forward.1} parent=39 // pred_fallthru
        _
      // Predicated region
      $region45: #{bert_inspired_forward.1} parent=39 // pred_check
        %p679 = pneg %p129
      $region46: #{bert_inspired_forward.1} parent=39 // pred_check_branch
        %681 = sbr.rel (%p679) target = $region48
      $region47: #{bert_inspired_forward.1} parent=39 // pred_region
        %p682 = scmp.lt.s32.totalorder %s37, 1
        %s683 = scalar_select %p682, %s37, 1
        %s684 = smul.addr %s683, 16
        %s685 = smul.addr %s684, 4
        %s686 = scalar_lea.vmem %s3, %s685
      $region48: #{bert_inspired_forward.1} parent=39 // pred_fallthru
        _
      // Predicated region
      $region49: #{bert_inspired_forward.1} parent=39 // pred_check
        %p687 = pneg %p155
      $region50: #{bert_inspired_forward.1} parent=39 // pred_check_branch
        %689 = sbr.rel (%p687) target = $region52
      $region51: #{bert_inspired_forward.1} parent=39 // pred_region
        %p690 = scmp.lt.s32.totalorder %s37, 1
        %s691 = scalar_select %p690, %s37, 1
        %s692 = smul.addr %s691, 4
        %s693 = scalar_lea.vmem %s4, %s692
      $region52: #{bert_inspired_forward.1} parent=39 // pred_fallthru
        _
      // Predicated region
      $region53: #{bert_inspired_forward.1} parent=39 // pred_check
        %p694 = pneg %p181
      $region54: #{bert_inspired_forward.1} parent=39 // pred_check_branch
        %696 = sbr.rel (%p694) target = $region56
      $region55: #{bert_inspired_forward.1} parent=39 // pred_region
        %p697 = scmp.lt.s32.totalorder %s37, 1
        %s698 = scalar_select %p697, %s37, 1
        %s699 = smul.addr %s698, 16
        %s700 = smul.addr %s699, 4
        %s701 = scalar_lea.vmem %s5, %s700
      $region56: #{bert_inspired_forward.1} parent=39 // pred_fallthru
        _
      // Predicated region
      $region57: #{bert_inspired_forward.1} parent=39 // pred_check
        %p702 = pneg %p207
      $region58: #{bert_inspired_forward.1} parent=39 // pred_check_branch
        %704 = sbr.rel (%p702) target = $region60
      $region59: #{bert_inspired_forward.1} parent=39 // pred_region
        %p705 = scmp.lt.s32.totalorder %s37, 1
        %s706 = scalar_select %p705, %s37, 1
        %s707 = smul.addr %s706, 4
        %s708 = scalar_lea.vmem %s6, %s707
      $region60: #{bert_inspired_forward.1} parent=39 // pred_fallthru
        _
      // Predicated region
      $region61: #{bert_inspired_forward.1} parent=39 // pred_check
        %p709 = pneg %p233
      $region62: #{bert_inspired_forward.1} parent=39 // pred_check_branch
        %711 = sbr.rel (%p709) target = $region64
      $region63: #{bert_inspired_forward.1} parent=39 // pred_region
        %p712 = scmp.lt.s32.totalorder %s37, 1
        %s713 = scalar_select %p712, %s37, 1
        %s714 = smul.addr %s713, 16
        %s715 = smul.addr %s714, 4
        %s716 = scalar_lea.vmem %s7, %s715
      $region64: #{bert_inspired_forward.1} parent=39 // pred_fallthru
        _
      // Predicated region
      $region65: #{bert_inspired_forward.1} parent=39 // pred_check
        %p717 = pneg %p259
      $region66: #{bert_inspired_forward.1} parent=39 // pred_check_branch
        %719 = sbr.rel (%p717) target = $region68
      $region67: #{bert_inspired_forward.1} parent=39 // pred_region
        %p720 = scmp.lt.s32.totalorder %s37, 1
        %s721 = scalar_select %p720, %s37, 1
        %s722 = smul.addr %s721, 4
        %s723 = scalar_lea.vmem %s8, %s722
      $region68: #{bert_inspired_forward.1} parent=39 // pred_fallthru
        _
      // Predicated region
      $region69: #{bert_inspired_forward.1} parent=39 // pred_check
        %p724 = pneg %p285
      $region70: #{bert_inspired_forward.1} parent=39 // pred_check_branch
        %726 = sbr.rel (%p724) target = $region72
      $region71: #{bert_inspired_forward.1} parent=39 // pred_region
        %p727 = scmp.lt.s32.totalorder %s37, 1
        %s728 = scalar_select %p727, %s37, 1
        %s729 = smul.addr %s728, 4
        %s730 = smul.addr %s729, 4
        %s731 = scalar_lea.vmem %s9, %s730
      $region72: #{bert_inspired_forward.1} parent=39 // pred_fallthru
        _
      // Predicated region
      $region73: #{bert_inspired_forward.1} parent=39 // pred_check
        %p732 = pneg %p311
      $region74: #{bert_inspired_forward.1} parent=39 // pred_check_branch
        %734 = sbr.rel (%p732) target = $region76
      $region75: #{bert_inspired_forward.1} parent=39 // pred_region
        %p735 = scmp.lt.s32.totalorder %s37, 1
        %s736 = scalar_select %p735, %s37, 1
        %s737 = scalar_lea.vmem %s10, %s736
      $region76: #{bert_inspired_forward.1} parent=39 // pred_fallthru
        _
      // Predicated region
      $region77: #{bert_inspired_forward.1} parent=39 // pred_check
        %p738 = pneg %p337
      $region78: #{bert_inspired_forward.1} parent=39 // pred_check_branch
        %740 = sbr.rel (%p738) target = $region80
      $region79: #{bert_inspired_forward.1} parent=39 // pred_region
        %p741 = scmp.lt.s32.totalorder %s37, 1
        %s742 = scalar_select %p741, %s37, 1
        %s743 = smul.addr %s742, 4
        %s744 = smul.addr %s743, 4
        %s745 = scalar_lea.vmem %s11, %s744
      $region80: #{bert_inspired_forward.1} parent=39 // pred_fallthru
        _
      // Predicated region
      $region81: #{bert_inspired_forward.1} parent=39 // pred_check
        %p746 = pneg %p363
      $region82: #{bert_inspired_forward.1} parent=39 // pred_check_branch
        %748 = sbr.rel (%p746) target = $region84
      $region83: #{bert_inspired_forward.1} parent=39 // pred_region
        %p749 = scmp.lt.s32.totalorder %s37, 1
        %s750 = scalar_select %p749, %s37, 1
        %s751 = scalar_lea.vmem %s12, %s750
      $region84: #{bert_inspired_forward.1} parent=39 // pred_fallthru
        _
      // Predicated region
      $region85: #{bert_inspired_forward.1} parent=39 // pred_check
        %p752 = pneg %p389
      $region86: #{bert_inspired_forward.1} parent=39 // pred_check_branch
        %754 = sbr.rel (%p752) target = $region88
      $region87: #{bert_inspired_forward.1} parent=39 // pred_region
        %p755 = scmp.lt.s32.totalorder %s37, 1
        %s756 = scalar_select %p755, %s37, 1
        %s757 = smul.addr %s756, 8
        %s758 = smul.addr %s757, 4
        %s759 = scalar_lea.vmem %s13, %s758
      $region88: #{bert_inspired_forward.1} parent=39 // pred_fallthru
        _
      // Predicated region
      $region89: #{bert_inspired_forward.1} parent=39 // pred_check
        %p760 = pneg %p415
      $region90: #{bert_inspired_forward.1} parent=39 // pred_check_branch
        %762 = sbr.rel (%p760) target = $region92
      $region91: #{bert_inspired_forward.1} parent=39 // pred_region
        %p763 = scmp.lt.s32.totalorder %s37, 1
        %s764 = scalar_select %p763, %s37, 1
        %s765 = scalar_lea.vmem %s14, %s764
      $region92: #{bert_inspired_forward.1} parent=39 // pred_fallthru
        _
      // Predicated region
      $region93: #{bert_inspired_forward.1} parent=39 // pred_check
        %p766 = pneg %p441
      $region94: #{bert_inspired_forward.1} parent=39 // pred_check_branch
        %768 = sbr.rel (%p766) target = $region96
      $region95: #{bert_inspired_forward.1} parent=39 // pred_region
        %p769 = scmp.lt.s32.totalorder %s37, 1
        %s770 = scalar_select %p769, %s37, 1
        %s771 = scalar_lea.vmem %s15, %s770
      $region96: #{bert_inspired_forward.1} parent=39 // pred_fallthru
        _
      // Predicated region
      $region97: #{bert_inspired_forward.1} parent=39 // pred_check
        %p772 = pneg %p467
      $region98: #{bert_inspired_forward.1} parent=39 // pred_check_branch
        %774 = sbr.rel (%p772) target = $region100
      $region99: #{bert_inspired_forward.1} parent=39 // pred_region
        %p775 = scmp.lt.s32.totalorder %s37, 1
        %s776 = scalar_select %p775, %s37, 1
        %s777 = scalar_lea.vmem %s16, %s776
      $region100: #{bert_inspired_forward.1} parent=39 // pred_fallthru
        _
      // Predicated region
      $region101: #{bert_inspired_forward.1} parent=39 // pred_check
        %p778 = pneg %p493
      $region102: #{bert_inspired_forward.1} parent=39 // pred_check_branch
        %780 = sbr.rel (%p778) target = $region104
      $region103: #{bert_inspired_forward.1} parent=39 // pred_region
        %p781 = scmp.lt.s32.totalorder %s37, 1
        %s782 = scalar_select %p781, %s37, 1
        %s783 = scalar_lea.vmem %s17, %s782
      $region104: #{bert_inspired_forward.1} parent=39 // pred_fallthru
        _
      // Predicated region
      $region105: #{bert_inspired_forward.1} parent=39 // pred_check
        %p784 = pneg %p519
      $region106: #{bert_inspired_forward.1} parent=39 // pred_check_branch
        %786 = sbr.rel (%p784) target = $region108
      $region107: #{bert_inspired_forward.1} parent=39 // pred_region
        %p787 = scmp.lt.s32.totalorder %s37, 1
        %s788 = scalar_select %p787, %s37, 1
        %s789 = scalar_lea.vmem %s18, %s788
      $region108: #{bert_inspired_forward.1} parent=39 // pred_fallthru
        _
    $region40: #{bert_inspired_forward.1} parent=5 // pred_fallthru
      _
    %p790 = scmp.le.s32.totalorder 1, %s29
    %p791 = scmp.lt.s32.totalorder %s29, 5
    %p792 = pnand %p790, %p791
    %p793 = pneg %p792
    // Predicated region
    $region109: #{bert_inspired_forward.1} parent=5 // pred_check
      _
    $region110: #{bert_inspired_forward.1} parent=5 // pred_check_branch
      %795 = sbr.rel (%p792) target = $region112
    $region111: #{bert_inspired_forward.1} parent=5 // pred_region
      %s796 = ssub.s32 %s29, 1
      %p797 = scmp.lt.s32.totalorder %s38, 1
      %s798 = scalar_select %p797, %s38, 1
      %s799 = smul.addr %s798, 8
      %s800 = scalar_lea.vmem %s0, %s799
      %p801 = pneg %p67
      %p802 = pneg %p64
      %p803 = pneg %p88
      %p804 = pneg %p85
      %p805 = pneg %p109
      %p806 = pneg %p106
      %p807 = scmp.lt.s32.totalorder %s39, 1
      %s808 = scalar_select %p807, %s39, 1
      %s809 = smul.addr %s808, 16
      %s810 = smul.addr %s809, 4
      %s811 = scalar_lea.vmem %s3, %s810
      %p812 = pneg %p135
      %p813 = pneg %p132
      %p814 = scmp.lt.s32.totalorder %s39, 1
      %s815 = scalar_select %p814, %s39, 1
      %s816 = smul.addr %s815, 4
      %s817 = scalar_lea.vmem %s4, %s816
      %p818 = pneg %p161
      %p819 = pneg %p158
      %p820 = scmp.lt.s32.totalorder %s39, 1
      %s821 = scalar_select %p820, %s39, 1
      %s822 = smul.addr %s821, 16
      %s823 = smul.addr %s822, 4
      %s824 = scalar_lea.vmem %s5, %s823
      %p825 = pneg %p187
      %p826 = pneg %p184
      %p827 = scmp.lt.s32.totalorder %s39, 1
      %s828 = scalar_select %p827, %s39, 1
      %s829 = smul.addr %s828, 4
      %s830 = scalar_lea.vmem %s6, %s829
      %p831 = pneg %p213
      %p832 = pneg %p210
      %p833 = scmp.lt.s32.totalorder %s39, 1
      %s834 = scalar_select %p833, %s39, 1
      %s835 = smul.addr %s834, 16
      %s836 = smul.addr %s835, 4
      %s837 = scalar_lea.vmem %s7, %s836
      %p838 = pneg %p239
      %p839 = pneg %p236
      %p840 = scmp.lt.s32.totalorder %s39, 1
      %s841 = scalar_select %p840, %s39, 1
      %s842 = smul.addr %s841, 4
      %s843 = scalar_lea.vmem %s8, %s842
      %p844 = pneg %p265
      %p845 = pneg %p262
      %p846 = scmp.lt.s32.totalorder %s39, 1
      %s847 = scalar_select %p846, %s39, 1
      %s848 = smul.addr %s847, 4
      %s849 = smul.addr %s848, 4
      %s850 = scalar_lea.vmem %s9, %s849
      %p851 = pneg %p291
      %p852 = pneg %p288
      %p853 = scmp.lt.s32.totalorder %s39, 1
      %s854 = scalar_select %p853, %s39, 1
      %s855 = scalar_lea.vmem %s10, %s854
      %p856 = pneg %p317
      %p857 = pneg %p314
      %p858 = scmp.lt.s32.totalorder %s39, 1
      %s859 = scalar_select %p858, %s39, 1
      %s860 = smul.addr %s859, 4
      %s861 = smul.addr %s860, 4
      %s862 = scalar_lea.vmem %s11, %s861
      %p863 = pneg %p343
      %p864 = pneg %p340
      %p865 = scmp.lt.s32.totalorder %s39, 1
      %s866 = scalar_select %p865, %s39, 1
      %s867 = scalar_lea.vmem %s12, %s866
      %p868 = pneg %p369
      %p869 = pneg %p366
      %p870 = scmp.lt.s32.totalorder %s39, 1
      %s871 = scalar_select %p870, %s39, 1
      %s872 = smul.addr %s871, 8
      %s873 = smul.addr %s872, 4
      %s874 = scalar_lea.vmem %s13, %s873
      %p875 = pneg %p395
      %p876 = pneg %p392
      %p877 = scmp.lt.s32.totalorder %s39, 1
      %s878 = scalar_select %p877, %s39, 1
      %s879 = scalar_lea.vmem %s14, %s878
      %p880 = pneg %p421
      %p881 = pneg %p418
      %p882 = scmp.lt.s32.totalorder %s39, 1
      %s883 = scalar_select %p882, %s39, 1
      %s884 = scalar_lea.vmem %s15, %s883
      %p885 = pneg %p447
      %p886 = pneg %p444
      %p887 = scmp.lt.s32.totalorder %s39, 1
      %s888 = scalar_select %p887, %s39, 1
      %s889 = scalar_lea.vmem %s16, %s888
      %p890 = pneg %p473
      %p891 = pneg %p470
      %p892 = scmp.lt.s32.totalorder %s39, 1
      %s893 = scalar_select %p892, %s39, 1
      %s894 = scalar_lea.vmem %s17, %s893
      %p895 = pneg %p499
      %p896 = pneg %p496
      %p897 = scmp.lt.s32.totalorder %s39, 1
      %s898 = scalar_select %p897, %s39, 1
      %s899 = scalar_lea.vmem %s18, %s898
      %p900 = pneg %p525
      %p901 = pneg %p522
      %p902 = pneg %p546
      %p903 = pneg %p543
      %p904 = pneg %p567
      %p905 = pneg %p564
      %p906 = pneg %p588
      %p907 = pneg %p585
      %p908 = pneg %p609
      %p909 = pneg %p606
      %p910 = pneg %p635
      %p911 = pneg %p632
      %p912 = scmp.lt.s32.totalorder %s38, 1
      %s913 = scalar_select %p912, %s38, 1
      %s914 = smul.addr %s913, 8
      %s915 = scalar_lea.vmem %s23, %s914
      %p916 = scmp.lt.s32.totalorder %s38, 1
      %s917 = scalar_select %p916, %s38, 1
      %s918 = smul.addr %s917, 8
      %s919 = scalar_lea.vmem %s0, %s918
      %p920 = scmp.lt.s32.totalorder %s39, 1
      %s921 = scalar_select %p920, %s39, 1
      %s922 = smul.addr %s921, 16
      %s923 = smul.addr %s922, 4
      %s924 = scalar_lea.vmem %s3, %s923
      %p925 = scmp.lt.s32.totalorder %s39, 1
      %s926 = scalar_select %p925, %s39, 1
      %s927 = smul.addr %s926, 4
      %s928 = scalar_lea.vmem %s4, %s927
      %p929 = scmp.lt.s32.totalorder %s39, 1
      %s930 = scalar_select %p929, %s39, 1
      %s931 = smul.addr %s930, 16
      %s932 = smul.addr %s931, 4
      %s933 = scalar_lea.vmem %s5, %s932
      %p934 = scmp.lt.s32.totalorder %s39, 1
      %s935 = scalar_select %p934, %s39, 1
      %s936 = smul.addr %s935, 4
      %s937 = scalar_lea.vmem %s6, %s936
      %p938 = scmp.lt.s32.totalorder %s39, 1
      %s939 = scalar_select %p938, %s39, 1
      %s940 = smul.addr %s939, 16
      %s941 = smul.addr %s940, 4
      %s942 = scalar_lea.vmem %s7, %s941
      %p943 = scmp.lt.s32.totalorder %s39, 1
      %s944 = scalar_select %p943, %s39, 1
      %s945 = smul.addr %s944, 4
      %s946 = scalar_lea.vmem %s8, %s945
      %p947 = scmp.lt.s32.totalorder %s39, 1
      %s948 = scalar_select %p947, %s39, 1
      %s949 = smul.addr %s948, 4
      %s950 = smul.addr %s949, 4
      %s951 = scalar_lea.vmem %s9, %s950
      %p952 = scmp.lt.s32.totalorder %s39, 1
      %s953 = scalar_select %p952, %s39, 1
      %s954 = scalar_lea.vmem %s10, %s953
      %p955 = scmp.lt.s32.totalorder %s39, 1
      %s956 = scalar_select %p955, %s39, 1
      %s957 = smul.addr %s956, 4
      %s958 = smul.addr %s957, 4
      %s959 = scalar_lea.vmem %s11, %s958
      %p960 = scmp.lt.s32.totalorder %s39, 1
      %s961 = scalar_select %p960, %s39, 1
      %s962 = scalar_lea.vmem %s12, %s961
      %p963 = scmp.lt.s32.totalorder %s39, 1
      %s964 = scalar_select %p963, %s39, 1
      %s965 = smul.addr %s964, 8
      %s966 = smul.addr %s965, 4
      %s967 = scalar_lea.vmem %s13, %s966
      %p968 = scmp.lt.s32.totalorder %s39, 1
      %s969 = scalar_select %p968, %s39, 1
      %s970 = scalar_lea.vmem %s14, %s969
      %p971 = scmp.lt.s32.totalorder %s39, 1
      %s972 = scalar_select %p971, %s39, 1
      %s973 = scalar_lea.vmem %s15, %s972
      %p974 = scmp.lt.s32.totalorder %s39, 1
      %s975 = scalar_select %p974, %s39, 1
      %s976 = scalar_lea.vmem %s16, %s975
      %p977 = scmp.lt.s32.totalorder %s39, 1
      %s978 = scalar_select %p977, %s39, 1
      %s979 = scalar_lea.vmem %s17, %s978
      %p980 = scmp.lt.s32.totalorder %s39, 1
      %s981 = scalar_select %p980, %s39, 1
      %s982 = scalar_lea.vmem %s18, %s981
      %p983 = scmp.lt.s32.totalorder %s38, 1
      %s984 = scalar_select %p983, %s38, 1
      %s985 = smul.addr %s984, 8
      %s986 = scalar_lea.vmem %s23, %s985
      %p988 = scmp.eq.s32.totalorder %s39, 0
      // Predicated region
      $region113: #{bert_inspired_forward.1} parent=111 // pred_check
        %p989 = pneg %p988
      $region114: #{bert_inspired_forward.1} parent=111 // pred_check_branch
        %991 = sbr.rel (%p989) target = $region116
      $region115: #{bert_inspired_forward.1} parent=111 // pred_region
        %v992 = vld [vmem:[%s919] sm:$0xff]
        %v993 = vpack.c.bf16 %v992, %v992
        %v994 = vld [vmem:[%s1] sm:$0xf]
        %v995 = vld [vmem:[%s1 + $0x4] sm:$0xf]
        %v996 = vld [vmem:[%s1 + $0x8] sm:$0xf]
        %v997 = vld [vmem:[%s1 + $0xc] sm:$0xf]
        %v998 = vld [vmem:[%s1 + $0x10] sm:$0xf]
        %v999 = vld [vmem:[%s1 + $0x14] sm:$0xf]
        %v1000 = vld [vmem:[%s2] sm:$0xff]
        %v1007 = vunpack.c.l.b16 %v994
        %v1008 = vunpack.c.l.b16 %v995
        %v1009 = vunpack.c.l.b16 %v996
        %v1010 = vunpack.c.l.b16 %v997
        %v1011 = vunpack.c.l.b16 %v998
        %v1012 = vunpack.c.l.b16 %v999
        %v1013 = vpack.c.b16 %v1008, %v1007
        %v1014 = vpack.c.b16 %v1010, %v1009
        %v1015 = vpack.c.b16 %v1012, %v1011
        %vm1019 = vcmask 392192
        %v1021 = vsel %vm1019, %v993, 0
        %1023 = vmatprep.subr.bf16.mxu0 0
        %1024 = vmatpush1.bf16.msra.mxu0 0
        %1025 = vmatprep.subr.bf16.mxu0 0
        %1026 = vmatpush1.bf16.msra.mxu0 0
        %1027 = vmatprep.subr.bf16.mxu0 0
        %1028 = vmatpush1.bf16.msra.mxu0 0
        %1029 = vmatprep.subr.bf16.mxu0 0
        %1030 = vmatpush1.bf16.msra.mxu0 0
        %1031 = vmatprep.subr.bf16.mxu0 0
        %1032 = vmatpush1.bf16.msra.mxu0 0
        %1033 = vmatprep.subr.bf16.mxu0 0
        %1034 = vmatpush1.bf16.msra.mxu0 %v1015
        %1035 = vmatprep.subr.bf16.mxu0 0
        %1036 = vmatpush1.bf16.msra.mxu0 %v1014
        %1037 = vmatprep.subr.bf16.mxu0 0
        %1038 = vmatpush1.bf16.msra.mxu0 %v1013
        %1039 = vmatprep.subr.bf16.mxu0 0
        %1040 = vmatpush2.bf16.msra.mxu0 0
        %1041 = vmatprep.subr.bf16.mxu0 0
        %1042 = vmatpush2.bf16.msra.mxu0 0
        %1043 = vmatprep.subr.bf16.mxu0 0
        %1044 = vmatpush2.bf16.msra.mxu0 0
        %1045 = vmatprep.subr.bf16.mxu0 0
        %1046 = vmatpush2.bf16.msra.mxu0 0
        %1047 = vmatprep.subr.bf16.mxu0 0
        %1048 = vmatpush2.bf16.msra.mxu0 0
        %1049 = vmatprep.subr.bf16.mxu0 0
        %1050 = vmatpush2.bf16.msra.mxu0 0
        %1051 = vmatprep.subr.bf16.mxu0 0
        %1052 = vmatpush2.bf16.msra.mxu0 0
        %1053 = vmatprep.subr.bf16.mxu0 0
        %1054 = vmatpush2.bf16.msra.mxu0 0
        %1055 = vmatprep.mubr.bf16.mxu0 0
        %1056 = vmatmul.mubr.bf16.gmra.mxu0 %v1021
        %v1057 = vpop.f32.mrf.mxu0
        %v1058 = vadd.f32 %v1000, %v1057
        %v1059 = vpop.f32.mrf.mxu0
        %v1060 = vpop.f32.mrf.mxu0
        %v1061 = vpop.f32.mrf.mxu0
        %1062 = vdwg.mxu0
        %vm1063 = vcmask 261120
        %1064 = vst.msk [vmem:[#allocation2] sm:$0xff] %vm1063, %v1058
      $region116: #{bert_inspired_forward.1} parent=111 // pred_fallthru
        _
      %v1065 = vld [vmem:[#allocation2] sm:$0xff]
      %v1066 = vpack.c.bf16 %v1065, %v1065
      %v1067 = vld [vmem:[%s924] sm:$0xf]
      %v1068 = vld [vmem:[%s924 + $0x4] sm:$0xf]
      %v1069 = vld [vmem:[%s924 + $0x8] sm:$0xf]
      %v1070 = vld [vmem:[%s924 + $0xc] sm:$0xf]
      %v1071 = vld [vmem:[%s924 + $0x10] sm:$0xf]
      %v1072 = vld [vmem:[%s924 + $0x14] sm:$0xf]
      %v1073 = vld [vmem:[%s924 + $0x18] sm:$0xf]
      %v1074 = vld [vmem:[%s924 + $0x1c] sm:$0xf]
      %v1075 = vld [vmem:[%s924 + $0x20] sm:$0xf]
      %v1076 = vld [vmem:[%s924 + $0x24] sm:$0xf]
      %v1077 = vld [vmem:[%s924 + $0x28] sm:$0xf]
      %v1078 = vld [vmem:[%s924 + $0x2c] sm:$0xf]
      %v1079 = vld [vmem:[%s924 + $0x30] sm:$0xf]
      %v1080 = vld [vmem:[%s924 + $0x34] sm:$0xf]
      %v1081 = vld [vmem:[%s924 + $0x38] sm:$0xf]
      %v1082 = vld [vmem:[%s924 + $0x3c] sm:$0xf]
      %v1083 = vld [vmem:[%s933] sm:$0xf]
      %v1084 = vld [vmem:[%s933 + $0x4] sm:$0xf]
      %v1085 = vld [vmem:[%s933 + $0x8] sm:$0xf]
      %v1086 = vld [vmem:[%s933 + $0xc] sm:$0xf]
      %v1087 = vld [vmem:[%s933 + $0x10] sm:$0xf]
      %v1088 = vld [vmem:[%s933 + $0x14] sm:$0xf]
      %v1089 = vld [vmem:[%s933 + $0x18] sm:$0xf]
      %v1090 = vld [vmem:[%s933 + $0x1c] sm:$0xf]
      %v1091 = vld [vmem:[%s933 + $0x20] sm:$0xf]
      %v1092 = vld [vmem:[%s933 + $0x24] sm:$0xf]
      %v1093 = vld [vmem:[%s933 + $0x28] sm:$0xf]
      %v1094 = vld [vmem:[%s933 + $0x2c] sm:$0xf]
      %v1095 = vld [vmem:[%s933 + $0x30] sm:$0xf]
      %v1096 = vld [vmem:[%s933 + $0x34] sm:$0xf]
      %v1097 = vld [vmem:[%s933 + $0x38] sm:$0xf]
      %v1098 = vld [vmem:[%s933 + $0x3c] sm:$0xf]
      %v1099 = vld [vmem:[%s942] sm:$0xf]
      %v1100 = vld [vmem:[%s942 + $0x4] sm:$0xf]
      %v1101 = vld [vmem:[%s942 + $0x8] sm:$0xf]
      %v1102 = vld [vmem:[%s942 + $0xc] sm:$0xf]
      %v1103 = vld [vmem:[%s942 + $0x10] sm:$0xf]
      %v1104 = vld [vmem:[%s942 + $0x14] sm:$0xf]
      %v1105 = vld [vmem:[%s942 + $0x18] sm:$0xf]
      %v1106 = vld [vmem:[%s942 + $0x1c] sm:$0xf]
      %v1107 = vld [vmem:[%s942 + $0x20] sm:$0xf]
      %v1108 = vld [vmem:[%s942 + $0x24] sm:$0xf]
      %v1109 = vld [vmem:[%s942 + $0x28] sm:$0xf]
      %v1110 = vld [vmem:[%s942 + $0x2c] sm:$0xf]
      %v1111 = vld [vmem:[%s942 + $0x30] sm:$0xf]
      %v1112 = vld [vmem:[%s942 + $0x34] sm:$0xf]
      %v1113 = vld [vmem:[%s942 + $0x38] sm:$0xf]
      %v1114 = vld [vmem:[%s942 + $0x3c] sm:$0xf]
      %v1115 = vld [vmem:[%s928] sm:$0x1]
      %v1116 = vld [vmem:[%s928 + $0x1] sm:$0x1]
      %v1117 = vld [vmem:[%s928 + $0x2] sm:$0x1]
      %v1118 = vld [vmem:[%s928 + $0x3] sm:$0x1]
      %v1119 = vld [vmem:[%s937] sm:$0x1]
      %v1120 = vld [vmem:[%s937 + $0x1] sm:$0x1]
      %v1121 = vld [vmem:[%s937 + $0x2] sm:$0x1]
      %v1122 = vld [vmem:[%s937 + $0x3] sm:$0x1]
      %v1123 = vld [vmem:[%s946] sm:$0x1]
      %v1124 = vld [vmem:[%s946 + $0x1] sm:$0x1]
      %v1125 = vld [vmem:[%s946 + $0x2] sm:$0x1]
      %v1126 = vld [vmem:[%s946 + $0x3] sm:$0x1]
      %v1128 = vlaneseq
      %v1129 = vshrl.u32 %v1128, 7
      %v1130 = vsub.s32 0, %v1129
      %v1131 = vrot.slane %v1115, %v1130
      %v1137 = vunpack.c.l.b16 %v1067
      %v1138 = vunpack.c.l.b16 %v1068
      %v1139 = vunpack.c.l.b16 %v1069
      %v1140 = vunpack.c.l.b16 %v1070
      %v1141 = vpack.c.b16 %v1138, %v1137
      %v1142 = vpack.c.b16 %v1140, %v1139
      %vm1145 = vcmask 261120
      %v1147 = vsel %vm1145, %v1066, 0
      %1149 = vmatprep.subr.bf16.mxu0 0
      %1150 = vmatpush1.bf16.msra.mxu0 0
      %1151 = vmatprep.subr.bf16.mxu0 0
      %1152 = vmatpush1.bf16.msra.mxu0 0
      %1153 = vmatprep.subr.bf16.mxu0 0
      %1154 = vmatpush1.bf16.msra.mxu0 0
      %1155 = vmatprep.subr.bf16.mxu0 0
      %1156 = vmatpush1.bf16.msra.mxu0 0
      %1157 = vmatprep.subr.bf16.mxu0 0
      %1158 = vmatpush1.bf16.msra.mxu0 0
      %1159 = vmatprep.subr.bf16.mxu0 0
      %1160 = vmatpush1.bf16.msra.mxu0 0
      %1161 = vmatprep.subr.bf16.mxu0 0
      %1162 = vmatpush1.bf16.msra.mxu0 %v1142
      %1163 = vmatprep.subr.bf16.mxu0 0
      %1164 = vmatpush1.bf16.msra.mxu0 %v1141
      %1165 = vmatprep.subr.bf16.mxu0 0
      %1166 = vmatpush2.bf16.msra.mxu0 0
      %1167 = vmatprep.subr.bf16.mxu0 0
      %1168 = vmatpush2.bf16.msra.mxu0 0
      %1169 = vmatprep.subr.bf16.mxu0 0
      %1170 = vmatpush2.bf16.msra.mxu0 0
      %1171 = vmatprep.subr.bf16.mxu0 0
      %1172 = vmatpush2.bf16.msra.mxu0 0
      %1173 = vmatprep.subr.bf16.mxu0 0
      %1174 = vmatpush2.bf16.msra.mxu0 0
      %1175 = vmatprep.subr.bf16.mxu0 0
      %1176 = vmatpush2.bf16.msra.mxu0 0
      %1177 = vmatprep.subr.bf16.mxu0 0
      %1178 = vmatpush2.bf16.msra.mxu0 0
      %1179 = vmatprep.subr.bf16.mxu0 0
      %1180 = vmatpush2.bf16.msra.mxu0 0
      %1181 = vmatprep.mubr.bf16.mxu0 0
      %1182 = vmatmul.mubr.bf16.gmra.mxu0 %v1147
      %v1183 = vpop.f32.mrf.mxu0
      %v1184 = vadd.f32 %v1131, %v1183
      %v1185 = vpop.f32.mrf.mxu0
      %v1186 = vpop.f32.mrf.mxu0
      %v1187 = vpop.f32.mrf.mxu0
      %1188 = vdwg.mxu0
      %v1190 = vlaneseq
      %v1191 = vshrl.u32 %v1190, 7
      %v1192 = vsub.s32 0, %v1191
      %v1193 = vrot.slane %v1119, %v1192
      %v1199 = vunpack.c.l.b16 %v1083
      %v1200 = vunpack.c.l.b16 %v1084
      %v1201 = vunpack.c.l.b16 %v1085
      %v1202 = vunpack.c.l.b16 %v1086
      %v1203 = vpack.c.b16 %v1200, %v1199
      %v1204 = vpack.c.b16 %v1202, %v1201
      %1207 = vmatprep.subr.bf16.mxu0 0
      %1208 = vmatpush1.bf16.msra.mxu0 0
      %1209 = vmatprep.subr.bf16.mxu0 0
      %1210 = vmatpush1.bf16.msra.mxu0 0
      %1211 = vmatprep.subr.bf16.mxu0 0
      %1212 = vmatpush1.bf16.msra.mxu0 0
      %1213 = vmatprep.subr.bf16.mxu0 0
      %1214 = vmatpush1.bf16.msra.mxu0 0
      %1215 = vmatprep.subr.bf16.mxu0 0
      %1216 = vmatpush1.bf16.msra.mxu0 0
      %1217 = vmatprep.subr.bf16.mxu0 0
      %1218 = vmatpush1.bf16.msra.mxu0 0
      %1219 = vmatprep.subr.bf16.mxu0 0
      %1220 = vmatpush1.bf16.msra.mxu0 %v1204
      %1221 = vmatprep.subr.bf16.mxu0 0
      %1222 = vmatpush1.bf16.msra.mxu0 %v1203
      %1223 = vmatprep.subr.bf16.mxu0 0
      %1224 = vmatpush2.bf16.msra.mxu0 0
      %1225 = vmatprep.subr.bf16.mxu0 0
      %1226 = vmatpush2.bf16.msra.mxu0 0
      %1227 = vmatprep.subr.bf16.mxu0 0
      %1228 = vmatpush2.bf16.msra.mxu0 0
      %1229 = vmatprep.subr.bf16.mxu0 0
      %1230 = vmatpush2.bf16.msra.mxu0 0
      %1231 = vmatprep.subr.bf16.mxu0 0
      %1232 = vmatpush2.bf16.msra.mxu0 0
      %1233 = vmatprep.subr.bf16.mxu0 0
      %1234 = vmatpush2.bf16.msra.mxu0 0
      %1235 = vmatprep.subr.bf16.mxu0 0
      %1236 = vmatpush2.bf16.msra.mxu0 0
      %1237 = vmatprep.subr.bf16.mxu0 0
      %1238 = vmatpush2.bf16.msra.mxu0 0
      %1239 = vmatprep.mubr.bf16.mxu0 0
      %1240 = vmatmul.mubr.bf16.gmra.mxu0 %v1147
      %v1241 = vpop.f32.mrf.mxu0
      %v1242 = vadd.f32 %v1193, %v1241
      %v1243 = vpop.f32.mrf.mxu0
      %v1244 = vpop.f32.mrf.mxu0
      %v1245 = vpop.f32.mrf.mxu0
      %1246 = vdwg.mxu0
      %v1248 = vlaneseq
      %v1249 = vshrl.u32 %v1248, 7
      %v1250 = vsub.s32 0, %v1249
      %v1251 = vrot.slane %v1123, %v1250
      %v1257 = vunpack.c.l.b16 %v1099
      %v1258 = vunpack.c.l.b16 %v1100
      %v1259 = vunpack.c.l.b16 %v1101
      %v1260 = vunpack.c.l.b16 %v1102
      %v1261 = vpack.c.b16 %v1258, %v1257
      %v1262 = vpack.c.b16 %v1260, %v1259
      %1265 = vmatprep.subr.bf16.mxu0 0
      %1266 = vmatpush1.bf16.msra.mxu0 0
      %1267 = vmatprep.subr.bf16.mxu0 0
      %1268 = vmatpush1.bf16.msra.mxu0 0
      %1269 = vmatprep.subr.bf16.mxu0 0
      %1270 = vmatpush1.bf16.msra.mxu0 0
      %1271 = vmatprep.subr.bf16.mxu0 0
      %1272 = vmatpush1.bf16.msra.mxu0 0
      %1273 = vmatprep.subr.bf16.mxu0 0
      %1274 = vmatpush1.bf16.msra.mxu0 0
      %1275 = vmatprep.subr.bf16.mxu0 0
      %1276 = vmatpush1.bf16.msra.mxu0 0
      %1277 = vmatprep.subr.bf16.mxu0 0
      %1278 = vmatpush1.bf16.msra.mxu0 %v1262
      %1279 = vmatprep.subr.bf16.mxu0 0
      %1280 = vmatpush1.bf16.msra.mxu0 %v1261
      %1281 = vmatprep.subr.bf16.mxu0 0
      %1282 = vmatpush2.bf16.msra.mxu0 0
      %1283 = vmatprep.subr.bf16.mxu0 0
      %1284 = vmatpush2.bf16.msra.mxu0 0
      %1285 = vmatprep.subr.bf16.mxu0 0
      %1286 = vmatpush2.bf16.msra.mxu0 0
      %1287 = vmatprep.subr.bf16.mxu0 0
      %1288 = vmatpush2.bf16.msra.mxu0 0
      %1289 = vmatprep.subr.bf16.mxu0 0
      %1290 = vmatpush2.bf16.msra.mxu0 0
      %1291 = vmatprep.subr.bf16.mxu0 0
      %1292 = vmatpush2.bf16.msra.mxu0 0
      %1293 = vmatprep.subr.bf16.mxu0 0
      %1294 = vmatpush2.bf16.msra.mxu0 0
      %1295 = vmatprep.subr.bf16.mxu0 0
      %1296 = vmatpush2.bf16.msra.mxu0 0
      %1297 = vmatprep.mubr.bf16.mxu0 0
      %1298 = vmatmul.mubr.bf16.gmra.mxu0 %v1147
      %v1299 = vpop.f32.mrf.mxu0
      %v1300 = vadd.f32 %v1251, %v1299
      %v1301 = vpop.f32.mrf.mxu0
      %v1302 = vpop.f32.mrf.mxu0
      %v1303 = vpop.f32.mrf.mxu0
      %1304 = vdwg.mxu0
      %v1305 = vpack.c.bf16 %v1184, %v1184
      %v1306 = vpack.c.bf16 %v1242, %v1242
      %vm1307 = vcmask 64512
      %v1309 = vsel %vm1307, %v1305, 0
      %v1312 = vsel %vm1307, %v1306, 0
      %1314 = vmatprep.subr.bf16.mxu0 0
      %1315 = vmatpush1.bf16.xpose.msra.mxu0 0
      %1316 = vmatprep.subr.bf16.mxu0 0
      %1317 = vmatpush1.bf16.xpose.msra.mxu0 0
      %1318 = vmatprep.subr.bf16.mxu0 0
      %1319 = vmatpush1.bf16.xpose.msra.mxu0 0
      %1320 = vmatprep.subr.bf16.mxu0 0
      %1321 = vmatpush1.bf16.xpose.msra.mxu0 0
      %1322 = vmatprep.subr.bf16.mxu0 0
      %1323 = vmatpush1.bf16.xpose.msra.mxu0 0
      %1324 = vmatprep.subr.bf16.mxu0 0
      %1325 = vmatpush1.bf16.xpose.msra.mxu0 0
      %1326 = vmatprep.subr.bf16.mxu0 0
      %1327 = vmatpush1.bf16.xpose.msra.mxu0 0
      %1328 = vmatprep.subr.bf16.mxu0 0
      %1329 = vmatpush1.bf16.xpose.msra.mxu0 %v1312
      %1330 = vmatprep.subr.bf16.mxu0 0
      %1331 = vmatpush2.bf16.xpose.msra.mxu0 0
      %1332 = vmatprep.subr.bf16.mxu0 0
      %1333 = vmatpush2.bf16.xpose.msra.mxu0 0
      %1334 = vmatprep.subr.bf16.mxu0 0
      %1335 = vmatpush2.bf16.xpose.msra.mxu0 0
      %1336 = vmatprep.subr.bf16.mxu0 0
      %1337 = vmatpush2.bf16.xpose.msra.mxu0 0
      %1338 = vmatprep.subr.bf16.mxu0 0
      %1339 = vmatpush2.bf16.xpose.msra.mxu0 0
      %1340 = vmatprep.subr.bf16.mxu0 0
      %1341 = vmatpush2.bf16.xpose.msra.mxu0 0
      %1342 = vmatprep.subr.bf16.mxu0 0
      %1343 = vmatpush2.bf16.xpose.msra.mxu0 0
      %1344 = vmatprep.subr.bf16.mxu0 0
      %1345 = vmatpush2.bf16.xpose.msra.mxu0 0
      %1346 = vmatprep.mubr.bf16.mxu0 0
      %1347 = vmatmul.mubr.bf16.gmra.mxu0 %v1309
      %v1348 = vpop.f32.mrf.mxu0
      %v1349 = vadd.f32 0.0, %v1348
      %v1350 = vpop.f32.mrf.mxu0
      %v1351 = vpop.f32.mrf.mxu0
      %v1352 = vpop.f32.mrf.mxu0
      %1353 = vdwg.mxu0
      %v1354 = vmul.f32 %v1349, 0.35355338
      %v1355 = vsel %vm1307, %v1354, -inf
      %1356 = vmax.xlane.f32.xlu0 %v1355
      %v1357 = vpop.xlane.xlu0 %1356
      %v1358 = vsub.f32 %v1354, %v1357
      %v1359 = vmul.f32 %v1358, 1.442695
      %v1360 = vpow.pop %v1359
      %v1361 = vsel %vm1307, %v1360, 0.0
      %1362 = vadd.xlane.f32.xlu0 %v1361
      %v1363 = vpop.xlane.xlu0 %1362
      %v1364 = vrcp.pop %v1363
      %v1365 = vmul.f32 %v1360, %v1364
      %v1366 = vpack.c.bf16 %v1365, %v1365
      %v1367 = vpack.c.bf16 %v1300, %v1300
      %v1369 = vsel %vm1307, %v1366, 0
      %vm1371 = vcmask 1043456
      %v1373 = vsel %vm1371, %v1367, 0
      %1375 = vmatprep.subr.bf16.mxu0 0
      %1376 = vmatpush1.bf16.msra.mxu0 0
      %1377 = vmatprep.subr.bf16.mxu0 0
      %1378 = vmatpush1.bf16.msra.mxu0 0
      %1379 = vmatprep.subr.bf16.mxu0 0
      %1380 = vmatpush1.bf16.msra.mxu0 0
      %1381 = vmatprep.subr.bf16.mxu0 0
      %1382 = vmatpush1.bf16.msra.mxu0 0
      %1383 = vmatprep.subr.bf16.mxu0 0
      %1384 = vmatpush1.bf16.msra.mxu0 0
      %1385 = vmatprep.subr.bf16.mxu0 0
      %1386 = vmatpush1.bf16.msra.mxu0 0
      %1387 = vmatprep.subr.bf16.mxu0 0
      %1388 = vmatpush1.bf16.msra.mxu0 0
      %1389 = vmatprep.subr.bf16.mxu0 0
      %1390 = vmatpush1.bf16.msra.mxu0 %v1373
      %1391 = vmatprep.subr.bf16.mxu0 0
      %1392 = vmatpush2.bf16.msra.mxu0 0
      %1393 = vmatprep.subr.bf16.mxu0 0
      %1394 = vmatpush2.bf16.msra.mxu0 0
      %1395 = vmatprep.subr.bf16.mxu0 0
      %1396 = vmatpush2.bf16.msra.mxu0 0
      %1397 = vmatprep.subr.bf16.mxu0 0
      %1398 = vmatpush2.bf16.msra.mxu0 0
      %1399 = vmatprep.subr.bf16.mxu0 0
      %1400 = vmatpush2.bf16.msra.mxu0 0
      %1401 = vmatprep.subr.bf16.mxu0 0
      %1402 = vmatpush2.bf16.msra.mxu0 0
      %1403 = vmatprep.subr.bf16.mxu0 0
      %1404 = vmatpush2.bf16.msra.mxu0 0
      %1405 = vmatprep.subr.bf16.mxu0 0
      %1406 = vmatpush2.bf16.msra.mxu0 0
      %1407 = vmatprep.mubr.bf16.mxu0 0
      %1408 = vmatmul.mubr.bf16.gmra.mxu0 %v1369
      %v1409 = vpop.f32.mrf.mxu0
      %v1410 = vadd.f32 0.0, %v1409
      %v1411 = vpop.f32.mrf.mxu0
      %v1412 = vpop.f32.mrf.mxu0
      %v1413 = vpop.f32.mrf.mxu0
      %1414 = vdwg.mxu0
      %v1416 = vlaneseq
      %v1417 = vshrl.u32 %v1416, 7
      %v1418 = vsub.s32 0, %v1417
      %v1419 = vrot.slane %v1116, %v1418
      %v1425 = vunpack.c.l.b16 %v1071
      %v1426 = vunpack.c.l.b16 %v1072
      %v1427 = vunpack.c.l.b16 %v1073
      %v1428 = vunpack.c.l.b16 %v1074
      %v1429 = vpack.c.b16 %v1426, %v1425
      %v1430 = vpack.c.b16 %v1428, %v1427
      %1433 = vmatprep.subr.bf16.mxu0 0
      %1434 = vmatpush1.bf16.msra.mxu0 0
      %1435 = vmatprep.subr.bf16.mxu0 0
      %1436 = vmatpush1.bf16.msra.mxu0 0
      %1437 = vmatprep.subr.bf16.mxu0 0
      %1438 = vmatpush1.bf16.msra.mxu0 0
      %1439 = vmatprep.subr.bf16.mxu0 0
      %1440 = vmatpush1.bf16.msra.mxu0 0
      %1441 = vmatprep.subr.bf16.mxu0 0
      %1442 = vmatpush1.bf16.msra.mxu0 0
      %1443 = vmatprep.subr.bf16.mxu0 0
      %1444 = vmatpush1.bf16.msra.mxu0 0
      %1445 = vmatprep.subr.bf16.mxu0 0
      %1446 = vmatpush1.bf16.msra.mxu0 %v1430
      %1447 = vmatprep.subr.bf16.mxu0 0
      %1448 = vmatpush1.bf16.msra.mxu0 %v1429
      %1449 = vmatprep.subr.bf16.mxu0 0
      %1450 = vmatpush2.bf16.msra.mxu0 0
      %1451 = vmatprep.subr.bf16.mxu0 0
      %1452 = vmatpush2.bf16.msra.mxu0 0
      %1453 = vmatprep.subr.bf16.mxu0 0
      %1454 = vmatpush2.bf16.msra.mxu0 0
      %1455 = vmatprep.subr.bf16.mxu0 0
      %1456 = vmatpush2.bf16.msra.mxu0 0
      %1457 = vmatprep.subr.bf16.mxu0 0
      %1458 = vmatpush2.bf16.msra.mxu0 0
      %1459 = vmatprep.subr.bf16.mxu0 0
      %1460 = vmatpush2.bf16.msra.mxu0 0
      %1461 = vmatprep.subr.bf16.mxu0 0
      %1462 = vmatpush2.bf16.msra.mxu0 0
      %1463 = vmatprep.subr.bf16.mxu0 0
      %1464 = vmatpush2.bf16.msra.mxu0 0
      %1465 = vmatprep.mubr.bf16.mxu0 0
      %1466 = vmatmul.mubr.bf16.gmra.mxu0 %v1147
      %v1467 = vpop.f32.mrf.mxu0
      %v1468 = vadd.f32 %v1419, %v1467
      %v1469 = vpop.f32.mrf.mxu0
      %v1470 = vpop.f32.mrf.mxu0
      %v1471 = vpop.f32.mrf.mxu0
      %1472 = vdwg.mxu0
      %v1474 = vlaneseq
      %v1475 = vshrl.u32 %v1474, 7
      %v1476 = vsub.s32 0, %v1475
      %v1477 = vrot.slane %v1120, %v1476
      %v1483 = vunpack.c.l.b16 %v1087
      %v1484 = vunpack.c.l.b16 %v1088
      %v1485 = vunpack.c.l.b16 %v1089
      %v1486 = vunpack.c.l.b16 %v1090
      %v1487 = vpack.c.b16 %v1484, %v1483
      %v1488 = vpack.c.b16 %v1486, %v1485
      %1491 = vmatprep.subr.bf16.mxu0 0
      %1492 = vmatpush1.bf16.msra.mxu0 0
      %1493 = vmatprep.subr.bf16.mxu0 0
      %1494 = vmatpush1.bf16.msra.mxu0 0
      %1495 = vmatprep.subr.bf16.mxu0 0
      %1496 = vmatpush1.bf16.msra.mxu0 0
      %1497 = vmatprep.subr.bf16.mxu0 0
      %1498 = vmatpush1.bf16.msra.mxu0 0
      %1499 = vmatprep.subr.bf16.mxu0 0
      %1500 = vmatpush1.bf16.msra.mxu0 0
      %1501 = vmatprep.subr.bf16.mxu0 0
      %1502 = vmatpush1.bf16.msra.mxu0 0
      %1503 = vmatprep.subr.bf16.mxu0 0
      %1504 = vmatpush1.bf16.msra.mxu0 %v1488
      %1505 = vmatprep.subr.bf16.mxu0 0
      %1506 = vmatpush1.bf16.msra.mxu0 %v1487
      %1507 = vmatprep.subr.bf16.mxu0 0
      %1508 = vmatpush2.bf16.msra.mxu0 0
      %1509 = vmatprep.subr.bf16.mxu0 0
      %1510 = vmatpush2.bf16.msra.mxu0 0
      %1511 = vmatprep.subr.bf16.mxu0 0
      %1512 = vmatpush2.bf16.msra.mxu0 0
      %1513 = vmatprep.subr.bf16.mxu0 0
      %1514 = vmatpush2.bf16.msra.mxu0 0
      %1515 = vmatprep.subr.bf16.mxu0 0
      %1516 = vmatpush2.bf16.msra.mxu0 0
      %1517 = vmatprep.subr.bf16.mxu0 0
      %1518 = vmatpush2.bf16.msra.mxu0 0
      %1519 = vmatprep.subr.bf16.mxu0 0
      %1520 = vmatpush2.bf16.msra.mxu0 0
      %1521 = vmatprep.subr.bf16.mxu0 0
      %1522 = vmatpush2.bf16.msra.mxu0 0
      %1523 = vmatprep.mubr.bf16.mxu0 0
      %1524 = vmatmul.mubr.bf16.gmra.mxu0 %v1147
      %v1525 = vpop.f32.mrf.mxu0
      %v1526 = vadd.f32 %v1477, %v1525
      %v1527 = vpop.f32.mrf.mxu0
      %v1528 = vpop.f32.mrf.mxu0
      %v1529 = vpop.f32.mrf.mxu0
      %1530 = vdwg.mxu0
      %v1532 = vlaneseq
      %v1533 = vshrl.u32 %v1532, 7
      %v1534 = vsub.s32 0, %v1533
      %v1535 = vrot.slane %v1124, %v1534
      %v1541 = vunpack.c.l.b16 %v1103
      %v1542 = vunpack.c.l.b16 %v1104
      %v1543 = vunpack.c.l.b16 %v1105
      %v1544 = vunpack.c.l.b16 %v1106
      %v1545 = vpack.c.b16 %v1542, %v1541
      %v1546 = vpack.c.b16 %v1544, %v1543
      %1549 = vmatprep.subr.bf16.mxu0 0
      %1550 = vmatpush1.bf16.msra.mxu0 0
      %1551 = vmatprep.subr.bf16.mxu0 0
      %1552 = vmatpush1.bf16.msra.mxu0 0
      %1553 = vmatprep.subr.bf16.mxu0 0
      %1554 = vmatpush1.bf16.msra.mxu0 0
      %1555 = vmatprep.subr.bf16.mxu0 0
      %1556 = vmatpush1.bf16.msra.mxu0 0
      %1557 = vmatprep.subr.bf16.mxu0 0
      %1558 = vmatpush1.bf16.msra.mxu0 0
      %1559 = vmatprep.subr.bf16.mxu0 0
      %1560 = vmatpush1.bf16.msra.mxu0 0
      %1561 = vmatprep.subr.bf16.mxu0 0
      %1562 = vmatpush1.bf16.msra.mxu0 %v1546
      %1563 = vmatprep.subr.bf16.mxu0 0
      %1564 = vmatpush1.bf16.msra.mxu0 %v1545
      %1565 = vmatprep.subr.bf16.mxu0 0
      %1566 = vmatpush2.bf16.msra.mxu0 0
      %1567 = vmatprep.subr.bf16.mxu0 0
      %1568 = vmatpush2.bf16.msra.mxu0 0
      %1569 = vmatprep.subr.bf16.mxu0 0
      %1570 = vmatpush2.bf16.msra.mxu0 0
      %1571 = vmatprep.subr.bf16.mxu0 0
      %1572 = vmatpush2.bf16.msra.mxu0 0
      %1573 = vmatprep.subr.bf16.mxu0 0
      %1574 = vmatpush2.bf16.msra.mxu0 0
      %1575 = vmatprep.subr.bf16.mxu0 0
      %1576 = vmatpush2.bf16.msra.mxu0 0
      %1577 = vmatprep.subr.bf16.mxu0 0
      %1578 = vmatpush2.bf16.msra.mxu0 0
      %1579 = vmatprep.subr.bf16.mxu0 0
      %1580 = vmatpush2.bf16.msra.mxu0 0
      %1581 = vmatprep.mubr.bf16.mxu0 0
      %1582 = vmatmul.mubr.bf16.gmra.mxu0 %v1147
      %v1583 = vpop.f32.mrf.mxu0
      %v1584 = vadd.f32 %v1535, %v1583
      %v1585 = vpop.f32.mrf.mxu0
      %v1586 = vpop.f32.mrf.mxu0
      %v1587 = vpop.f32.mrf.mxu0
      %1588 = vdwg.mxu0
      %v1589 = vpack.c.bf16 %v1468, %v1468
      %v1590 = vpack.c.bf16 %v1526, %v1526
      %v1592 = vsel %vm1307, %v1589, 0
      %v1595 = vsel %vm1307, %v1590, 0
      %1597 = vmatprep.subr.bf16.mxu0 0
      %1598 = vmatpush1.bf16.xpose.msra.mxu0 0
      %1599 = vmatprep.subr.bf16.mxu0 0
      %1600 = vmatpush1.bf16.xpose.msra.mxu0 0
      %1601 = vmatprep.subr.bf16.mxu0 0
      %1602 = vmatpush1.bf16.xpose.msra.mxu0 0
      %1603 = vmatprep.subr.bf16.mxu0 0
      %1604 = vmatpush1.bf16.xpose.msra.mxu0 0
      %1605 = vmatprep.subr.bf16.mxu0 0
      %1606 = vmatpush1.bf16.xpose.msra.mxu0 0
      %1607 = vmatprep.subr.bf16.mxu0 0
      %1608 = vmatpush1.bf16.xpose.msra.mxu0 0
      %1609 = vmatprep.subr.bf16.mxu0 0
      %1610 = vmatpush1.bf16.xpose.msra.mxu0 0
      %1611 = vmatprep.subr.bf16.mxu0 0
      %1612 = vmatpush1.bf16.xpose.msra.mxu0 %v1595
      %1613 = vmatprep.subr.bf16.mxu0 0
      %1614 = vmatpush2.bf16.xpose.msra.mxu0 0
      %1615 = vmatprep.subr.bf16.mxu0 0
      %1616 = vmatpush2.bf16.xpose.msra.mxu0 0
      %1617 = vmatprep.subr.bf16.mxu0 0
      %1618 = vmatpush2.bf16.xpose.msra.mxu0 0
      %1619 = vmatprep.subr.bf16.mxu0 0
      %1620 = vmatpush2.bf16.xpose.msra.mxu0 0
      %1621 = vmatprep.subr.bf16.mxu0 0
      %1622 = vmatpush2.bf16.xpose.msra.mxu0 0
      %1623 = vmatprep.subr.bf16.mxu0 0
      %1624 = vmatpush2.bf16.xpose.msra.mxu0 0
      %1625 = vmatprep.subr.bf16.mxu0 0
      %1626 = vmatpush2.bf16.xpose.msra.mxu0 0
      %1627 = vmatprep.subr.bf16.mxu0 0
      %1628 = vmatpush2.bf16.xpose.msra.mxu0 0
      %1629 = vmatprep.mubr.bf16.mxu0 0
      %1630 = vmatmul.mubr.bf16.gmra.mxu0 %v1592
      %v1631 = vpop.f32.mrf.mxu0
      %v1632 = vadd.f32 0.0, %v1631
      %v1633 = vpop.f32.mrf.mxu0
      %v1634 = vpop.f32.mrf.mxu0
      %v1635 = vpop.f32.mrf.mxu0
      %1636 = vdwg.mxu0
      %v1637 = vmul.f32 %v1632, 0.35355338
      %v1638 = vsel %vm1307, %v1637, -inf
      %1639 = vmax.xlane.f32.xlu0 %v1638
      %v1640 = vpop.xlane.xlu0 %1639
      %v1641 = vsub.f32 %v1637, %v1640
      %v1642 = vmul.f32 %v1641, 1.442695
      %v1643 = vpow.pop %v1642
      %v1644 = vsel %vm1307, %v1643, 0.0
      %1645 = vadd.xlane.f32.xlu0 %v1644
      %v1646 = vpop.xlane.xlu0 %1645
      %v1647 = vrcp.pop %v1646
      %v1648 = vmul.f32 %v1643, %v1647
      %v1649 = vpack.c.bf16 %v1648, %v1648
      %v1650 = vpack.c.bf16 %v1584, %v1584
      %v1652 = vsel %vm1307, %v1649, 0
      %v1655 = vsel %vm1371, %v1650, 0
      %1657 = vmatprep.subr.bf16.mxu0 0
      %1658 = vmatpush1.bf16.msra.mxu0 0
      %1659 = vmatprep.subr.bf16.mxu0 0
      %1660 = vmatpush1.bf16.msra.mxu0 0
      %1661 = vmatprep.subr.bf16.mxu0 0
      %1662 = vmatpush1.bf16.msra.mxu0 0
      %1663 = vmatprep.subr.bf16.mxu0 0
      %1664 = vmatpush1.bf16.msra.mxu0 0
      %1665 = vmatprep.subr.bf16.mxu0 0
      %1666 = vmatpush1.bf16.msra.mxu0 0
      %1667 = vmatprep.subr.bf16.mxu0 0
      %1668 = vmatpush1.bf16.msra.mxu0 0
      %1669 = vmatprep.subr.bf16.mxu0 0
      %1670 = vmatpush1.bf16.msra.mxu0 0
      %1671 = vmatprep.subr.bf16.mxu0 0
      %1672 = vmatpush1.bf16.msra.mxu0 %v1655
      %1673 = vmatprep.subr.bf16.mxu0 0
      %1674 = vmatpush2.bf16.msra.mxu0 0
      %1675 = vmatprep.subr.bf16.mxu0 0
      %1676 = vmatpush2.bf16.msra.mxu0 0
      %1677 = vmatprep.subr.bf16.mxu0 0
      %1678 = vmatpush2.bf16.msra.mxu0 0
      %1679 = vmatprep.subr.bf16.mxu0 0
      %1680 = vmatpush2.bf16.msra.mxu0 0
      %1681 = vmatprep.subr.bf16.mxu0 0
      %1682 = vmatpush2.bf16.msra.mxu0 0
      %1683 = vmatprep.subr.bf16.mxu0 0
      %1684 = vmatpush2.bf16.msra.mxu0 0
      %1685 = vmatprep.subr.bf16.mxu0 0
      %1686 = vmatpush2.bf16.msra.mxu0 0
      %1687 = vmatprep.subr.bf16.mxu0 0
      %1688 = vmatpush2.bf16.msra.mxu0 0
      %1689 = vmatprep.mubr.bf16.mxu0 0
      %1690 = vmatmul.mubr.bf16.gmra.mxu0 %v1652
      %v1691 = vpop.f32.mrf.mxu0
      %v1692 = vadd.f32 0.0, %v1691
      %v1693 = vpop.f32.mrf.mxu0
      %v1694 = vpop.f32.mrf.mxu0
      %v1695 = vpop.f32.mrf.mxu0
      %1696 = vdwg.mxu0
      %v1698 = vlaneseq
      %v1699 = vshrl.u32 %v1698, 7
      %v1700 = vsub.s32 0, %v1699
      %v1701 = vrot.slane %v1117, %v1700
      %v1707 = vunpack.c.l.b16 %v1075
      %v1708 = vunpack.c.l.b16 %v1076
      %v1709 = vunpack.c.l.b16 %v1077
      %v1710 = vunpack.c.l.b16 %v1078
      %v1711 = vpack.c.b16 %v1708, %v1707
      %v1712 = vpack.c.b16 %v1710, %v1709
      %1715 = vmatprep.subr.bf16.mxu0 0
      %1716 = vmatpush1.bf16.msra.mxu0 0
      %1717 = vmatprep.subr.bf16.mxu0 0
      %1718 = vmatpush1.bf16.msra.mxu0 0
      %1719 = vmatprep.subr.bf16.mxu0 0
      %1720 = vmatpush1.bf16.msra.mxu0 0
      %1721 = vmatprep.subr.bf16.mxu0 0
      %1722 = vmatpush1.bf16.msra.mxu0 0
      %1723 = vmatprep.subr.bf16.mxu0 0
      %1724 = vmatpush1.bf16.msra.mxu0 0
      %1725 = vmatprep.subr.bf16.mxu0 0
      %1726 = vmatpush1.bf16.msra.mxu0 0
      %1727 = vmatprep.subr.bf16.mxu0 0
      %1728 = vmatpush1.bf16.msra.mxu0 %v1712
      %1729 = vmatprep.subr.bf16.mxu0 0
      %1730 = vmatpush1.bf16.msra.mxu0 %v1711
      %1731 = vmatprep.subr.bf16.mxu0 0
      %1732 = vmatpush2.bf16.msra.mxu0 0
      %1733 = vmatprep.subr.bf16.mxu0 0
      %1734 = vmatpush2.bf16.msra.mxu0 0
      %1735 = vmatprep.subr.bf16.mxu0 0
      %1736 = vmatpush2.bf16.msra.mxu0 0
      %1737 = vmatprep.subr.bf16.mxu0 0
      %1738 = vmatpush2.bf16.msra.mxu0 0
      %1739 = vmatprep.subr.bf16.mxu0 0
      %1740 = vmatpush2.bf16.msra.mxu0 0
      %1741 = vmatprep.subr.bf16.mxu0 0
      %1742 = vmatpush2.bf16.msra.mxu0 0
      %1743 = vmatprep.subr.bf16.mxu0 0
      %1744 = vmatpush2.bf16.msra.mxu0 0
      %1745 = vmatprep.subr.bf16.mxu0 0
      %1746 = vmatpush2.bf16.msra.mxu0 0
      %1747 = vmatprep.mubr.bf16.mxu0 0
      %1748 = vmatmul.mubr.bf16.gmra.mxu0 %v1147
      %v1749 = vpop.f32.mrf.mxu0
      %v1750 = vadd.f32 %v1701, %v1749
      %v1751 = vpop.f32.mrf.mxu0
      %v1752 = vpop.f32.mrf.mxu0
      %v1753 = vpop.f32.mrf.mxu0
      %1754 = vdwg.mxu0
      %v1756 = vlaneseq
      %v1757 = vshrl.u32 %v1756, 7
      %v1758 = vsub.s32 0, %v1757
      %v1759 = vrot.slane %v1121, %v1758
      %v1765 = vunpack.c.l.b16 %v1091
      %v1766 = vunpack.c.l.b16 %v1092
      %v1767 = vunpack.c.l.b16 %v1093
      %v1768 = vunpack.c.l.b16 %v1094
      %v1769 = vpack.c.b16 %v1766, %v1765
      %v1770 = vpack.c.b16 %v1768, %v1767
      %1773 = vmatprep.subr.bf16.mxu0 0
      %1774 = vmatpush1.bf16.msra.mxu0 0
      %1775 = vmatprep.subr.bf16.mxu0 0
      %1776 = vmatpush1.bf16.msra.mxu0 0
      %1777 = vmatprep.subr.bf16.mxu0 0
      %1778 = vmatpush1.bf16.msra.mxu0 0
      %1779 = vmatprep.subr.bf16.mxu0 0
      %1780 = vmatpush1.bf16.msra.mxu0 0
      %1781 = vmatprep.subr.bf16.mxu0 0
      %1782 = vmatpush1.bf16.msra.mxu0 0
      %1783 = vmatprep.subr.bf16.mxu0 0
      %1784 = vmatpush1.bf16.msra.mxu0 0
      %1785 = vmatprep.subr.bf16.mxu0 0
      %1786 = vmatpush1.bf16.msra.mxu0 %v1770
      %1787 = vmatprep.subr.bf16.mxu0 0
      %1788 = vmatpush1.bf16.msra.mxu0 %v1769
      %1789 = vmatprep.subr.bf16.mxu0 0
      %1790 = vmatpush2.bf16.msra.mxu0 0
      %1791 = vmatprep.subr.bf16.mxu0 0
      %1792 = vmatpush2.bf16.msra.mxu0 0
      %1793 = vmatprep.subr.bf16.mxu0 0
      %1794 = vmatpush2.bf16.msra.mxu0 0
      %1795 = vmatprep.subr.bf16.mxu0 0
      %1796 = vmatpush2.bf16.msra.mxu0 0
      %1797 = vmatprep.subr.bf16.mxu0 0
      %1798 = vmatpush2.bf16.msra.mxu0 0
      %1799 = vmatprep.subr.bf16.mxu0 0
      %1800 = vmatpush2.bf16.msra.mxu0 0
      %1801 = vmatprep.subr.bf16.mxu0 0
      %1802 = vmatpush2.bf16.msra.mxu0 0
      %1803 = vmatprep.subr.bf16.mxu0 0
      %1804 = vmatpush2.bf16.msra.mxu0 0
      %1805 = vmatprep.mubr.bf16.mxu0 0
      %1806 = vmatmul.mubr.bf16.gmra.mxu0 %v1147
      %v1807 = vpop.f32.mrf.mxu0
      %v1808 = vadd.f32 %v1759, %v1807
      %v1809 = vpop.f32.mrf.mxu0
      %v1810 = vpop.f32.mrf.mxu0
      %v1811 = vpop.f32.mrf.mxu0
      %1812 = vdwg.mxu0
      %v1814 = vlaneseq
      %v1815 = vshrl.u32 %v1814, 7
      %v1816 = vsub.s32 0, %v1815
      %v1817 = vrot.slane %v1125, %v1816
      %v1823 = vunpack.c.l.b16 %v1107
      %v1824 = vunpack.c.l.b16 %v1108
      %v1825 = vunpack.c.l.b16 %v1109
      %v1826 = vunpack.c.l.b16 %v1110
      %v1827 = vpack.c.b16 %v1824, %v1823
      %v1828 = vpack.c.b16 %v1826, %v1825
      %1831 = vmatprep.subr.bf16.mxu0 0
      %1832 = vmatpush1.bf16.msra.mxu0 0
      %1833 = vmatprep.subr.bf16.mxu0 0
      %1834 = vmatpush1.bf16.msra.mxu0 0
      %1835 = vmatprep.subr.bf16.mxu0 0
      %1836 = vmatpush1.bf16.msra.mxu0 0
      %1837 = vmatprep.subr.bf16.mxu0 0
      %1838 = vmatpush1.bf16.msra.mxu0 0
      %1839 = vmatprep.subr.bf16.mxu0 0
      %1840 = vmatpush1.bf16.msra.mxu0 0
      %1841 = vmatprep.subr.bf16.mxu0 0
      %1842 = vmatpush1.bf16.msra.mxu0 0
      %1843 = vmatprep.subr.bf16.mxu0 0
      %1844 = vmatpush1.bf16.msra.mxu0 %v1828
      %1845 = vmatprep.subr.bf16.mxu0 0
      %1846 = vmatpush1.bf16.msra.mxu0 %v1827
      %1847 = vmatprep.subr.bf16.mxu0 0
      %1848 = vmatpush2.bf16.msra.mxu0 0
      %1849 = vmatprep.subr.bf16.mxu0 0
      %1850 = vmatpush2.bf16.msra.mxu0 0
      %1851 = vmatprep.subr.bf16.mxu0 0
      %1852 = vmatpush2.bf16.msra.mxu0 0
      %1853 = vmatprep.subr.bf16.mxu0 0
      %1854 = vmatpush2.bf16.msra.mxu0 0
      %1855 = vmatprep.subr.bf16.mxu0 0
      %1856 = vmatpush2.bf16.msra.mxu0 0
      %1857 = vmatprep.subr.bf16.mxu0 0
      %1858 = vmatpush2.bf16.msra.mxu0 0
      %1859 = vmatprep.subr.bf16.mxu0 0
      %1860 = vmatpush2.bf16.msra.mxu0 0
      %1861 = vmatprep.subr.bf16.mxu0 0
      %1862 = vmatpush2.bf16.msra.mxu0 0
      %1863 = vmatprep.mubr.bf16.mxu0 0
      %1864 = vmatmul.mubr.bf16.gmra.mxu0 %v1147
      %v1865 = vpop.f32.mrf.mxu0
      %v1866 = vadd.f32 %v1817, %v1865
      %v1867 = vpop.f32.mrf.mxu0
      %v1868 = vpop.f32.mrf.mxu0
      %v1869 = vpop.f32.mrf.mxu0
      %1870 = vdwg.mxu0
      %v1871 = vpack.c.bf16 %v1750, %v1750
      %v1872 = vpack.c.bf16 %v1808, %v1808
      %v1874 = vsel %vm1307, %v1871, 0
      %v1877 = vsel %vm1307, %v1872, 0
      %1879 = vmatprep.subr.bf16.mxu0 0
      %1880 = vmatpush1.bf16.xpose.msra.mxu0 0
      %1881 = vmatprep.subr.bf16.mxu0 0
      %1882 = vmatpush1.bf16.xpose.msra.mxu0 0
      %1883 = vmatprep.subr.bf16.mxu0 0
      %1884 = vmatpush1.bf16.xpose.msra.mxu0 0
      %1885 = vmatprep.subr.bf16.mxu0 0
      %1886 = vmatpush1.bf16.xpose.msra.mxu0 0
      %1887 = vmatprep.subr.bf16.mxu0 0
      %1888 = vmatpush1.bf16.xpose.msra.mxu0 0
      %1889 = vmatprep.subr.bf16.mxu0 0
      %1890 = vmatpush1.bf16.xpose.msra.mxu0 0
      %1891 = vmatprep.subr.bf16.mxu0 0
      %1892 = vmatpush1.bf16.xpose.msra.mxu0 0
      %1893 = vmatprep.subr.bf16.mxu0 0
      %1894 = vmatpush1.bf16.xpose.msra.mxu0 %v1877
      %1895 = vmatprep.subr.bf16.mxu0 0
      %1896 = vmatpush2.bf16.xpose.msra.mxu0 0
      %1897 = vmatprep.subr.bf16.mxu0 0
      %1898 = vmatpush2.bf16.xpose.msra.mxu0 0
      %1899 = vmatprep.subr.bf16.mxu0 0
      %1900 = vmatpush2.bf16.xpose.msra.mxu0 0
      %1901 = vmatprep.subr.bf16.mxu0 0
      %1902 = vmatpush2.bf16.xpose.msra.mxu0 0
      %1903 = vmatprep.subr.bf16.mxu0 0
      %1904 = vmatpush2.bf16.xpose.msra.mxu0 0
      %1905 = vmatprep.subr.bf16.mxu0 0
      %1906 = vmatpush2.bf16.xpose.msra.mxu0 0
      %1907 = vmatprep.subr.bf16.mxu0 0
      %1908 = vmatpush2.bf16.xpose.msra.mxu0 0
      %1909 = vmatprep.subr.bf16.mxu0 0
      %1910 = vmatpush2.bf16.xpose.msra.mxu0 0
      %1911 = vmatprep.mubr.bf16.mxu0 0
      %1912 = vmatmul.mubr.bf16.gmra.mxu0 %v1874
      %v1913 = vpop.f32.mrf.mxu0
      %v1914 = vadd.f32 0.0, %v1913
      %v1915 = vpop.f32.mrf.mxu0
      %v1916 = vpop.f32.mrf.mxu0
      %v1917 = vpop.f32.mrf.mxu0
      %1918 = vdwg.mxu0
      %v1919 = vmul.f32 %v1914, 0.35355338
      %v1920 = vsel %vm1307, %v1919, -inf
      %1921 = vmax.xlane.f32.xlu0 %v1920
      %v1922 = vpop.xlane.xlu0 %1921
      %v1923 = vsub.f32 %v1919, %v1922
      %v1924 = vmul.f32 %v1923, 1.442695
      %v1925 = vpow.pop %v1924
      %v1926 = vsel %vm1307, %v1925, 0.0
      %1927 = vadd.xlane.f32.xlu0 %v1926
      %v1928 = vpop.xlane.xlu0 %1927
      %v1929 = vrcp.pop %v1928
      %v1930 = vmul.f32 %v1925, %v1929
      %v1931 = vpack.c.bf16 %v1930, %v1930
      %v1932 = vpack.c.bf16 %v1866, %v1866
      %v1934 = vsel %vm1307, %v1931, 0
      %v1937 = vsel %vm1371, %v1932, 0
      %1939 = vmatprep.subr.bf16.mxu0 0
      %1940 = vmatpush1.bf16.msra.mxu0 0
      %1941 = vmatprep.subr.bf16.mxu0 0
      %1942 = vmatpush1.bf16.msra.mxu0 0
      %1943 = vmatprep.subr.bf16.mxu0 0
      %1944 = vmatpush1.bf16.msra.mxu0 0
      %1945 = vmatprep.subr.bf16.mxu0 0
      %1946 = vmatpush1.bf16.msra.mxu0 0
      %1947 = vmatprep.subr.bf16.mxu0 0
      %1948 = vmatpush1.bf16.msra.mxu0 0
      %1949 = vmatprep.subr.bf16.mxu0 0
      %1950 = vmatpush1.bf16.msra.mxu0 0
      %1951 = vmatprep.subr.bf16.mxu0 0
      %1952 = vmatpush1.bf16.msra.mxu0 0
      %1953 = vmatprep.subr.bf16.mxu0 0
      %1954 = vmatpush1.bf16.msra.mxu0 %v1937
      %1955 = vmatprep.subr.bf16.mxu0 0
      %1956 = vmatpush2.bf16.msra.mxu0 0
      %1957 = vmatprep.subr.bf16.mxu0 0
      %1958 = vmatpush2.bf16.msra.mxu0 0
      %1959 = vmatprep.subr.bf16.mxu0 0
      %1960 = vmatpush2.bf16.msra.mxu0 0
      %1961 = vmatprep.subr.bf16.mxu0 0
      %1962 = vmatpush2.bf16.msra.mxu0 0
      %1963 = vmatprep.subr.bf16.mxu0 0
      %1964 = vmatpush2.bf16.msra.mxu0 0
      %1965 = vmatprep.subr.bf16.mxu0 0
      %1966 = vmatpush2.bf16.msra.mxu0 0
      %1967 = vmatprep.subr.bf16.mxu0 0
      %1968 = vmatpush2.bf16.msra.mxu0 0
      %1969 = vmatprep.subr.bf16.mxu0 0
      %1970 = vmatpush2.bf16.msra.mxu0 0
      %1971 = vmatprep.mubr.bf16.mxu0 0
      %1972 = vmatmul.mubr.bf16.gmra.mxu0 %v1934
      %v1973 = vpop.f32.mrf.mxu0
      %v1974 = vadd.f32 0.0, %v1973
      %v1975 = vpop.f32.mrf.mxu0
      %v1976 = vpop.f32.mrf.mxu0
      %v1977 = vpop.f32.mrf.mxu0
      %1978 = vdwg.mxu0
      %v1980 = vlaneseq
      %v1981 = vshrl.u32 %v1980, 7
      %v1982 = vsub.s32 0, %v1981
      %v1983 = vrot.slane %v1118, %v1982
      %v1989 = vunpack.c.l.b16 %v1079
      %v1990 = vunpack.c.l.b16 %v1080
      %v1991 = vunpack.c.l.b16 %v1081
      %v1992 = vunpack.c.l.b16 %v1082
      %v1993 = vpack.c.b16 %v1990, %v1989
      %v1994 = vpack.c.b16 %v1992, %v1991
      %1997 = vmatprep.subr.bf16.mxu0 0
      %1998 = vmatpush1.bf16.msra.mxu0 0
      %1999 = vmatprep.subr.bf16.mxu0 0
      %2000 = vmatpush1.bf16.msra.mxu0 0
      %2001 = vmatprep.subr.bf16.mxu0 0
      %2002 = vmatpush1.bf16.msra.mxu0 0
      %2003 = vmatprep.subr.bf16.mxu0 0
      %2004 = vmatpush1.bf16.msra.mxu0 0
      %2005 = vmatprep.subr.bf16.mxu0 0
      %2006 = vmatpush1.bf16.msra.mxu0 0
      %2007 = vmatprep.subr.bf16.mxu0 0
      %2008 = vmatpush1.bf16.msra.mxu0 0
      %2009 = vmatprep.subr.bf16.mxu0 0
      %2010 = vmatpush1.bf16.msra.mxu0 %v1994
      %2011 = vmatprep.subr.bf16.mxu0 0
      %2012 = vmatpush1.bf16.msra.mxu0 %v1993
      %2013 = vmatprep.subr.bf16.mxu0 0
      %2014 = vmatpush2.bf16.msra.mxu0 0
      %2015 = vmatprep.subr.bf16.mxu0 0
      %2016 = vmatpush2.bf16.msra.mxu0 0
      %2017 = vmatprep.subr.bf16.mxu0 0
      %2018 = vmatpush2.bf16.msra.mxu0 0
      %2019 = vmatprep.subr.bf16.mxu0 0
      %2020 = vmatpush2.bf16.msra.mxu0 0
      %2021 = vmatprep.subr.bf16.mxu0 0
      %2022 = vmatpush2.bf16.msra.mxu0 0
      %2023 = vmatprep.subr.bf16.mxu0 0
      %2024 = vmatpush2.bf16.msra.mxu0 0
      %2025 = vmatprep.subr.bf16.mxu0 0
      %2026 = vmatpush2.bf16.msra.mxu0 0
      %2027 = vmatprep.subr.bf16.mxu0 0
      %2028 = vmatpush2.bf16.msra.mxu0 0
      %2029 = vmatprep.mubr.bf16.mxu0 0
      %2030 = vmatmul.mubr.bf16.gmra.mxu0 %v1147
      %v2031 = vpop.f32.mrf.mxu0
      %v2032 = vadd.f32 %v1983, %v2031
      %v2033 = vpop.f32.mrf.mxu0
      %v2034 = vpop.f32.mrf.mxu0
      %v2035 = vpop.f32.mrf.mxu0
      %2036 = vdwg.mxu0
      %v2038 = vlaneseq
      %v2039 = vshrl.u32 %v2038, 7
      %v2040 = vsub.s32 0, %v2039
      %v2041 = vrot.slane %v1122, %v2040
      %v2047 = vunpack.c.l.b16 %v1095
      %v2048 = vunpack.c.l.b16 %v1096
      %v2049 = vunpack.c.l.b16 %v1097
      %v2050 = vunpack.c.l.b16 %v1098
      %v2051 = vpack.c.b16 %v2048, %v2047
      %v2052 = vpack.c.b16 %v2050, %v2049
      %2055 = vmatprep.subr.bf16.mxu0 0
      %2056 = vmatpush1.bf16.msra.mxu0 0
      %2057 = vmatprep.subr.bf16.mxu0 0
      %2058 = vmatpush1.bf16.msra.mxu0 0
      %2059 = vmatprep.subr.bf16.mxu0 0
      %2060 = vmatpush1.bf16.msra.mxu0 0
      %2061 = vmatprep.subr.bf16.mxu0 0
      %2062 = vmatpush1.bf16.msra.mxu0 0
      %2063 = vmatprep.subr.bf16.mxu0 0
      %2064 = vmatpush1.bf16.msra.mxu0 0
      %2065 = vmatprep.subr.bf16.mxu0 0
      %2066 = vmatpush1.bf16.msra.mxu0 0
      %2067 = vmatprep.subr.bf16.mxu0 0
      %2068 = vmatpush1.bf16.msra.mxu0 %v2052
      %2069 = vmatprep.subr.bf16.mxu0 0
      %2070 = vmatpush1.bf16.msra.mxu0 %v2051
      %2071 = vmatprep.subr.bf16.mxu0 0
      %2072 = vmatpush2.bf16.msra.mxu0 0
      %2073 = vmatprep.subr.bf16.mxu0 0
      %2074 = vmatpush2.bf16.msra.mxu0 0
      %2075 = vmatprep.subr.bf16.mxu0 0
      %2076 = vmatpush2.bf16.msra.mxu0 0
      %2077 = vmatprep.subr.bf16.mxu0 0
      %2078 = vmatpush2.bf16.msra.mxu0 0
      %2079 = vmatprep.subr.bf16.mxu0 0
      %2080 = vmatpush2.bf16.msra.mxu0 0
      %2081 = vmatprep.subr.bf16.mxu0 0
      %2082 = vmatpush2.bf16.msra.mxu0 0
      %2083 = vmatprep.subr.bf16.mxu0 0
      %2084 = vmatpush2.bf16.msra.mxu0 0
      %2085 = vmatprep.subr.bf16.mxu0 0
      %2086 = vmatpush2.bf16.msra.mxu0 0
      %2087 = vmatprep.mubr.bf16.mxu0 0
      %2088 = vmatmul.mubr.bf16.gmra.mxu0 %v1147
      %v2089 = vpop.f32.mrf.mxu0
      %v2090 = vadd.f32 %v2041, %v2089
      %v2091 = vpop.f32.mrf.mxu0
      %v2092 = vpop.f32.mrf.mxu0
      %v2093 = vpop.f32.mrf.mxu0
      %2094 = vdwg.mxu0
      %v2096 = vlaneseq
      %v2097 = vshrl.u32 %v2096, 7
      %v2098 = vsub.s32 0, %v2097
      %v2099 = vrot.slane %v1126, %v2098
      %v2105 = vunpack.c.l.b16 %v1111
      %v2106 = vunpack.c.l.b16 %v1112
      %v2107 = vunpack.c.l.b16 %v1113
      %v2108 = vunpack.c.l.b16 %v1114
      %v2109 = vpack.c.b16 %v2106, %v2105
      %v2110 = vpack.c.b16 %v2108, %v2107
      %2113 = vmatprep.subr.bf16.mxu0 0
      %2114 = vmatpush1.bf16.msra.mxu0 0
      %2115 = vmatprep.subr.bf16.mxu0 0
      %2116 = vmatpush1.bf16.msra.mxu0 0
      %2117 = vmatprep.subr.bf16.mxu0 0
      %2118 = vmatpush1.bf16.msra.mxu0 0
      %2119 = vmatprep.subr.bf16.mxu0 0
      %2120 = vmatpush1.bf16.msra.mxu0 0
      %2121 = vmatprep.subr.bf16.mxu0 0
      %2122 = vmatpush1.bf16.msra.mxu0 0
      %2123 = vmatprep.subr.bf16.mxu0 0
      %2124 = vmatpush1.bf16.msra.mxu0 0
      %2125 = vmatprep.subr.bf16.mxu0 0
      %2126 = vmatpush1.bf16.msra.mxu0 %v2110
      %2127 = vmatprep.subr.bf16.mxu0 0
      %2128 = vmatpush1.bf16.msra.mxu0 %v2109
      %2129 = vmatprep.subr.bf16.mxu0 0
      %2130 = vmatpush2.bf16.msra.mxu0 0
      %2131 = vmatprep.subr.bf16.mxu0 0
      %2132 = vmatpush2.bf16.msra.mxu0 0
      %2133 = vmatprep.subr.bf16.mxu0 0
      %2134 = vmatpush2.bf16.msra.mxu0 0
      %2135 = vmatprep.subr.bf16.mxu0 0
      %2136 = vmatpush2.bf16.msra.mxu0 0
      %2137 = vmatprep.subr.bf16.mxu0 0
      %2138 = vmatpush2.bf16.msra.mxu0 0
      %2139 = vmatprep.subr.bf16.mxu0 0
      %2140 = vmatpush2.bf16.msra.mxu0 0
      %2141 = vmatprep.subr.bf16.mxu0 0
      %2142 = vmatpush2.bf16.msra.mxu0 0
      %2143 = vmatprep.subr.bf16.mxu0 0
      %2144 = vmatpush2.bf16.msra.mxu0 0
      %2145 = vmatprep.mubr.bf16.mxu0 0
      %2146 = vmatmul.mubr.bf16.gmra.mxu0 %v1147
      %v2147 = vpop.f32.mrf.mxu0
      %v2148 = vadd.f32 %v2099, %v2147
      %v2149 = vpop.f32.mrf.mxu0
      %v2150 = vpop.f32.mrf.mxu0
      %v2151 = vpop.f32.mrf.mxu0
      %2152 = vdwg.mxu0
      %v2153 = vpack.c.bf16 %v2032, %v2032
      %v2154 = vpack.c.bf16 %v2090, %v2090
      %v2156 = vsel %vm1307, %v2153, 0
      %v2159 = vsel %vm1307, %v2154, 0
      %2161 = vmatprep.subr.bf16.mxu0 0
      %2162 = vmatpush1.bf16.xpose.msra.mxu0 0
      %2163 = vmatprep.subr.bf16.mxu0 0
      %2164 = vmatpush1.bf16.xpose.msra.mxu0 0
      %2165 = vmatprep.subr.bf16.mxu0 0
      %2166 = vmatpush1.bf16.xpose.msra.mxu0 0
      %2167 = vmatprep.subr.bf16.mxu0 0
      %2168 = vmatpush1.bf16.xpose.msra.mxu0 0
      %2169 = vmatprep.subr.bf16.mxu0 0
      %2170 = vmatpush1.bf16.xpose.msra.mxu0 0
      %2171 = vmatprep.subr.bf16.mxu0 0
      %2172 = vmatpush1.bf16.xpose.msra.mxu0 0
      %2173 = vmatprep.subr.bf16.mxu0 0
      %2174 = vmatpush1.bf16.xpose.msra.mxu0 0
      %2175 = vmatprep.subr.bf16.mxu0 0
      %2176 = vmatpush1.bf16.xpose.msra.mxu0 %v2159
      %2177 = vmatprep.subr.bf16.mxu0 0
      %2178 = vmatpush2.bf16.xpose.msra.mxu0 0
      %2179 = vmatprep.subr.bf16.mxu0 0
      %2180 = vmatpush2.bf16.xpose.msra.mxu0 0
      %2181 = vmatprep.subr.bf16.mxu0 0
      %2182 = vmatpush2.bf16.xpose.msra.mxu0 0
      %2183 = vmatprep.subr.bf16.mxu0 0
      %2184 = vmatpush2.bf16.xpose.msra.mxu0 0
      %2185 = vmatprep.subr.bf16.mxu0 0
      %2186 = vmatpush2.bf16.xpose.msra.mxu0 0
      %2187 = vmatprep.subr.bf16.mxu0 0
      %2188 = vmatpush2.bf16.xpose.msra.mxu0 0
      %2189 = vmatprep.subr.bf16.mxu0 0
      %2190 = vmatpush2.bf16.xpose.msra.mxu0 0
      %2191 = vmatprep.subr.bf16.mxu0 0
      %2192 = vmatpush2.bf16.xpose.msra.mxu0 0
      %2193 = vmatprep.mubr.bf16.mxu0 0
      %2194 = vmatmul.mubr.bf16.gmra.mxu0 %v2156
      %v2195 = vpop.f32.mrf.mxu0
      %v2196 = vadd.f32 0.0, %v2195
      %v2197 = vpop.f32.mrf.mxu0
      %v2198 = vpop.f32.mrf.mxu0
      %v2199 = vpop.f32.mrf.mxu0
      %2200 = vdwg.mxu0
      %v2201 = vmul.f32 %v2196, 0.35355338
      %v2202 = vsel %vm1307, %v2201, -inf
      %2203 = vmax.xlane.f32.xlu0 %v2202
      %v2204 = vpop.xlane.xlu0 %2203
      %v2205 = vsub.f32 %v2201, %v2204
      %v2206 = vmul.f32 %v2205, 1.442695
      %v2207 = vpow.pop %v2206
      %v2208 = vsel %vm1307, %v2207, 0.0
      %2209 = vadd.xlane.f32.xlu0 %v2208
      %v2210 = vpop.xlane.xlu0 %2209
      %v2211 = vrcp.pop %v2210
      %v2212 = vmul.f32 %v2207, %v2211
      %v2213 = vpack.c.bf16 %v2212, %v2212
      %v2214 = vpack.c.bf16 %v2148, %v2148
      %v2216 = vsel %vm1307, %v2213, 0
      %v2219 = vsel %vm1371, %v2214, 0
      %2221 = vmatprep.subr.bf16.mxu0 0
      %2222 = vmatpush1.bf16.msra.mxu0 0
      %2223 = vmatprep.subr.bf16.mxu0 0
      %2224 = vmatpush1.bf16.msra.mxu0 0
      %2225 = vmatprep.subr.bf16.mxu0 0
      %2226 = vmatpush1.bf16.msra.mxu0 0
      %2227 = vmatprep.subr.bf16.mxu0 0
      %2228 = vmatpush1.bf16.msra.mxu0 0
      %2229 = vmatprep.subr.bf16.mxu0 0
      %2230 = vmatpush1.bf16.msra.mxu0 0
      %2231 = vmatprep.subr.bf16.mxu0 0
      %2232 = vmatpush1.bf16.msra.mxu0 0
      %2233 = vmatprep.subr.bf16.mxu0 0
      %2234 = vmatpush1.bf16.msra.mxu0 0
      %2235 = vmatprep.subr.bf16.mxu0 0
      %2236 = vmatpush1.bf16.msra.mxu0 %v2219
      %2237 = vmatprep.subr.bf16.mxu0 0
      %2238 = vmatpush2.bf16.msra.mxu0 0
      %2239 = vmatprep.subr.bf16.mxu0 0
      %2240 = vmatpush2.bf16.msra.mxu0 0
      %2241 = vmatprep.subr.bf16.mxu0 0
      %2242 = vmatpush2.bf16.msra.mxu0 0
      %2243 = vmatprep.subr.bf16.mxu0 0
      %2244 = vmatpush2.bf16.msra.mxu0 0
      %2245 = vmatprep.subr.bf16.mxu0 0
      %2246 = vmatpush2.bf16.msra.mxu0 0
      %2247 = vmatprep.subr.bf16.mxu0 0
      %2248 = vmatpush2.bf16.msra.mxu0 0
      %2249 = vmatprep.subr.bf16.mxu0 0
      %2250 = vmatpush2.bf16.msra.mxu0 0
      %2251 = vmatprep.subr.bf16.mxu0 0
      %2252 = vmatpush2.bf16.msra.mxu0 0
      %2253 = vmatprep.mubr.bf16.mxu0 0
      %2254 = vmatmul.mubr.bf16.gmra.mxu0 %v2216
      %v2255 = vpop.f32.mrf.mxu0
      %v2256 = vadd.f32 0.0, %v2255
      %v2257 = vpop.f32.mrf.mxu0
      %v2258 = vpop.f32.mrf.mxu0
      %v2259 = vpop.f32.mrf.mxu0
      %2260 = vdwg.mxu0
      %2262 = vrot.lane.b32.xlu0 %v1692, 8
      %v2263 = vpop.permute.xlu0 %2262
      %2266 = vrot.lane.b32.xlu0 %v1974, 16
      %v2267 = vpop.permute.xlu0 %2266
      %2270 = vrot.lane.b32.xlu0 %v2256, 24
      %v2271 = vpop.permute.xlu0 %2270
      %v2273 = vsel %vm1307, %v1410, %v2263
      %vm2274 = vcmask 130048
      %v2275 = vsel %vm2274, %v2273, %v2267
      %vm2276 = vcmask 195584
      %v2277 = vsel %vm2276, %v2275, %v2271
      %v2278 = vpack.c.bf16 %v2277, %v2277
      %v2279 = vld [vmem:[%s951] sm:$0xf]
      %v2280 = vld [vmem:[%s951 + $0x4] sm:$0xf]
      %v2281 = vld [vmem:[%s951 + $0x8] sm:$0xf]
      %v2282 = vld [vmem:[%s951 + $0xc] sm:$0xf]
      %v2283 = vld [vmem:[%s954] sm:$0x1]
      %v2285 = vlaneseq
      %v2286 = vshrl.u32 %v2285, 7
      %v2287 = vsub.s32 0, %v2286
      %v2288 = vrot.slane %v2283, %v2287
      %v2294 = vunpack.c.l.b16 %v2279
      %v2295 = vunpack.c.l.b16 %v2280
      %v2296 = vunpack.c.l.b16 %v2281
      %v2297 = vunpack.c.l.b16 %v2282
      %v2298 = vpack.c.b16 %v2295, %v2294
      %v2299 = vpack.c.b16 %v2297, %v2296
      %v2303 = vsel %vm1145, %v2278, 0
      %2305 = vmatprep.subr.bf16.mxu0 0
      %2306 = vmatpush1.bf16.msra.mxu0 0
      %2307 = vmatprep.subr.bf16.mxu0 0
      %2308 = vmatpush1.bf16.msra.mxu0 0
      %2309 = vmatprep.subr.bf16.mxu0 0
      %2310 = vmatpush1.bf16.msra.mxu0 0
      %2311 = vmatprep.subr.bf16.mxu0 0
      %2312 = vmatpush1.bf16.msra.mxu0 0
      %2313 = vmatprep.subr.bf16.mxu0 0
      %2314 = vmatpush1.bf16.msra.mxu0 0
      %2315 = vmatprep.subr.bf16.mxu0 0
      %2316 = vmatpush1.bf16.msra.mxu0 0
      %2317 = vmatprep.subr.bf16.mxu0 0
      %2318 = vmatpush1.bf16.msra.mxu0 %v2299
      %2319 = vmatprep.subr.bf16.mxu0 0
      %2320 = vmatpush1.bf16.msra.mxu0 %v2298
      %2321 = vmatprep.subr.bf16.mxu0 0
      %2322 = vmatpush2.bf16.msra.mxu0 0
      %2323 = vmatprep.subr.bf16.mxu0 0
      %2324 = vmatpush2.bf16.msra.mxu0 0
      %2325 = vmatprep.subr.bf16.mxu0 0
      %2326 = vmatpush2.bf16.msra.mxu0 0
      %2327 = vmatprep.subr.bf16.mxu0 0
      %2328 = vmatpush2.bf16.msra.mxu0 0
      %2329 = vmatprep.subr.bf16.mxu0 0
      %2330 = vmatpush2.bf16.msra.mxu0 0
      %2331 = vmatprep.subr.bf16.mxu0 0
      %2332 = vmatpush2.bf16.msra.mxu0 0
      %2333 = vmatprep.subr.bf16.mxu0 0
      %2334 = vmatpush2.bf16.msra.mxu0 0
      %2335 = vmatprep.subr.bf16.mxu0 0
      %2336 = vmatpush2.bf16.msra.mxu0 0
      %2337 = vmatprep.mubr.bf16.mxu0 0
      %2338 = vmatmul.mubr.bf16.gmra.mxu0 %v2303
      %v2339 = vpop.f32.mrf.mxu0
      %v2340 = vadd.f32 %v2288, %v2339
      %v2341 = vpop.f32.mrf.mxu0
      %v2342 = vpop.f32.mrf.mxu0
      %v2343 = vpop.f32.mrf.mxu0
      %2344 = vdwg.mxu0
      %v2345 = vadd.f32 %v1065, %v2340
      %v2346 = vld [vmem:[%s973] sm:$0x1]
      %v2347 = vld [vmem:[%s976] sm:$0x1]
      %v2348 = vsel %vm1145, %v2345, 0.0
      %2349 = vadd.xlane.f32.xlu0 %v2348
      %v2350 = vpop.xlane.xlu0 %2349
      %v2351 = vrcp.pop 32.0
      %v2352 = vmul.f32 %v2350, %v2351
      %v2353 = vsub.f32 %v2345, %v2352
      %v2354 = vmul.f32 %v2353, %v2353
      %v2355 = vsel %vm1145, %v2354, 0.0
      %2356 = vadd.xlane.f32.xlu0 %v2355
      %v2357 = vpop.xlane.xlu0 %2356
      %v2358 = vmul.f32 %v2357, %v2351
      %v2359 = vadd.f32 %v2358, 1e-05
      %v2360 = vrsqrt.pop %v2359
      %v2361 = vmul.f32 %v2353, %v2360
      %v2363 = vlaneseq
      %v2364 = vshrl.u32 %v2363, 7
      %v2365 = vsub.s32 0, %v2364
      %v2366 = vrot.slane %v2346, %v2365
      %v2368 = vmul.f32 %v2361, %v2366
      %v2370 = vlaneseq
      %v2371 = vshrl.u32 %v2370, 7
      %v2372 = vsub.s32 0, %v2371
      %v2373 = vrot.slane %v2347, %v2372
      %v2375 = vadd.f32 %v2368, %v2373
      %v2376 = vpack.c.bf16 %v2375, %v2375
      %v2377 = vld [vmem:[%s959] sm:$0xf]
      %v2378 = vld [vmem:[%s959 + $0x4] sm:$0xf]
      %v2379 = vld [vmem:[%s959 + $0x8] sm:$0xf]
      %v2380 = vld [vmem:[%s959 + $0xc] sm:$0xf]
      %v2381 = vld [vmem:[%s962] sm:$0x1]
      %v2383 = vlaneseq
      %v2384 = vshrl.u32 %v2383, 7
      %v2385 = vsub.s32 0, %v2384
      %v2386 = vrot.slane %v2381, %v2385
      %v2392 = vunpack.c.l.b16 %v2377
      %v2393 = vunpack.c.l.b16 %v2378
      %v2394 = vunpack.c.l.b16 %v2379
      %v2395 = vunpack.c.l.b16 %v2380
      %v2396 = vpack.c.b16 %v2393, %v2392
      %v2397 = vpack.c.b16 %v2395, %v2394
      %v2401 = vsel %vm1145, %v2376, 0
      %2403 = vmatprep.subr.bf16.mxu0 0
      %2404 = vmatpush1.bf16.msra.mxu0 0
      %2405 = vmatprep.subr.bf16.mxu0 0
      %2406 = vmatpush1.bf16.msra.mxu0 0
      %2407 = vmatprep.subr.bf16.mxu0 0
      %2408 = vmatpush1.bf16.msra.mxu0 0
      %2409 = vmatprep.subr.bf16.mxu0 0
      %2410 = vmatpush1.bf16.msra.mxu0 0
      %2411 = vmatprep.subr.bf16.mxu0 0
      %2412 = vmatpush1.bf16.msra.mxu0 0
      %2413 = vmatprep.subr.bf16.mxu0 0
      %2414 = vmatpush1.bf16.msra.mxu0 0
      %2415 = vmatprep.subr.bf16.mxu0 0
      %2416 = vmatpush1.bf16.msra.mxu0 %v2397
      %2417 = vmatprep.subr.bf16.mxu0 0
      %2418 = vmatpush1.bf16.msra.mxu0 %v2396
      %2419 = vmatprep.subr.bf16.mxu0 0
      %2420 = vmatpush2.bf16.msra.mxu0 0
      %2421 = vmatprep.subr.bf16.mxu0 0
      %2422 = vmatpush2.bf16.msra.mxu0 0
      %2423 = vmatprep.subr.bf16.mxu0 0
      %2424 = vmatpush2.bf16.msra.mxu0 0
      %2425 = vmatprep.subr.bf16.mxu0 0
      %2426 = vmatpush2.bf16.msra.mxu0 0
      %2427 = vmatprep.subr.bf16.mxu0 0
      %2428 = vmatpush2.bf16.msra.mxu0 0
      %2429 = vmatprep.subr.bf16.mxu0 0
      %2430 = vmatpush2.bf16.msra.mxu0 0
      %2431 = vmatprep.subr.bf16.mxu0 0
      %2432 = vmatpush2.bf16.msra.mxu0 0
      %2433 = vmatprep.subr.bf16.mxu0 0
      %2434 = vmatpush2.bf16.msra.mxu0 0
      %2435 = vmatprep.mubr.bf16.mxu0 0
      %2436 = vmatmul.mubr.bf16.gmra.mxu0 %v2401
      %v2437 = vpop.f32.mrf.mxu0
      %v2438 = vadd.f32 %v2386, %v2437
      %v2439 = vpop.f32.mrf.mxu0
      %v2440 = vpop.f32.mrf.mxu0
      %v2441 = vpop.f32.mrf.mxu0
      %2442 = vdwg.mxu0
      %v2443 = vmax.f32 %v2438, 0.0
      %v2444 = vpack.c.bf16 %v2443, %v2443
      %v2445 = vld [vmem:[%s967] sm:$0xf]
      %v2446 = vld [vmem:[%s967 + $0x4] sm:$0xf]
      %v2447 = vld [vmem:[%s967 + $0x8] sm:$0xf]
      %v2448 = vld [vmem:[%s967 + $0xc] sm:$0xf]
      %v2449 = vld [vmem:[%s967 + $0x10] sm:$0xf]
      %v2450 = vld [vmem:[%s967 + $0x14] sm:$0xf]
      %v2451 = vld [vmem:[%s967 + $0x18] sm:$0xf]
      %v2452 = vld [vmem:[%s967 + $0x1c] sm:$0xf]
      %v2453 = vld [vmem:[%s970] sm:$0x1]
      %v2455 = vlaneseq
      %v2456 = vshrl.u32 %v2455, 7
      %v2457 = vsub.s32 0, %v2456
      %v2458 = vrot.slane %v2453, %v2457
      %v2468 = vunpack.c.l.b16 %v2445
      %v2469 = vunpack.c.l.b16 %v2446
      %v2470 = vunpack.c.l.b16 %v2447
      %v2471 = vunpack.c.l.b16 %v2448
      %v2472 = vunpack.c.l.b16 %v2449
      %v2473 = vunpack.c.l.b16 %v2450
      %v2474 = vunpack.c.l.b16 %v2451
      %v2475 = vunpack.c.l.b16 %v2452
      %v2476 = vpack.c.b16 %v2469, %v2468
      %v2477 = vpack.c.b16 %v2471, %v2470
      %v2478 = vpack.c.b16 %v2473, %v2472
      %v2479 = vpack.c.b16 %v2475, %v2474
      %vm2484 = vcmask 523264
      %v2486 = vsel %vm2484, %v2444, 0
      %2488 = vmatprep.subr.bf16.mxu0 0
      %2489 = vmatpush1.bf16.msra.mxu0 0
      %2490 = vmatprep.subr.bf16.mxu0 0
      %2491 = vmatpush1.bf16.msra.mxu0 0
      %2492 = vmatprep.subr.bf16.mxu0 0
      %2493 = vmatpush1.bf16.msra.mxu0 0
      %2494 = vmatprep.subr.bf16.mxu0 0
      %2495 = vmatpush1.bf16.msra.mxu0 0
      %2496 = vmatprep.subr.bf16.mxu0 0
      %2497 = vmatpush1.bf16.msra.mxu0 %v2479
      %2498 = vmatprep.subr.bf16.mxu0 0
      %2499 = vmatpush1.bf16.msra.mxu0 %v2478
      %2500 = vmatprep.subr.bf16.mxu0 0
      %2501 = vmatpush1.bf16.msra.mxu0 %v2477
      %2502 = vmatprep.subr.bf16.mxu0 0
      %2503 = vmatpush1.bf16.msra.mxu0 %v2476
      %2504 = vmatprep.subr.bf16.mxu0 0
      %2505 = vmatpush2.bf16.msra.mxu0 0
      %2506 = vmatprep.subr.bf16.mxu0 0
      %2507 = vmatpush2.bf16.msra.mxu0 0
      %2508 = vmatprep.subr.bf16.mxu0 0
      %2509 = vmatpush2.bf16.msra.mxu0 0
      %2510 = vmatprep.subr.bf16.mxu0 0
      %2511 = vmatpush2.bf16.msra.mxu0 0
      %2512 = vmatprep.subr.bf16.mxu0 0
      %2513 = vmatpush2.bf16.msra.mxu0 0
      %2514 = vmatprep.subr.bf16.mxu0 0
      %2515 = vmatpush2.bf16.msra.mxu0 0
      %2516 = vmatprep.subr.bf16.mxu0 0
      %2517 = vmatpush2.bf16.msra.mxu0 0
      %2518 = vmatprep.subr.bf16.mxu0 0
      %2519 = vmatpush2.bf16.msra.mxu0 0
      %2520 = vmatprep.mubr.bf16.mxu0 0
      %2521 = vmatmul.mubr.bf16.gmra.mxu0 %v2486
      %v2522 = vpop.f32.mrf.mxu0
      %v2523 = vadd.f32 %v2458, %v2522
      %v2524 = vpop.f32.mrf.mxu0
      %v2525 = vpop.f32.mrf.mxu0
      %v2526 = vpop.f32.mrf.mxu0
      %2527 = vdwg.mxu0
      %v2528 = vadd.f32 %v2375, %v2523
      %v2529 = vld [vmem:[%s979] sm:$0x1]
      %v2530 = vld [vmem:[%s982] sm:$0x1]
      %v2531 = vsel %vm1145, %v2528, 0.0
      %2532 = vadd.xlane.f32.xlu0 %v2531
      %v2533 = vpop.xlane.xlu0 %2532
      %v2534 = vmul.f32 %v2533, %v2351
      %v2535 = vsub.f32 %v2528, %v2534
      %v2536 = vmul.f32 %v2535, %v2535
      %v2537 = vsel %vm1145, %v2536, 0.0
      %2538 = vadd.xlane.f32.xlu0 %v2537
      %v2539 = vpop.xlane.xlu0 %2538
      %v2540 = vmul.f32 %v2539, %v2351
      %v2541 = vadd.f32 %v2540, 1e-05
      %v2542 = vrsqrt.pop %v2541
      %v2543 = vmul.f32 %v2535, %v2542
      %v2545 = vlaneseq
      %v2546 = vshrl.u32 %v2545, 7
      %v2547 = vsub.s32 0, %v2546
      %v2548 = vrot.slane %v2529, %v2547
      %v2550 = vmul.f32 %v2543, %v2548
      %v2552 = vlaneseq
      %v2553 = vshrl.u32 %v2552, 7
      %v2554 = vsub.s32 0, %v2553
      %v2555 = vrot.slane %v2530, %v2554
      %v2557 = vadd.f32 %v2550, %v2555
      %2558 = vst.msk [vmem:[#allocation2] sm:$0xff] %vm1145, %v2557
      %p2559 = scmp.eq.s32.totalorder %s39, 1
      // Predicated region
      $region117: #{bert_inspired_forward.1} parent=111 // pred_check
        %p2560 = pneg %p2559
      $region118: #{bert_inspired_forward.1} parent=111 // pred_check_branch
        %2562 = sbr.rel (%p2560) target = $region120
      $region119: #{bert_inspired_forward.1} parent=111 // pred_region
        %v2563 = vld [vmem:[%s19] sm:$0x1]
        %v2564 = vld [vmem:[%s20] sm:$0x1]
        %v2565 = vsel %vm1145, %v2557, 0.0
        %2566 = vadd.xlane.f32.xlu0 %v2565
        %v2567 = vpop.xlane.xlu0 %2566
        %v2568 = vmul.f32 %v2567, %v2351
        %v2569 = vsub.f32 %v2557, %v2568
        %v2570 = vmul.f32 %v2569, %v2569
        %v2571 = vsel %vm1145, %v2570, 0.0
        %2572 = vadd.xlane.f32.xlu0 %v2571
        %v2573 = vpop.xlane.xlu0 %2572
        %v2574 = vmul.f32 %v2573, %v2351
        %v2575 = vadd.f32 %v2574, 1e-05
        %v2576 = vrsqrt.pop %v2575
        %v2577 = vmul.f32 %v2569, %v2576
        %v2579 = vlaneseq
        %v2580 = vshrl.u32 %v2579, 7
        %v2581 = vsub.s32 0, %v2580
        %v2582 = vrot.slane %v2563, %v2581
        %v2584 = vmul.f32 %v2577, %v2582
        %v2586 = vlaneseq
        %v2587 = vshrl.u32 %v2586, 7
        %v2588 = vsub.s32 0, %v2587
        %v2589 = vrot.slane %v2564, %v2588
        %v2591 = vadd.f32 %v2584, %v2589
        %v2592 = vpack.c.bf16 %v2591, %v2591
        %v2593 = vld [vmem:[%s21] sm:$0xf]
        %v2594 = vld [vmem:[%s21 + $0x4] sm:$0xf]
        %v2595 = vld [vmem:[%s21 + $0x8] sm:$0xf]
        %v2596 = vld [vmem:[%s21 + $0xc] sm:$0xf]
        %v2597 = vld [vmem:[%s22] sm:$0x1]
        %v2599 = vlaneseq
        %v2600 = vshrl.u32 %v2599, 7
        %v2601 = vsub.s32 0, %v2600
        %v2602 = vrot.slane %v2597, %v2601
        %v2608 = vunpack.c.l.b16 %v2593
        %v2609 = vunpack.c.l.b16 %v2594
        %v2610 = vunpack.c.l.b16 %v2595
        %v2611 = vunpack.c.l.b16 %v2596
        %v2612 = vpack.c.b16 %v2609, %v2608
        %v2613 = vpack.c.b16 %v2611, %v2610
        %v2617 = vsel %vm1145, %v2592, 0
        %2619 = vmatprep.subr.bf16.mxu0 0
        %2620 = vmatpush1.bf16.msra.mxu0 0
        %2621 = vmatprep.subr.bf16.mxu0 0
        %2622 = vmatpush1.bf16.msra.mxu0 0
        %2623 = vmatprep.subr.bf16.mxu0 0
        %2624 = vmatpush1.bf16.msra.mxu0 0
        %2625 = vmatprep.subr.bf16.mxu0 0
        %2626 = vmatpush1.bf16.msra.mxu0 0
        %2627 = vmatprep.subr.bf16.mxu0 0
        %2628 = vmatpush1.bf16.msra.mxu0 0
        %2629 = vmatprep.subr.bf16.mxu0 0
        %2630 = vmatpush1.bf16.msra.mxu0 0
        %2631 = vmatprep.subr.bf16.mxu0 0
        %2632 = vmatpush1.bf16.msra.mxu0 %v2613
        %2633 = vmatprep.subr.bf16.mxu0 0
        %2634 = vmatpush1.bf16.msra.mxu0 %v2612
        %2635 = vmatprep.subr.bf16.mxu0 0
        %2636 = vmatpush2.bf16.msra.mxu0 0
        %2637 = vmatprep.subr.bf16.mxu0 0
        %2638 = vmatpush2.bf16.msra.mxu0 0
        %2639 = vmatprep.subr.bf16.mxu0 0
        %2640 = vmatpush2.bf16.msra.mxu0 0
        %2641 = vmatprep.subr.bf16.mxu0 0
        %2642 = vmatpush2.bf16.msra.mxu0 0
        %2643 = vmatprep.subr.bf16.mxu0 0
        %2644 = vmatpush2.bf16.msra.mxu0 0
        %2645 = vmatprep.subr.bf16.mxu0 0
        %2646 = vmatpush2.bf16.msra.mxu0 0
        %2647 = vmatprep.subr.bf16.mxu0 0
        %2648 = vmatpush2.bf16.msra.mxu0 0
        %2649 = vmatprep.subr.bf16.mxu0 0
        %2650 = vmatpush2.bf16.msra.mxu0 0
        %2651 = vmatprep.mubr.bf16.mxu0 0
        %2652 = vmatmul.mubr.bf16.gmra.mxu0 %v2617
        %v2653 = vpop.f32.mrf.mxu0
        %v2654 = vadd.f32 %v2602, %v2653
        %v2655 = vpop.f32.mrf.mxu0
        %v2656 = vpop.f32.mrf.mxu0
        %v2657 = vpop.f32.mrf.mxu0
        %2658 = vdwg.mxu0
        %2659 = vst [vmem:[%s986] sm:$0xff] %v2654
      $region120: #{bert_inspired_forward.1} parent=111 // pred_fallthru
        _
      %p2660 = scmp.lt.s32.totalorder %s38, 1
      %s2661 = scalar_select %p2660, %s38, 1
      %s2662 = smul.addr %s2661, 8
      %s2663 = scalar_lea.vmem %s23, %s2662
      // Predicated region
      $region121: #{bert_inspired_forward.1} parent=111 // pred_check
        %p2664 = pneg %p632
      $region122: #{bert_inspired_forward.1} parent=111 // pred_check_branch
        %2666 = sbr.rel (%p2664) target = $region124
      $region123: #{bert_inspired_forward.1} parent=111 // pred_region
        _
      $region124: #{bert_inspired_forward.1} parent=111 // pred_fallthru
        _
    $region112: #{bert_inspired_forward.1} parent=5 // pred_fallthru
      _
    %p2667 = scmp.le.s32.totalorder 2, %s29
    // Predicated region
    $region125: #{bert_inspired_forward.1} parent=5 // pred_check
      %p2668 = pneg %p2667
    $region126: #{bert_inspired_forward.1} parent=5 // pred_check_branch
      %2670 = sbr.rel (%p2668) target = $region128
    $region127: #{bert_inspired_forward.1} parent=5 // pred_region
      %s2671 = ssub.s32 %s29, 2
      // Predicated region
      $region129: #{bert_inspired_forward.1} parent=127 // pred_check
        %p2672 = pneg %p638
      $region130: #{bert_inspired_forward.1} parent=127 // pred_check_branch
        %2674 = sbr.rel (%p2672) target = $region132
      $region131: #{bert_inspired_forward.1} parent=127 // pred_region
        %p2675 = scmp.lt.s32.totalorder %s40, 1
        %s2676 = scalar_select %p2675, %s40, 1
        %s2677 = smul.addr %s2676, 8
        %s2678 = scalar_lea.vmem %s23, %s2677
      $region132: #{bert_inspired_forward.1} parent=127 // pred_fallthru
        _
    $region128: #{bert_inspired_forward.1} parent=5 // pred_fallthru
      _
  $region6: #{bert_inspired_forward.1} parent=0 // loop_footer
    %s33 = sadd.s32 1, %s29
  $region7: #{bert_inspired_forward.1} parent=0 // loop_footer_branch
    %28 = sbr.rel target = $region3
  $region8: #{bert_inspired_forward.1} parent=0 // loop_exit
    _

</llo_original>
